<compile_context>
chip_gen: v5e
topology: v5e:2x2
jax: 0.10.0
libtpu: 0.0.40
codegen_flags: <defaults>
</compile_context>

<pallas_src>
import functools

import jax
import jax.numpy as jnp
import numpy as np
from jax.experimental import pallas as pl
from jax.experimental.pallas import tpu as pltpu

EPS = 1e-5


def _pick_tile(hw):
    """Largest pixel tile (multiple of 128) that divides H*W; else full HW."""
    for t in (512, 256, 128):
        if hw % t == 0:
            return t
    return hw


def _vmem_limit(*block_shapes):
    """Scoped-VMEM request sized to the live blocks (double-buffered) + slack."""
    blk = sum(int(np.prod(s)) * 4 for s in block_shapes)
    return int(min(max(3 * blk + (2 << 20), 32 << 20), 48 << 20))


# ----------------------------------------------------------------------------
# Kernel A: (optionally fused input-BN+ReLU) + 1x1-conv matmul + stats accum.
#   x: (Cin, TILE) pixels-on-lanes, w: (Cout, Cin), sc/sh: (Cin, 1)
#   outputs: y block (Cout, TILE), resident stats block (Cout, 2)=[sum, sumsq]
# ----------------------------------------------------------------------------
def _linear_bn_stats_kernel(x_ref, w_ref, sc_ref, sh_ref, y_ref, st_ref,
                            *, fuse_in_bn_relu):
    a = x_ref[...]
    if fuse_in_bn_relu:
        a = jnp.maximum(a * sc_ref[...] + sh_ref[...], 0.0)
    y = jnp.dot(w_ref[...], a, preferred_element_type=jnp.float32)
    y_ref[...] = y
    st = jnp.concatenate(
        [jnp.sum(y, axis=1, keepdims=True),
         jnp.sum(y * y, axis=1, keepdims=True)], axis=1)

    @pl.when(pl.program_id(1) == 0)
    def _init():
        st_ref[...] = jnp.zeros_like(st_ref)

    st_ref[...] += st


def _linear_bn_stats(x, w, sc, sh, tile, fuse_in_bn_relu):
    """x: (N, Cin, HW), w: (Cout, Cin) -> (y (N,Cout,HW), stats (N,Cout,2))."""
    n, cin, hw = x.shape
    cout = w.shape[0]
    nt = hw // tile
    kernel = functools.partial(_linear_bn_stats_kernel,
                               fuse_in_bn_relu=fuse_in_bn_relu)
    return pl.pallas_call(
        kernel,
        grid=(n, nt),
        in_specs=[
            pl.BlockSpec((None, cin, tile), lambda i, t: (i, 0, t)),
            pl.BlockSpec((cout, cin), lambda i, t: (0, 0)),
            pl.BlockSpec((cin, 1), lambda i, t: (0, 0)),
            pl.BlockSpec((cin, 1), lambda i, t: (0, 0)),
        ],
        out_specs=(
            pl.BlockSpec((None, cout, tile), lambda i, t: (i, 0, t)),
            pl.BlockSpec((None, cout, 2), lambda i, t: (i, 0, 0)),
        ),
        out_shape=(
            jax.ShapeDtypeStruct((n, cout, hw), jnp.float32),
            jax.ShapeDtypeStruct((n, cout, 2), jnp.float32),
        ),
        compiler_params=pltpu.CompilerParams(
            dimension_semantics=("parallel", "arbitrary"),
            vmem_limit_bytes=_vmem_limit((cin, tile), (cout, tile),
                                         (cout, cin))),
        cost_estimate=pl.CostEstimate(
            flops=2 * n * hw * cin * cout, transcendentals=0,
            bytes_accessed=4 * (x.size + w.size + n * cout * hw)),
    )(x, w, sc, sh)


# ----------------------------------------------------------------------------
# Kernel B: fused BN1+ReLU + ConvTranspose2d(3x3, s=2, p=1, op=1) + stats.
# One image per grid step; shifted views built in VMEM; single packed matmul.
# Output rows are phase-stacked: row ph*C + co, ph = 2*(oy%2) + (ox%2).
# ----------------------------------------------------------------------------
def _deconv_kernel(a_raw_ref, wpk_ref, sc_ref, sh_ref, y_ref, st_ref, xs_ref,
                   *, img_w):
    a = jnp.maximum(a_raw_ref[...] * sc_ref[...] + sh_ref[...], 0.0)   # (C, HW)
    c, hw = a.shape

    def shift_left(v, k):
        return jnp.concatenate(
            [v[:, k:], jnp.zeros((v.shape[0], k), v.dtype)], axis=1)

    # zero out values that crossed a row boundary when shifting by +1 column
    col = jax.lax.broadcasted_iota(jnp.int32, (1, hw), 1) % img_w
    ok = col != (img_w - 1)
    zero = jnp.zeros_like(a)

    # im2col stack of the 4 shifted (zero-padded) views, built in VMEM scratch
    xs_ref[0 * c:1 * c, :] = a                                           # (0,0)
    xs_ref[1 * c:2 * c, :] = jnp.where(ok, shift_left(a, 1), zero)       # (0,1)
    xs_ref[2 * c:3 * c, :] = shift_left(a, img_w)                        # (1,0)
    xs_ref[3 * c:4 * c, :] = jnp.where(ok, shift_left(a, img_w + 1), zero)  # (1,1)

    y = jnp.dot(wpk_ref[...], xs_ref[...], preferred_element_type=jnp.float32)
    y_ref[...] = y                                                       # (4C, HW)
    st_ref[...] = jnp.concatenate(
        [jnp.sum(y, axis=1, keepdims=True),
         jnp.sum(y * y, axis=1, keepdims=True)], axis=1)


def _deconv_bn_stats(y1, wpk, sc, sh, img_w):
    n, c, hw = y1.shape
    c_out = 4 * c
    kernel = functools.partial(_deconv_kernel, img_w=img_w)
    return pl.pallas_call(
        kernel,
        grid=(n,),
        in_specs=[
            pl.BlockSpec((None, c, hw), lambda i: (i, 0, 0)),
            pl.BlockSpec((c_out, c_out), lambda i: (0, 0)),
            pl.BlockSpec((c, 1), lambda i: (0, 0)),
            pl.BlockSpec((c, 1), lambda i: (0, 0)),
        ],
        out_specs=(
            pl.BlockSpec((None, c_out, hw), lambda i: (i, 0, 0)),
            pl.BlockSpec((None, c_out, 2), lambda i: (i, 0, 0)),
        ),
        out_shape=(
            jax.ShapeDtypeStruct((n, c_out, hw), jnp.float32),
            jax.ShapeDtypeStruct((n, c_out, 2), jnp.float32),
        ),
        scratch_shapes=[pltpu.VMEM((c_out, hw), jnp.float32)],
        compiler_params=pltpu.CompilerParams(
            dimension_semantics=("parallel",),
            vmem_limit_bytes=_vmem_limit((c, hw), (c_out, hw), (c_out, hw),
                                         (c_out, hw), (c_out, c_out))),
        cost_estimate=pl.CostEstimate(
            flops=2 * n * hw * c_out * c_out, transcendentals=0,
            bytes_accessed=4 * (y1.size + wpk.size + n * c_out * hw)),
    )(y1, wpk, sc, sh)


# ----------------------------------------------------------------------------
# Kernel C: final BatchNorm(apply) + ReLU, elementwise, lane-dense tiles.
# ----------------------------------------------------------------------------
def _bn_relu_kernel(y_ref, sc_ref, sh_ref, o_ref):
    o_ref[...] = jnp.maximum(y_ref[...] * sc_ref[...] + sh_ref[...], 0.0)


def _bn_relu(y, sc, sh, tile):
    n, c, hw = y.shape
    nt = hw // tile
    return pl.pallas_call(
        _bn_relu_kernel,
        grid=(n, nt),
        in_specs=[
            pl.BlockSpec((None, c, tile), lambda i, t: (i, 0, t)),
            pl.BlockSpec((c, 1), lambda i, t: (0, 0)),
            pl.BlockSpec((c, 1), lambda i, t: (0, 0)),
        ],
        out_specs=pl.BlockSpec((None, c, tile), lambda i, t: (i, 0, t)),
        out_shape=jax.ShapeDtypeStruct((n, c, hw), jnp.float32),
        compiler_params=pltpu.CompilerParams(
            dimension_semantics=("parallel", "parallel"),
            vmem_limit_bytes=_vmem_limit((c, tile), (c, tile))),
        cost_estimate=pl.CostEstimate(flops=2 * y.size, transcendentals=0,
                                      bytes_accessed=8 * y.size),
    )(y, sc, sh)


# ----------------------------------------------------------------------------
# Small host-side helpers (tiny tensors, plain XLA)
# ----------------------------------------------------------------------------
def _pack_deconv_weight(w2):
    # torch ConvTranspose2d weight: (cin, cout, kh, kw).
    # For output phase (py, px): contributing taps are ky=1 (dy=0) for py=0 and
    # {ky=2 (dy=0), ky=0 (dy=1)} for py=1 (same pattern in x).  Column blocks
    # are the shifted inputs in order (0,0), (0,1), (1,0), (1,1).
    c = w2.shape[0]
    z = jnp.zeros((c, c), w2.dtype)

    def b(ky, kx):
        return w2[:, :, ky, kx].T          # (cout, cin)

    return jnp.block([
        [b(1, 1), z,       z,       z      ],   # phase (0, 0)
        [b(1, 2), b(1, 0), z,       z      ],   # phase (0, 1)
        [b(2, 1), z,       b(0, 1), z      ],   # phase (1, 0)
        [b(2, 2), b(2, 0), b(0, 2), b(0, 0)],   # phase (1, 1)
    ])


def _bn_scale_shift(stats, count, gamma, beta):
    mean = stats[:, 0] / count
    var = jnp.maximum(stats[:, 1] / count - mean * mean, 0.0)   # biased var
    scale = gamma * jax.lax.rsqrt(var + EPS)
    return scale, beta - mean * scale


# ----------------------------------------------------------------------------
# Full DecoderBlock forward (NCHW in, NCHW out)
# ----------------------------------------------------------------------------
def decoder_block(x_nchw, params):
    n, cin, h, w = x_nchw.shape
    c4 = cin // 4
    f = params["w3"].shape[0]
    hw = h * w
    tile = _pick_tile(hw)
    cnt1 = float(n * hw)
    cnt2 = float(n * 4 * hw)

    # NCHW -> (N, C, H*W): free reshape, no transpose needed in this layout.
    x = x_nchw.astype(jnp.float32).reshape(n, cin, hw)

    # Conv biases (b1/b2/b3) are intentionally not applied: training-mode
    # BatchNorm subtracts the per-channel batch mean, so they cancel exactly.

    ones = jnp.ones((cin, 1), jnp.float32)
    zeros = jnp.zeros((cin, 1), jnp.float32)

    # ---- conv1 (1x1) + BN1 statistics --------------------------------------
    y1, st1 = _linear_bn_stats(x, params["w1"], ones, zeros, tile,
                               fuse_in_bn_relu=False)
    sc1, sh1 = _bn_scale_shift(st1.sum(0), cnt1, params["g1"], params["be1"])

    # ---- deconv2 (3x3, s=2, p=1, op=1) fused with BN1+ReLU, + BN2 stats -----
    wpk = _pack_deconv_weight(params["w2"])                     # (4*C4, 4*C4)
    y2, st2 = _deconv_bn_stats(y1, wpk, sc1[:, None], sh1[:, None], w)
    sc2, sh2 = _bn_scale_shift(st2.sum(0).reshape(4, c4, 2).sum(0), cnt2,
                               params["g2"], params["be2"])

    # ---- conv3 (1x1) fused with BN2+ReLU, + BN3 stats -----------------------
    # Phase-stacked input => block-diagonal replicated 1x1 weight, one matmul.
    w3blk = jnp.kron(jnp.eye(4, dtype=jnp.float32), params["w3"])  # (4F, 4C4)
    y3, st3 = _linear_bn_stats(y2, w3blk,
                               jnp.tile(sc2, 4)[:, None],
                               jnp.tile(sh2, 4)[:, None],
                               tile, fuse_in_bn_relu=True)
    sc3, sh3 = _bn_scale_shift(st3.sum(0).reshape(4, f, 2).sum(0), cnt2,
                               params["g3"], params["be3"])

    # ---- norm3 + ReLU --------------------------------------------------------
    a3 = _bn_relu(y3, jnp.tile(sc3, 4)[:, None], jnp.tile(sh3, 4)[:, None], tile)

    # ---- phase interleave + NCHW output assembly (single XLA transpose) ----
    out = (a3.reshape(n, 2, 2, f, h, w)
             .transpose(0, 3, 4, 1, 5, 2)
             .reshape(n, f, 2 * h, 2 * w))
    return out


# ----------------------------------------------------------------------------
# Pure-JAX reference (keeps the biases; must still match the Pallas path)
# ----------------------------------------------------------------------------
def _bn_relu_ref(y, g, b):
    m = y.mean((0, 1, 2))
    v = ((y - m) ** 2).mean((0, 1, 2))
    return jnp.maximum((y - m) * jax.lax.rsqrt(v + EPS) * g + b, 0.0)


def decoder_block_ref(x_nchw, params):
    hp = jax.lax.Precision.HIGHEST
    x = jnp.transpose(x_nchw, (0, 2, 3, 1)).astype(jnp.float32)      # NHWC
    y = jnp.einsum("nhwc,dc->nhwd", x, params["w1"], precision=hp) + params["b1"]
    y = _bn_relu_ref(y, params["g1"], params["be1"])

    # ConvTranspose2d == dilated conv with spatially-flipped, in/out-swapped W
    wc = jnp.transpose(params["w2"][:, :, ::-1, ::-1], (2, 3, 0, 1))  # HWIO
    y = jax.lax.conv_general_dilated(
        y, wc, window_strides=(1, 1), padding=[(1, 2), (1, 2)],
        lhs_dilation=(2, 2), dimension_numbers=("NHWC", "HWIO", "NHWC"),
        precision=hp) + params["b2"]
    y = _bn_relu_ref(y, params["g2"], params["be2"])

    y = jnp.einsum("nhwc,fc->nhwf", y, params["w3"], precision=hp) + params["b3"]
    y = _bn_relu_ref(y, params["g3"], params["be3"])
    return jnp.transpose(y, (0, 3, 1, 2))


# ----------------------------------------------------------------------------
if __name__ == "__main__":
    # DecoderBlock(in_channels=16, n_filters=8), small spatial size.
    N, CIN, H, W = 2, 16, 32, 32
    C4, F = CIN // 4, 8

    key = jax.random.PRNGKey(0)
    ks = jax.random.split(key, 13)
    params = {
        # torch Conv2d(CIN -> C4, 1) weight, squeezed to (out, in)
        "w1": 0.2 * jax.random.normal(ks[0], (C4, CIN), jnp.float32),
        "b1": 0.1 * jax.random.normal(ks[1], (C4,), jnp.float32),
        "g1": 1.0 + 0.1 * jax.random.normal(ks[2], (C4,), jnp.float32),
        "be1": 0.1 * jax.random.normal(ks[3], (C4,), jnp.float32),
        # torch ConvTranspose2d weight layout: (cin, cout, kh, kw)
        "w2": 0.2 * jax.random.normal(ks[4], (C4, C4, 3, 3), jnp.float32),
        "b2": 0.1 * jax.random.normal(ks[5], (C4,), jnp.float32),
        "g2": 1.0 + 0.1 * jax.random.normal(ks[6], (C4,), jnp.float32),
        "be2": 0.1 * jax.random.normal(ks[7], (C4,), jnp.float32),
        # torch Conv2d(C4 -> F, 1) weight, squeezed to (out, in)
        "w3": 0.2 * jax.random.normal(ks[8], (F, C4), jnp.float32),
        "b3": 0.1 * jax.random.normal(ks[9], (F,), jnp.float32),
        "g3": 1.0 + 0.1 * jax.random.normal(ks[10], (F,), jnp.float32),
        "be3": 0.1 * jax.random.normal(ks[11], (F,), jnp.float32),
    }

    x = jax.random.normal(ks[12], (N, CIN, H, W), jnp.float32)

    out = jax.block_until_ready(jax.jit(decoder_block)(x, params))
    ref = jax.block_until_ready(jax.jit(decoder_block_ref)(x, params))

    assert out.shape == (N, F, 2 * H, 2 * W), out.shape
    np.testing.assert_allclose(np.asarray(out), np.asarray(ref),
                               rtol=2e-3, atol=2e-3)
    print("KERNEL_OK")
</pallas_src>

<mosaic_0001>
module attributes {stable_mosaic.version = 11 : i64} {
  func.func @_linear_bn_stats_kernel(%arg0: i32, %arg1: i32, %arg2: memref<1x16x512xf32, #tpu.memory_space<vmem>>, %arg3: memref<4x16xf32, #tpu.memory_space<vmem>>, %arg4: memref<16x1xf32, #tpu.memory_space<vmem>>, %arg5: memref<16x1xf32, #tpu.memory_space<vmem>>, %arg6: memref<1x4x512xf32, #tpu.memory_space<vmem>>, %arg7: memref<1x4x2xf32, #tpu.memory_space<vmem>>) attributes {dimension_semantics = [#tpu.dimension_semantics<parallel>, #tpu.dimension_semantics<arbitrary>], iteration_bounds = array<i64: 2, 2>, scalar_prefetch = 0 : i64, scratch_operands = 0 : i64, tpu.core_type = #tpu.core_type<tc>, window_params = [{transform_indices = @transform_0, window_bounds = array<i64: 1, 16, 512>}, {pipeline_mode = #tpu.pipeline_mode<synchronous>, transform_indices = @transform_1, window_bounds = array<i64: 4, 16>}, {pipeline_mode = #tpu.pipeline_mode<synchronous>, transform_indices = @transform_2, window_bounds = array<i64: 16, 1>}, {pipeline_mode = #tpu.pipeline_mode<synchronous>, transform_indices = @transform_3, window_bounds = array<i64: 16, 1>}, {transform_indices = @transform_4, window_bounds = array<i64: 1, 4, 512>}, {transform_indices = @transform_5, window_bounds = array<i64: 1, 4, 2>}]} {
    %c0 = arith.constant 0 : index
    %c0_0 = arith.constant 0 : index
    %c0_1 = arith.constant 0 : index
    %0 = vector.load %arg2[%c0, %c0_0, %c0_1] : memref<1x16x512xf32, #tpu.memory_space<vmem>>, vector<1x16x512xf32>
    %1 = vector.shape_cast %0 : vector<1x16x512xf32> to vector<16x512xf32>
    %c0_2 = arith.constant 0 : index
    %c0_3 = arith.constant 0 : index
    %2 = vector.load %arg3[%c0_2, %c0_3] : memref<4x16xf32, #tpu.memory_space<vmem>>, vector<4x16xf32>
    %cst = arith.constant dense<0.000000e+00> : vector<4x512xf32>
    %3 = tpu.matmul %2, %1, %cst {dimension_numbers = #tpu.dot_dimension_numbers<[1], [0], [0], [1], [0, 0, 1, 1], [], []>} : vector<4x16xf32>, vector<16x512xf32>, vector<4x512xf32> -> vector<4x512xf32>
    %c0_4 = arith.constant 0 : index
    %c0_5 = arith.constant 0 : index
    %c0_6 = arith.constant 0 : index
    %4 = vector.load %arg6[%c0_4, %c0_5, %c0_6] : memref<1x4x512xf32, #tpu.memory_space<vmem>>, vector<1x4x512xf32>
    %5 = vector.shape_cast %4 : vector<1x4x512xf32> to vector<4x512xf32>
    %6 = vector.shape_cast %3 : vector<4x512xf32> to vector<1x4x512xf32>
    tpu.vector_store %arg6[%c0_4, %c0_5, %c0_6], %6 {strides = array<i32>} : memref<1x4x512xf32, #tpu.memory_space<vmem>>, vector<1x4x512xf32>,
    %cst_7 = arith.constant dense<0.000000e+00> : vector<4xf32>
    %7 = vector.multi_reduction <add>, %3, %cst_7 [1] : vector<4x512xf32> to vector<4xf32>
    %8 = vector.shape_cast %7 : vector<4xf32> to vector<4x1xf32>
    %9 = arith.mulf %3, %3 : vector<4x512xf32>
    %cst_8 = arith.constant dense<0.000000e+00> : vector<4xf32>
    %10 = vector.multi_reduction <add>, %9, %cst_8 [1] : vector<4x512xf32> to vector<4xf32>
    %11 = vector.shape_cast %10 : vector<4xf32> to vector<4x1xf32>
    %12 = tpu.concatenate %8, %11 in 1 : vector<4x1xf32>, vector<4x1xf32> -> vector<4x2xf32>
    %c0_i32 = arith.constant 0 : i32
    %13 = arith.cmpi eq, %arg1, %c0_i32 : i32
    %14 = arith.extui %13 : i1 to i32
    %c0_i32_9 = arith.constant 0 : i32
    %15 = arith.cmpi ne, %14, %c0_i32_9 : i32
    scf.if %15 {
      %cst_16 = arith.constant 0.000000e+00 : f32
      %22 = vector.broadcast %cst_16 : f32 to vector<4x2xf32>
      %c0_17 = arith.constant 0 : index
      %c0_18 = arith.constant 0 : index
      %c0_19 = arith.constant 0 : index
      %23 = vector.load %arg7[%c0_17, %c0_18, %c0_19] : memref<1x4x2xf32, #tpu.memory_space<vmem>>, vector<1x4x2xf32>
      %24 = vector.shape_cast %23 : vector<1x4x2xf32> to vector<4x2xf32>
      %25 = vector.shape_cast %22 : vector<4x2xf32> to vector<1x4x2xf32>
      tpu.vector_store %arg7[%c0_17, %c0_18, %c0_19], %25 {strides = array<i32>} : memref<1x4x2xf32, #tpu.memory_space<vmem>>, vector<1x4x2xf32>,
    } else {
    }
    %c0_10 = arith.constant 0 : index
    %c0_11 = arith.constant 0 : index
    %c0_12 = arith.constant 0 : index
    %16 = vector.load %arg7[%c0_10, %c0_11, %c0_12] : memref<1x4x2xf32, #tpu.memory_space<vmem>>, vector<1x4x2xf32>
    %17 = vector.shape_cast %16 : vector<1x4x2xf32> to vector<4x2xf32>
    %18 = arith.addf %17, %12 : vector<4x2xf32>
    %c0_13 = arith.constant 0 : index
    %c0_14 = arith.constant 0 : index
    %c0_15 = arith.constant 0 : index
    %19 = vector.load %arg7[%c0_13, %c0_14, %c0_15] : memref<1x4x2xf32, #tpu.memory_space<vmem>>, vector<1x4x2xf32>
    %20 = vector.shape_cast %19 : vector<1x4x2xf32> to vector<4x2xf32>
    %21 = vector.shape_cast %18 : vector<4x2xf32> to vector<1x4x2xf32>
    tpu.vector_store %arg7[%c0_13, %c0_14, %c0_15], %21 {strides = array<i32>} : memref<1x4x2xf32, #tpu.memory_space<vmem>>, vector<1x4x2xf32>,
    return
  }
  func.func @transform_0(%arg0: i32, %arg1: i32) -> (i32, i32, i32) {
    %c0_i32 = arith.constant 0 : i32
    %c0_i32_0 = arith.constant 0 : i32
    return %arg0, %c0_i32, %arg1 : i32, i32, i32
  }
  func.func @transform_1(%arg0: i32, %arg1: i32) -> (i32, i32) {
    %c0_i32 = arith.constant 0 : i32
    %c0_i32_0 = arith.constant 0 : i32
    %c0_i32_1 = arith.constant 0 : i32
    return %c0_i32, %c0_i32_0 : i32, i32
  }
  func.func @transform_2(%arg0: i32, %arg1: i32) -> (i32, i32) {
    %c0_i32 = arith.constant 0 : i32
    %c0_i32_0 = arith.constant 0 : i32
    %c0_i32_1 = arith.constant 0 : i32
    return %c0_i32, %c0_i32_0 : i32, i32
  }
  func.func @transform_3(%arg0: i32, %arg1: i32) -> (i32, i32) {
    %c0_i32 = arith.constant 0 : i32
    %c0_i32_0 = arith.constant 0 : i32
    %c0_i32_1 = arith.constant 0 : i32
    return %c0_i32, %c0_i32_0 : i32, i32
  }
  func.func @transform_4(%arg0: i32, %arg1: i32) -> (i32, i32, i32) {
    %c0_i32 = arith.constant 0 : i32
    %c0_i32_0 = arith.constant 0 : i32
    return %arg0, %c0_i32, %arg1 : i32, i32, i32
  }
  func.func @transform_5(%arg0: i32, %arg1: i32) -> (i32, i32, i32) {
    %c0_i32 = arith.constant 0 : i32
    %c0_i32_0 = arith.constant 0 : i32
    %c0_i32_1 = arith.constant 0 : i32
    return %arg0, %c0_i32, %c0_i32_0 : i32, i32, i32
  }
}

module attributes {stable_mosaic.version = 11 : i64} {
  func.func @_deconv_kernel(%arg0: i32, %arg1: memref<1x4x1024xf32, #tpu.memory_space<vmem>>, %arg2: memref<16x16xf32, #tpu.memory_space<vmem>>, %arg3: memref<4x1xf32, #tpu.memory_space<vmem>>, %arg4: memref<4x1xf32, #tpu.memory_space<vmem>>, %arg5: memref<1x16x1024xf32, #tpu.memory_space<vmem>>, %arg6: memref<1x16x2xf32, #tpu.memory_space<vmem>>, %arg7: memref<16x1024xf32, #tpu.memory_space<vmem>>) attributes {dimension_semantics = [#tpu.dimension_semantics<parallel>], iteration_bounds = array<i64: 2>, scalar_prefetch = 0 : i64, scratch_operands = 1 : i64, tpu.core_type = #tpu.core_type<tc>, window_params = [{transform_indices = @transform_0, window_bounds = array<i64: 1, 4, 1024>}, {pipeline_mode = #tpu.pipeline_mode<synchronous>, transform_indices = @transform_1, window_bounds = array<i64: 16, 16>}, {pipeline_mode = #tpu.pipeline_mode<synchronous>, transform_indices = @transform_2, window_bounds = array<i64: 4, 1>}, {pipeline_mode = #tpu.pipeline_mode<synchronous>, transform_indices = @transform_3, window_bounds = array<i64: 4, 1>}, {transform_indices = @transform_4, window_bounds = array<i64: 1, 16, 1024>}, {transform_indices = @transform_5, window_bounds = array<i64: 1, 16, 2>}]} {
    %c0 = arith.constant 0 : index
    %c0_0 = arith.constant 0 : index
    %c0_1 = arith.constant 0 : index
    %0 = vector.load %arg1[%c0, %c0_0, %c0_1] : memref<1x4x1024xf32, #tpu.memory_space<vmem>>, vector<1x4x1024xf32>
    %1 = vector.shape_cast %0 : vector<1x4x1024xf32> to vector<4x1024xf32>
    %c0_2 = arith.constant 0 : index
    %c0_3 = arith.constant 0 : index
    %2 = vector.load %arg3[%c0_2, %c0_3] : memref<4x1xf32, #tpu.memory_space<vmem>>, vector<4x1xf32>
    %3 = vector.broadcast %2 : vector<4x1xf32> to vector<4x1024xf32>
    %4 = arith.mulf %1, %3 : vector<4x1024xf32>
    %c0_4 = arith.constant 0 : index
    %c0_5 = arith.constant 0 : index
    %5 = vector.load %arg4[%c0_4, %c0_5] : memref<4x1xf32, #tpu.memory_space<vmem>>, vector<4x1xf32>
    %6 = vector.broadcast %5 : vector<4x1xf32> to vector<4x1024xf32>
    %7 = arith.addf %4, %6 : vector<4x1024xf32>
    %cst = arith.constant 0.000000e+00 : f32
    %8 = vector.broadcast %cst : f32 to vector<4x1024xf32>
    %9 = arith.maximumf %7, %8 : vector<4x1024xf32>
    %10 = tpu.iota {dimensions = array<i32: 1>} : vector<1x1024xi32>
    %c32_i32 = arith.constant 32 : i32
    %c0_i32 = arith.constant 0 : i32
    %11 = arith.cmpi eq, %c32_i32, %c0_i32 : i32
    %c1_i32 = arith.constant 1 : i32
    %12 = arith.select %11, %c1_i32, %c32_i32 : i32
    %13 = vector.broadcast %12 : i32 to vector<1x1024xi32>
    %14 = arith.remsi %10, %13 : vector<1x1024xi32>
    %c0_i32_6 = arith.constant 0 : i32
    %15 = vector.broadcast %c0_i32_6 : i32 to vector<1x1024xi32>
    %16 = arith.cmpi ne, %14, %15 : vector<1x1024xi32>
    %c0_i32_7 = arith.constant 0 : i32
    %17 = vector.broadcast %c0_i32_7 : i32 to vector<1x1024xi32>
    %18 = arith.cmpi slt, %14, %17 : vector<1x1024xi32>
    %c0_i32_8 = arith.constant 0 : i32
    %19 = arith.cmpi slt, %12, %c0_i32_8 : i32
    %20 = vector.broadcast %19 : i1 to vector<1x1024xi1>
    %21 = vector.broadcast %20 : vector<1x1024xi1> to vector<1x1024xi1>
    %22 = arith.xori %18, %21 : vector<1x1024xi1>
    %23 = arith.andi %22, %16 : vector<1x1024xi1>
    %24 = vector.broadcast %12 : i32 to vector<1x1024xi32>
    %25 = arith.addi %14, %24 : vector<1x1024xi32>
    %26 = arith.select %23, %25, %14 : vector<1x1024xi1>, vector<1x1024xi32>
    %c31_i32 = arith.constant 31 : i32
    %27 = vector.broadcast %c31_i32 : i32 to vector<1x1024xi32>
    %28 = arith.cmpi ne, %26, %27 : vector<1x1024xi32>
    %cst_9 = arith.constant 0.000000e+00 : f32
    %29 = vector.broadcast %cst_9 : f32 to vector<4x1024xf32>
    %c0_10 = arith.constant 0 : index
    %c0_11 = arith.constant 0 : index
    %30 = vector.load %arg7[%c0_10, %c0_11] : memref<16x1024xf32, #tpu.memory_space<vmem>>, vector<4x1024xf32>
    tpu.vector_store %arg7[%c0_10, %c0_11], %9 {strides = array<i32>} : memref<16x1024xf32, #tpu.memory_space<vmem>>, vector<4x1024xf32>,
    %31 = vector.extract_strided_slice %9 {offsets = [0, 1], sizes = [4, 1023], strides = [1, 1]} : vector<4x1024xf32> to vector<4x1023xf32>
    %cst_12 = arith.constant 0.000000e+00 : f32
    %32 = vector.broadcast %cst_12 : f32 to vector<4x1xf32>
    %33 = tpu.concatenate %31, %32 in 1 : vector<4x1023xf32>, vector<4x1xf32> -> vector<4x1024xf32>
    %34 = vector.shape_cast %28 : vector<1x1024xi1> to vector<1x1024xi1>
    %35 = vector.broadcast %34 : vector<1x1024xi1> to vector<4x1024xi1>
    %36 = arith.select %35, %33, %29 : vector<4x1024xi1>, vector<4x1024xf32>
    %c4 = arith.constant 4 : index
    %c0_13 = arith.constant 0 : index
    %37 = vector.load %arg7[%c4, %c0_13] : memref<16x1024xf32, #tpu.memory_space<vmem>>, vector<4x1024xf32>
    tpu.vector_store %arg7[%c4, %c0_13], %36 {strides = array<i32>} : memref<16x1024xf32, #tpu.memory_space<vmem>>, vector<4x1024xf32>,
    %38 = vector.extract_strided_slice %9 {offsets = [0, 32], sizes = [4, 992], strides = [1, 1]} : vector<4x1024xf32> to vector<4x992xf32>
    %cst_14 = arith.constant 0.000000e+00 : f32
    %39 = vector.broadcast %cst_14 : f32 to vector<4x32xf32>
    %40 = tpu.concatenate %38, %39 in 1 : vector<4x992xf32>, vector<4x32xf32> -> vector<4x1024xf32>
    %c8 = arith.constant 8 : index
    %c0_15 = arith.constant 0 : index
    %41 = vector.load %arg7[%c8, %c0_15] : memref<16x1024xf32, #tpu.memory_space<vmem>>, vector<4x1024xf32>
    tpu.vector_store %arg7[%c8, %c0_15], %40 {strides = array<i32>} : memref<16x1024xf32, #tpu.memory_space<vmem>>, vector<4x1024xf32>,
    %42 = vector.extract_strided_slice %9 {offsets = [0, 33], sizes = [4, 991], strides = [1, 1]} : vector<4x1024xf32> to vector<4x991xf32>
    %cst_16 = arith.constant 0.000000e+00 : f32
    %43 = vector.broadcast %cst_16 : f32 to vector<4x33xf32>
    %44 = tpu.concatenate %42, %43 in 1 : vector<4x991xf32>, vector<4x33xf32> -> vector<4x1024xf32>
    %45 = vector.shape_cast %28 : vector<1x1024xi1> to vector<1x1024xi1>
    %46 = vector.broadcast %45 : vector<1x1024xi1> to vector<4x1024xi1>
    %47 = arith.select %46, %44, %29 : vector<4x1024xi1>, vector<4x1024xf32>
    %c12 = arith.constant 12 : index
    %c0_17 = arith.constant 0 : index
    %48 = vector.load %arg7[%c12, %c0_17] : memref<16x1024xf32, #tpu.memory_space<vmem>>, vector<4x1024xf32>
    tpu.vector_store %arg7[%c12, %c0_17], %47 {strides = array<i32>} : memref<16x1024xf32, #tpu.memory_space<vmem>>, vector<4x1024xf32>,
    %c0_18 = arith.constant 0 : index
    %c0_19 = arith.constant 0 : index
    %49 = vector.load %arg2[%c0_18, %c0_19] : memref<16x16xf32, #tpu.memory_space<vmem>>, vector<16x16xf32>
    %c0_20 = arith.constant 0 : index
    %c0_21 = arith.constant 0 : index
    %50 = vector.load %arg7[%c0_20, %c0_21] : memref<16x1024xf32, #tpu.memory_space<vmem>>, vector<16x1024xf32>
    %cst_22 = arith.constant dense<0.000000e+00> : vector<16x1024xf32>
    %51 = tpu.matmul %49, %50, %cst_22 {dimension_numbers = #tpu.dot_dimension_numbers<[1], [0], [0], [1], [0, 0, 1, 1], [], []>} : vector<16x16xf32>, vector<16x1024xf32>, vector<16x1024xf32> -> vector<16x1024xf32>
    %c0_23 = arith.constant 0 : index
    %c0_24 = arith.constant 0 : index
    %c0_25 = arith.constant 0 : index
    %52 = vector.load %arg5[%c0_23, %c0_24, %c0_25] : memref<1x16x1024xf32, #tpu.memory_space<vmem>>, vector<1x16x1024xf32>
    %53 = vector.shape_cast %52 : vector<1x16x1024xf32> to vector<16x1024xf32>
    %54 = vector.shape_cast %51 : vector<16x1024xf32> to vector<1x16x1024xf32>
    tpu.vector_store %arg5[%c0_23, %c0_24, %c0_25], %54 {strides = array<i32>} : memref<1x16x1024xf32, #tpu.memory_space<vmem>>, vector<1x16x1024xf32>,
    %cst_26 = arith.constant dense<0.000000e+00> : vector<16xf32>
    %55 = vector.multi_reduction <add>, %51, %cst_26 [1] : vector<16x1024xf32> to vector<16xf32>
    %56 = vector.shape_cast %55 : vector<16xf32> to vector<16x1xf32>
    %57 = arith.mulf %51, %51 : vector<16x1024xf32>
    %cst_27 = arith.constant dense<0.000000e+00> : vector<16xf32>
    %58 = vector.multi_reduction <add>, %57, %cst_27 [1] : vector<16x1024xf32> to vector<16xf32>
    %59 = vector.shape_cast %58 : vector<16xf32> to vector<16x1xf32>
    %60 = tpu.concatenate %56, %59 in 1 : vector<16x1xf32>, vector<16x1xf32> -> vector<16x2xf32>
    %c0_28 = arith.constant 0 : index
    %c0_29 = arith.constant 0 : index
    %c0_30 = arith.constant 0 : index
    %61 = vector.load %arg6[%c0_28, %c0_29, %c0_30] : memref<1x16x2xf32, #tpu.memory_space<vmem>>, vector<1x16x2xf32>
    %62 = vector.shape_cast %61 : vector<1x16x2xf32> to vector<16x2xf32>
    %63 = vector.shape_cast %60 : vector<16x2xf32> to vector<1x16x2xf32>
    tpu.vector_store %arg6[%c0_28, %c0_29, %c0_30], %63 {strides = array<i32>} : memref<1x16x2xf32, #tpu.memory_space<vmem>>, vector<1x16x2xf32>,
    return
  }
  func.func @transform_0(%arg0: i32) -> (i32, i32, i32) {
    %c0_i32 = arith.constant 0 : i32
    %c0_i32_0 = arith.constant 0 : i32
    %c0_i32_1 = arith.constant 0 : i32
    return %arg0, %c0_i32, %c0_i32_0 : i32, i32, i32
  }
  func.func @transform_1(%arg0: i32) -> (i32, i32) {
    %c0_i32 = arith.constant 0 : i32
    %c0_i32_0 = arith.constant 0 : i32
    %c0_i32_1 = arith.constant 0 : i32
    return %c0_i32, %c0_i32_0 : i32, i32
  }
  func.func @transform_2(%arg0: i32) -> (i32, i32) {
    %c0_i32 = arith.constant 0 : i32
    %c0_i32_0 = arith.constant 0 : i32
    %c0_i32_1 = arith.constant 0 : i32
    return %c0_i32, %c0_i32_0 : i32, i32
  }
  func.func @transform_3(%arg0: i32) -> (i32, i32) {
    %c0_i32 = arith.constant 0 : i32
    %c0_i32_0 = arith.constant 0 : i32
    %c0_i32_1 = arith.constant 0 : i32
    return %c0_i32, %c0_i32_0 : i32, i32
  }
  func.func @transform_4(%arg0: i32) -> (i32, i32, i32) {
    %c0_i32 = arith.constant 0 : i32
    %c0_i32_0 = arith.constant 0 : i32
    %c0_i32_1 = arith.constant 0 : i32
    return %arg0, %c0_i32, %c0_i32_0 : i32, i32, i32
  }
  func.func @transform_5(%arg0: i32) -> (i32, i32, i32) {
    %c0_i32 = arith.constant 0 : i32
    %c0_i32_0 = arith.constant 0 : i32
    %c0_i32_1 = arith.constant 0 : i32
    return %arg0, %c0_i32, %c0_i32_0 : i32, i32, i32
  }
}

module attributes {stable_mosaic.version = 11 : i64} {
  func.func @_linear_bn_stats_kernel(%arg0: i32, %arg1: i32, %arg2: memref<1x16x512xf32, #tpu.memory_space<vmem>>, %arg3: memref<32x16xf32, #tpu.memory_space<vmem>>, %arg4: memref<16x1xf32, #tpu.memory_space<vmem>>, %arg5: memref<16x1xf32, #tpu.memory_space<vmem>>, %arg6: memref<1x32x512xf32, #tpu.memory_space<vmem>>, %arg7: memref<1x32x2xf32, #tpu.memory_space<vmem>>) attributes {dimension_semantics = [#tpu.dimension_semantics<parallel>, #tpu.dimension_semantics<arbitrary>], iteration_bounds = array<i64: 2, 2>, scalar_prefetch = 0 : i64, scratch_operands = 0 : i64, tpu.core_type = #tpu.core_type<tc>, window_params = [{transform_indices = @transform_0, window_bounds = array<i64: 1, 16, 512>}, {pipeline_mode = #tpu.pipeline_mode<synchronous>, transform_indices = @transform_1, window_bounds = array<i64: 32, 16>}, {pipeline_mode = #tpu.pipeline_mode<synchronous>, transform_indices = @transform_2, window_bounds = array<i64: 16, 1>}, {pipeline_mode = #tpu.pipeline_mode<synchronous>, transform_indices = @transform_3, window_bounds = array<i64: 16, 1>}, {transform_indices = @transform_4, window_bounds = array<i64: 1, 32, 512>}, {transform_indices = @transform_5, window_bounds = array<i64: 1, 32, 2>}]} {
    %c0 = arith.constant 0 : index
    %c0_0 = arith.constant 0 : index
    %c0_1 = arith.constant 0 : index
    %0 = vector.load %arg2[%c0, %c0_0, %c0_1] : memref<1x16x512xf32, #tpu.memory_space<vmem>>, vector<1x16x512xf32>
    %1 = vector.shape_cast %0 : vector<1x16x512xf32> to vector<16x512xf32>
    %c0_2 = arith.constant 0 : index
    %c0_3 = arith.constant 0 : index
    %2 = vector.load %arg4[%c0_2, %c0_3] : memref<16x1xf32, #tpu.memory_space<vmem>>, vector<16x1xf32>
    %3 = vector.broadcast %2 : vector<16x1xf32> to vector<16x512xf32>
    %4 = arith.mulf %1, %3 : vector<16x512xf32>
    %c0_4 = arith.constant 0 : index
    %c0_5 = arith.constant 0 : index
    %5 = vector.load %arg5[%c0_4, %c0_5] : memref<16x1xf32, #tpu.memory_space<vmem>>, vector<16x1xf32>
    %6 = vector.broadcast %5 : vector<16x1xf32> to vector<16x512xf32>
    %7 = arith.addf %4, %6 : vector<16x512xf32>
    %cst = arith.constant 0.000000e+00 : f32
    %8 = vector.broadcast %cst : f32 to vector<16x512xf32>
    %9 = arith.maximumf %7, %8 : vector<16x512xf32>
    %c0_6 = arith.constant 0 : index
    %c0_7 = arith.constant 0 : index
    %10 = vector.load %arg3[%c0_6, %c0_7] : memref<32x16xf32, #tpu.memory_space<vmem>>, vector<32x16xf32>
    %cst_8 = arith.constant dense<0.000000e+00> : vector<32x512xf32>
    %11 = tpu.matmul %10, %9, %cst_8 {dimension_numbers = #tpu.dot_dimension_numbers<[1], [0], [0], [1], [0, 0, 1, 1], [], []>} : vector<32x16xf32>, vector<16x512xf32>, vector<32x512xf32> -> vector<32x512xf32>
    %c0_9 = arith.constant 0 : index
    %c0_10 = arith.constant 0 : index
    %c0_11 = arith.constant 0 : index
    %12 = vector.load %arg6[%c0_9, %c0_10, %c0_11] : memref<1x32x512xf32, #tpu.memory_space<vmem>>, vector<1x32x512xf32>
    %13 = vector.shape_cast %12 : vector<1x32x512xf32> to vector<32x512xf32>
    %14 = vector.shape_cast %11 : vector<32x512xf32> to vector<1x32x512xf32>
    tpu.vector_store %arg6[%c0_9, %c0_10, %c0_11], %14 {strides = array<i32>} : memref<1x32x512xf32, #tpu.memory_space<vmem>>, vector<1x32x512xf32>,
    %cst_12 = arith.constant dense<0.000000e+00> : vector<32xf32>
    %15 = vector.multi_reduction <add>, %11, %cst_12 [1] : vector<32x512xf32> to vector<32xf32>
    %16 = vector.shape_cast %15 : vector<32xf32> to vector<32x1xf32>
    %17 = arith.mulf %11, %11 : vector<32x512xf32>
    %cst_13 = arith.constant dense<0.000000e+00> : vector<32xf32>
    %18 = vector.multi_reduction <add>, %17, %cst_13 [1] : vector<32x512xf32> to vector<32xf32>
    %19 = vector.shape_cast %18 : vector<32xf32> to vector<32x1xf32>
    %20 = tpu.concatenate %16, %19 in 1 : vector<32x1xf32>, vector<32x1xf32> -> vector<32x2xf32>
    %c0_i32 = arith.constant 0 : i32
    %21 = arith.cmpi eq, %arg1, %c0_i32 : i32
    %22 = arith.extui %21 : i1 to i32
    %c0_i32_14 = arith.constant 0 : i32
    %23 = arith.cmpi ne, %22, %c0_i32_14 : i32
    scf.if %23 {
      %cst_21 = arith.constant 0.000000e+00 : f32
      %30 = vector.broadcast %cst_21 : f32 to vector<32x2xf32>
      %c0_22 = arith.constant 0 : index
      %c0_23 = arith.constant 0 : index
      %c0_24 = arith.constant 0 : index
      %31 = vector.load %arg7[%c0_22, %c0_23, %c0_24] : memref<1x32x2xf32, #tpu.memory_space<vmem>>, vector<1x32x2xf32>
      %32 = vector.shape_cast %31 : vector<1x32x2xf32> to vector<32x2xf32>
      %33 = vector.shape_cast %30 : vector<32x2xf32> to vector<1x32x2xf32>
      tpu.vector_store %arg7[%c0_22, %c0_23, %c0_24], %33 {strides = array<i32>} : memref<1x32x2xf32, #tpu.memory_space<vmem>>, vector<1x32x2xf32>,
    } else {
    }
    %c0_15 = arith.constant 0 : index
    %c0_16 = arith.constant 0 : index
    %c0_17 = arith.constant 0 : index
    %24 = vector.load %arg7[%c0_15, %c0_16, %c0_17] : memref<1x32x2xf32, #tpu.memory_space<vmem>>, vector<1x32x2xf32>
    %25 = vector.shape_cast %24 : vector<1x32x2xf32> to vector<32x2xf32>
    %26 = arith.addf %25, %20 : vector<32x2xf32>
    %c0_18 = arith.constant 0 : index
    %c0_19 = arith.constant 0 : index
    %c0_20 = arith.constant 0 : index
    %27 = vector.load %arg7[%c0_18, %c0_19, %c0_20] : memref<1x32x2xf32, #tpu.memory_space<vmem>>, vector<1x32x2xf32>
    %28 = vector.shape_cast %27 : vector<1x32x2xf32> to vector<32x2xf32>
    %29 = vector.shape_cast %26 : vector<32x2xf32> to vector<1x32x2xf32>
    tpu.vector_store %arg7[%c0_18, %c0_19, %c0_20], %29 {strides = array<i32>} : memref<1x32x2xf32, #tpu.memory_space<vmem>>, vector<1x32x2xf32>,
    return
  }
  func.func @transform_0(%arg0: i32, %arg1: i32) -> (i32, i32, i32) {
    %c0_i32 = arith.constant 0 : i32
    %c0_i32_0 = arith.constant 0 : i32
    return %arg0, %c0_i32, %arg1 : i32, i32, i32
  }
  func.func @transform_1(%arg0: i32, %arg1: i32) -> (i32, i32) {
    %c0_i32 = arith.constant 0 : i32
    %c0_i32_0 = arith.constant 0 : i32
    %c0_i32_1 = arith.constant 0 : i32
    return %c0_i32, %c0_i32_0 : i32, i32
  }
  func.func @transform_2(%arg0: i32, %arg1: i32) -> (i32, i32) {
    %c0_i32 = arith.constant 0 : i32
    %c0_i32_0 = arith.constant 0 : i32
    %c0_i32_1 = arith.constant 0 : i32
    return %c0_i32, %c0_i32_0 : i32, i32
  }
  func.func @transform_3(%arg0: i32, %arg1: i32) -> (i32, i32) {
    %c0_i32 = arith.constant 0 : i32
    %c0_i32_0 = arith.constant 0 : i32
    %c0_i32_1 = arith.constant 0 : i32
    return %c0_i32, %c0_i32_0 : i32, i32
  }
  func.func @transform_4(%arg0: i32, %arg1: i32) -> (i32, i32, i32) {
    %c0_i32 = arith.constant 0 : i32
    %c0_i32_0 = arith.constant 0 : i32
    return %arg0, %c0_i32, %arg1 : i32, i32, i32
  }
  func.func @transform_5(%arg0: i32, %arg1: i32) -> (i32, i32, i32) {
    %c0_i32 = arith.constant 0 : i32
    %c0_i32_0 = arith.constant 0 : i32
    %c0_i32_1 = arith.constant 0 : i32
    return %arg0, %c0_i32, %c0_i32_0 : i32, i32, i32
  }
}

module attributes {stable_mosaic.version = 11 : i64} {
  func.func @_bn_relu_kernel(%arg0: i32, %arg1: i32, %arg2: memref<1x32x512xf32, #tpu.memory_space<vmem>>, %arg3: memref<32x1xf32, #tpu.memory_space<vmem>>, %arg4: memref<32x1xf32, #tpu.memory_space<vmem>>, %arg5: memref<1x32x512xf32, #tpu.memory_space<vmem>>) attributes {dimension_semantics = [#tpu.dimension_semantics<parallel>, #tpu.dimension_semantics<parallel>], iteration_bounds = array<i64: 2, 2>, scalar_prefetch = 0 : i64, scratch_operands = 0 : i64, tpu.core_type = #tpu.core_type<tc>, window_params = [{transform_indices = @transform_0, window_bounds = array<i64: 1, 32, 512>}, {pipeline_mode = #tpu.pipeline_mode<synchronous>, transform_indices = @transform_1, window_bounds = array<i64: 32, 1>}, {pipeline_mode = #tpu.pipeline_mode<synchronous>, transform_indices = @transform_2, window_bounds = array<i64: 32, 1>}, {transform_indices = @transform_3, window_bounds = array<i64: 1, 32, 512>}]} {
    %c0 = arith.constant 0 : index
    %c0_0 = arith.constant 0 : index
    %c0_1 = arith.constant 0 : index
    %0 = vector.load %arg2[%c0, %c0_0, %c0_1] : memref<1x32x512xf32, #tpu.memory_space<vmem>>, vector<1x32x512xf32>
    %1 = vector.shape_cast %0 : vector<1x32x512xf32> to vector<32x512xf32>
    %c0_2 = arith.constant 0 : index
    %c0_3 = arith.constant 0 : index
    %2 = vector.load %arg3[%c0_2, %c0_3] : memref<32x1xf32, #tpu.memory_space<vmem>>, vector<32x1xf32>
    %3 = vector.broadcast %2 : vector<32x1xf32> to vector<32x512xf32>
    %4 = arith.mulf %1, %3 : vector<32x512xf32>
    %c0_4 = arith.constant 0 : index
    %c0_5 = arith.constant 0 : index
    %5 = vector.load %arg4[%c0_4, %c0_5] : memref<32x1xf32, #tpu.memory_space<vmem>>, vector<32x1xf32>
    %6 = vector.broadcast %5 : vector<32x1xf32> to vector<32x512xf32>
    %7 = arith.addf %4, %6 : vector<32x512xf32>
    %cst = arith.constant 0.000000e+00 : f32
    %8 = vector.broadcast %cst : f32 to vector<32x512xf32>
    %9 = arith.maximumf %7, %8 : vector<32x512xf32>
    %c0_6 = arith.constant 0 : index
    %c0_7 = arith.constant 0 : index
    %c0_8 = arith.constant 0 : index
    %10 = vector.load %arg5[%c0_6, %c0_7, %c0_8] : memref<1x32x512xf32, #tpu.memory_space<vmem>>, vector<1x32x512xf32>
    %11 = vector.shape_cast %10 : vector<1x32x512xf32> to vector<32x512xf32>
    %12 = vector.shape_cast %9 : vector<32x512xf32> to vector<1x32x512xf32>
    tpu.vector_store %arg5[%c0_6, %c0_7, %c0_8], %12 {strides = array<i32>} : memref<1x32x512xf32, #tpu.memory_space<vmem>>, vector<1x32x512xf32>,
    return
  }
  func.func @transform_0(%arg0: i32, %arg1: i32) -> (i32, i32, i32) {
    %c0_i32 = arith.constant 0 : i32
    %c0_i32_0 = arith.constant 0 : i32
    return %arg0, %c0_i32, %arg1 : i32, i32, i32
  }
  func.func @transform_1(%arg0: i32, %arg1: i32) -> (i32, i32) {
    %c0_i32 = arith.constant 0 : i32
    %c0_i32_0 = arith.constant 0 : i32
    %c0_i32_1 = arith.constant 0 : i32
    return %c0_i32, %c0_i32_0 : i32, i32
  }
  func.func @transform_2(%arg0: i32, %arg1: i32) -> (i32, i32) {
    %c0_i32 = arith.constant 0 : i32
    %c0_i32_0 = arith.constant 0 : i32
    %c0_i32_1 = arith.constant 0 : i32
    return %c0_i32, %c0_i32_0 : i32, i32
  }
  func.func @transform_3(%arg0: i32, %arg1: i32) -> (i32, i32, i32) {
    %c0_i32 = arith.constant 0 : i32
    %c0_i32_0 = arith.constant 0 : i32
    return %arg0, %c0_i32, %arg1 : i32, i32, i32
  }
}

</mosaic_0001>

<llo_original>
// kernel: tile.28
$region0: #{tile.28}
  #allocation0 [shape = 's32[1]{0}', space=sflag, size = 0x4, scoped, tag = 'scoped memory for tile.28']
  %s0 = inlined_call_operand.vmem [shape: f32[4], index: 0, kind: input, shape index: {}]
  %s1 = inlined_call_operand.vmem [shape: f32[4,4], index: 1, kind: output, shape index: {}]
  // Predicated region
  $region2: #{tile.28} parent=0 // pred_check
    _
  $region3: #{tile.28} parent=0 // pred_check_branch
    %3 = sbr.rel (0) target = $region5
  $region4: #{tile.28} parent=0 // pred_region
    _
  $region5: #{tile.28} parent=0 // pred_fallthru
    _
  %v4 = vld [vmem:[%s0] ss:$0 sm:$0xff]
  %5 = vst [vmem:[%s1] sm:$0xf] %v4

// kernel: tile.0
$region0: #{tile.0}
  %s0 = inlined_call_operand.vmem [shape: f32[4,4], index: 0, kind: input, shape index: {}]
  %s1 = inlined_call_operand.vmem [shape: f32[16,1], index: 1, kind: output, shape index: {}]
  $region1: #{tile.0} parent=0
    #allocation0 [shape = 'u8[4096]{0}', space=vmem, size = 0x1000, scoped, tag = 'scoped mem for input reshape']
    %s3 = ssub.s32 16, 1
    %v4 = vld [vmem:[%s0] sm:%s3]
    %5 = vst [vmem:[#allocation0] sm:%s3] %v4
    %v6 = vld [vmem:[#allocation0] sm:$0xf]
    %vm7 = vcmask 7168
    %8 = vst.msk [vmem:[%s1] ss:$4 sm:$0xf] %vm7, %v6
    %v9 = vld [vmem:[#allocation0] sm:$0xf]
    %10 = vrot.lane.b32.xlu0 %v9, 127
    %v11 = vpop.permute.xlu0 %10
    %vm12 = vcmask 7168
    %s13 = scalar_lea.vmem %s1, 1
    %14 = vst.msk [vmem:[%s13] ss:$4 sm:$0xf] %vm12, %v11
    %v15 = vld [vmem:[#allocation0] sm:$0xf]
    %16 = vrot.lane.b32.xlu0 %v15, 126
    %v17 = vpop.permute.xlu0 %16
    %vm18 = vcmask 7168
    %s19 = scalar_lea.vmem %s1, 2
    %20 = vst.msk [vmem:[%s19] ss:$4 sm:$0xf] %vm18, %v17
    %v21 = vld [vmem:[#allocation0] sm:$0xf]
    %22 = vrot.lane.b32.xlu0 %v21, 125
    %v23 = vpop.permute.xlu0 %22
    %vm24 = vcmask 7168
    %s25 = scalar_lea.vmem %s1, 3
    %26 = vst.msk [vmem:[%s25] ss:$4 sm:$0xf] %vm24, %v23

// kernel: decoder_block.4
$region0: #{decoder_block.4}
  #allocation0 [shape = 'u32[]', space=smem, size = 0x4, offset = 0x4, fixed_abs, tag = 'smem constant byte address 0x4 - core index']
  #allocation1 [shape = 'u32[72,128]{1,0:T(1,128)}', space=vmem, size = 0x9000, scoped, tag = 'internal scratch']
  %s0 = inlined_call_operand.vmem [shape: f32[2,16,1024], index: 0, kind: input, shape index: {}]
  %s1 = inlined_call_operand.hbm [shape: f32[4,16], index: 1, kind: input, shape index: {}]
  %s2 = inlined_call_operand.vmem [shape: f32[16,1], index: 2, kind: input, shape index: {}]
  %s3 = inlined_call_operand.vmem [shape: f32[16,1], index: 3, kind: input, shape index: {}]
  %s4 = inlined_call_operand.vmem [shape: f32[2,4,1024], index: 4, kind: output, shape index: {0}]
  %s5 = inlined_call_operand.vmem [shape: f32[2,4,2], index: 5, kind: output, shape index: {1}]
  %6 = xla_tuple %s4, %s5
  %s7 = sld [smem:[#allocation0]]
  $region88: #{decoder_block.4} parent=0
    _
  %s9 = ssub.s32 1, %s7
  %s10 = scalar_select 0, %s9, %s7
  $region1: #{decoder_block.4} parent=0
    #allocation2 [shape = 'u8[65536]{0}', space=vmem, size = 0x10000, scoped, tag = 'input window, operand 0']
    #allocation3 [shape = 'u8[2048]{0}', space=vmem, size = 0x800, scoped, tag = 'input window, operand 1, single buffered']
    #allocation4 [shape = 's32[2]{0}', space=sflag, size = 0x8, scoped, tag = 'scoped memory for decoder_block.4']
    %11 = vsyncpa [#allocation4], 0
    loop: start=0, step=1, limit=6
    $region2: #{decoder_block.4} parent=1 // loop_pre_header
      _
    $region3: #{decoder_block.4} parent=1 // loop_header
      %s13 = sphi 0, %s17
      %p14 = scmp.ge.s32.totalorder %s13, 6
      %s20 = sphi 0, %s32
      %s21 = sphi 0, %s28
      %s22 = sphi 0, %s20
      %s23 = sphi 0, %s21
      %s24 = sphi 0, %s22
      %s25 = sphi 0, %s23
      %s37 = sphi 0, %s39
      %s40 = sphi 0, %s37
      %s41 = sphi 0, %s40
      %s57 = sphi 0, %s41
      %s61 = sphi 0, %s61
      %s63 = sphi 0, %s61
      %s64 = sphi 0, %s63
      %s78 = sphi 0, %s64
      %s82 = sphi 0, %s82
      %s84 = sphi 0, %s82
      %s85 = sphi 0, %s84
      %s99 = sphi 0, %s85
      %s103 = sphi 0, %s103
      %s105 = sphi 0, %s103
      %s106 = sphi 0, %s105
      %s120 = sphi 0, %s106
      %s128 = sphi 0, %s130
      %s131 = sphi 0, %s128
      %s132 = sphi 0, %s131
      %s148 = sphi 0, %s132
      %s154 = sphi 0, %s156
      %s157 = sphi 0, %s154
      %s158 = sphi 0, %s157
      %s174 = sphi 0, %s158
    $region4: #{decoder_block.4} parent=1 // loop_header_branch
      %16 = sbr.rel (%p14) target = $region8
    $region5: #{decoder_block.4} parent=1 // loop_body
      %s18 = ssub.s32 %s13, 1
      %s19 = ssub.s32 %s13, 2
      %s26 = sadd.s32 1, %s21
      %p27 = scmp.ge.s32.totalorder %s26, 2
      %s28 = scalar_select %p27, 0, %s26
      %s29 = sadd.s32 1, %s20
      %s30 = scalar_select %p27, %s29, %s20
      %p31 = scmp.ge.s32.totalorder %s30, 2
      %s32 = scalar_select %p31, 0, %s30
      %s33 = ssub.s32 %s20, %s32
      %s34 = ssub.s32 %s21, %s28
      %s35 = sor.u32 %s33, %s34
      %p36 = scmp.eq.s32.totalorder %s35, 0
      %s38 = sadd.s32 %s37, 1
      %s39 = scalar_select %p36, %s37, %s38
      %p42 = pneg %p36
      %p43 = scmp.eq.s32.totalorder %s13, 3
      %p44 = por %p42, %p43
      %p45 = scmp.ne.s32.totalorder %s37, %s40
      %p46 = scmp.eq.s32.totalorder %s13, 0
      %p47 = por %p45, %p46
      %p48 = scmp.ne.s32.totalorder %s37, %s40
      %p49 = scmp.eq.s32.totalorder %s18, 3
      %p50 = por %p48, %p49
      %p51 = scmp.ne.s32.totalorder %s40, %s41
      %p52 = scmp.eq.s32.totalorder %s18, 0
      %p53 = por %p51, %p52
      %p54 = scmp.ne.s32.totalorder %s40, %s41
      %p55 = scmp.eq.s32.totalorder %s19, 3
      %p56 = por %p54, %p55
      %p58 = scmp.ne.s32.totalorder %s41, %s57
      %p59 = scmp.eq.s32.totalorder %s19, 0
      %p60 = por %p58, %p59
      %s62 = sadd.s32 %s61, 1
      %p65 = scmp.eq.s32.totalorder %s13, 3
      %p66 = scmp.ne.s32.totalorder %s61, %s63
      %p67 = scmp.eq.s32.totalorder %s13, 0
      %p68 = por %p66, %p67
      %p69 = scmp.ne.s32.totalorder %s61, %s63
      %p70 = scmp.eq.s32.totalorder %s18, 3
      %p71 = por %p69, %p70
      %p72 = scmp.ne.s32.totalorder %s63, %s64
      %p73 = scmp.eq.s32.totalorder %s18, 0
      %p74 = por %p72, %p73
      %p75 = scmp.ne.s32.totalorder %s63, %s64
      %p76 = scmp.eq.s32.totalorder %s19, 3
      %p77 = por %p75, %p76
      %p79 = scmp.ne.s32.totalorder %s64, %s78
      %p80 = scmp.eq.s32.totalorder %s19, 0
      %p81 = por %p79, %p80
      %s83 = sadd.s32 %s82, 1
      %p86 = scmp.eq.s32.totalorder %s13, 3
      %p87 = scmp.ne.s32.totalorder %s82, %s84
      %p88 = scmp.eq.s32.totalorder %s13, 0
      %p89 = por %p87, %p88
      %p90 = scmp.ne.s32.totalorder %s82, %s84
      %p91 = scmp.eq.s32.totalorder %s18, 3
      %p92 = por %p90, %p91
      %p93 = scmp.ne.s32.totalorder %s84, %s85
      %p94 = scmp.eq.s32.totalorder %s18, 0
      %p95 = por %p93, %p94
      %p96 = scmp.ne.s32.totalorder %s84, %s85
      %p97 = scmp.eq.s32.totalorder %s19, 3
      %p98 = por %p96, %p97
      %p100 = scmp.ne.s32.totalorder %s85, %s99
      %p101 = scmp.eq.s32.totalorder %s19, 0
      %p102 = por %p100, %p101
      %s104 = sadd.s32 %s103, 1
      %p107 = scmp.eq.s32.totalorder %s13, 3
      %p108 = scmp.ne.s32.totalorder %s103, %s105
      %p109 = scmp.eq.s32.totalorder %s13, 0
      %p110 = por %p108, %p109
      %p111 = scmp.ne.s32.totalorder %s103, %s105
      %p112 = scmp.eq.s32.totalorder %s18, 3
      %p113 = por %p111, %p112
      %p114 = scmp.ne.s32.totalorder %s105, %s106
      %p115 = scmp.eq.s32.totalorder %s18, 0
      %p116 = por %p114, %p115
      %p117 = scmp.ne.s32.totalorder %s105, %s106
      %p118 = scmp.eq.s32.totalorder %s19, 3
      %p119 = por %p117, %p118
      %p121 = scmp.ne.s32.totalorder %s106, %s120
      %p122 = scmp.eq.s32.totalorder %s19, 0
      %p123 = por %p121, %p122
      %s124 = ssub.s32 %s20, %s32
      %s125 = ssub.s32 %s21, %s28
      %s126 = sor.u32 %s124, %s125
      %p127 = scmp.eq.s32.totalorder %s126, 0
      %s129 = sadd.s32 %s128, 1
      %s130 = scalar_select %p127, %s128, %s129
      %p133 = pneg %p127
      %p134 = scmp.eq.s32.totalorder %s13, 3
      %p135 = por %p133, %p134
      %p136 = scmp.ne.s32.totalorder %s128, %s131
      %p137 = scmp.eq.s32.totalorder %s13, 0
      %p138 = por %p136, %p137
      %p139 = scmp.ne.s32.totalorder %s128, %s131
      %p140 = scmp.eq.s32.totalorder %s18, 3
      %p141 = por %p139, %p140
      %p142 = scmp.ne.s32.totalorder %s131, %s132
      %p143 = scmp.eq.s32.totalorder %s18, 0
      %p144 = por %p142, %p143
      %p145 = scmp.ne.s32.totalorder %s131, %s132
      %p146 = scmp.eq.s32.totalorder %s19, 3
      %p147 = por %p145, %p146
      %p149 = scmp.ne.s32.totalorder %s132, %s148
      %p150 = scmp.eq.s32.totalorder %s19, 0
      %p151 = por %p149, %p150
      %s152 = ssub.s32 %s20, %s32
      %p153 = scmp.eq.s32.totalorder %s152, 0
      %s155 = sadd.s32 %s154, 1
      %s156 = scalar_select %p153, %s154, %s155
      %p159 = pneg %p153
      %p160 = scmp.eq.s32.totalorder %s13, 3
      %p161 = por %p159, %p160
      %p162 = scmp.ne.s32.totalorder %s154, %s157
      %p163 = scmp.eq.s32.totalorder %s13, 0
      %p164 = por %p162, %p163
      %p165 = scmp.ne.s32.totalorder %s154, %s157
      %p166 = scmp.eq.s32.totalorder %s18, 3
      %p167 = por %p165, %p166
      %p168 = scmp.ne.s32.totalorder %s157, %s158
      %p169 = scmp.eq.s32.totalorder %s18, 0
      %p170 = por %p168, %p169
      %p171 = scmp.ne.s32.totalorder %s157, %s158
      %p172 = scmp.eq.s32.totalorder %s19, 3
      %p173 = por %p171, %p172
      %p175 = scmp.ne.s32.totalorder %s158, %s174
      %p176 = scmp.eq.s32.totalorder %s19, 0
      %p177 = por %p175, %p176
      %p178 = scmp.le.s32.totalorder 1, %s13
      %p179 = scmp.lt.s32.totalorder %s13, 5
      %p180 = pnand %p178, %p179
      %p181 = pneg %p180
      // Predicated region
      $region9: #{decoder_block.4} parent=5 // pred_check
        _
      $region10: #{decoder_block.4} parent=5 // pred_check_branch
        %183 = sbr.rel (%p180) target = $region12
      $region11: #{decoder_block.4} parent=5 // pred_region
        %s184 = ssub.s32 %s13, 1
        // Predicated region
        $region13: #{decoder_block.4} parent=11 // pred_check
          %p185 = pneg %p74
        $region14: #{decoder_block.4} parent=11 // pred_check_branch
          %187 = sbr.rel (%p185) target = $region16
        $region15: #{decoder_block.4} parent=11 // pred_region
          %189 = vsyncadd [#allocation4], 0
          %s191 = sshll.u32 %s1, 4
          %s192 = int_to_ptr.hbm [resolvable:$true] %s191
          %s193 = sshll.u32 [#allocation3], 4
          %s194 = int_to_ptr.vmem [resolvable:$true] %s193
          %196 = dma.hbm_to_vmem [thread:$0]  %s192, 64, %s194, [#allocation4]
        $region16: #{decoder_block.4} parent=11 // pred_fallthru
          _
        // Predicated region
        $region17: #{decoder_block.4} parent=11 // pred_check
          %p197 = pneg %p95
        $region18: #{decoder_block.4} parent=11 // pred_check_branch
          %199 = sbr.rel (%p197) target = $region20
        $region19: #{decoder_block.4} parent=11 // pred_region
          _
        $region20: #{decoder_block.4} parent=11 // pred_fallthru
          _
        // Predicated region
        $region21: #{decoder_block.4} parent=11 // pred_check
          %p200 = pneg %p116
        $region22: #{decoder_block.4} parent=11 // pred_check_branch
          %202 = sbr.rel (%p200) target = $region24
        $region23: #{decoder_block.4} parent=11 // pred_region
          _
        $region24: #{decoder_block.4} parent=11 // pred_fallthru
          _
      $region12: #{decoder_block.4} parent=5 // pred_fallthru
        _
      %p203 = scmp.lt.s32.totalorder %s13, 4
      // Predicated region
      $region25: #{decoder_block.4} parent=5 // pred_check
        %p204 = pneg %p203
      $region26: #{decoder_block.4} parent=5 // pred_check_branch
        %206 = sbr.rel (%p204) target = $region28
      $region27: #{decoder_block.4} parent=5 // pred_region
        // Predicated region
        $region29: #{decoder_block.4} parent=27 // pred_check
          %p207 = pneg %p47
        $region30: #{decoder_block.4} parent=27 // pred_check_branch
          %209 = sbr.rel (%p207) target = $region32
        $region31: #{decoder_block.4} parent=27 // pred_region
          %s210 = sand.u32 %s37, 1
          %s211 = sand.u32 %s37, 1
          %s212 = smul.addr %s211, 64
          %s213 = scalar_lea.vmem [#allocation2], %s212
          %s214 = smul.u32 4, %s21
          %s215 = smul.addr %s20, 16
          %s216 = sadd.s32 %s214, %s215
          %s217 = smul.addr %s216, 8
          %s218 = scalar_lea.vmem %s0, %s217
          // Predicated region
          $region33: #{decoder_block.4} parent=31 // pred_check
            _
          $region34: #{decoder_block.4} parent=31 // pred_check_branch
            %220 = sbr.rel (0) target = $region36
          $region35: #{decoder_block.4} parent=31 // pred_region
            // Predicated region
            $region37: #{decoder_block.4} parent=35 // pred_check
              _
            $region38: #{decoder_block.4} parent=35 // pred_check_branch
              %222 = sbr.rel (0) target = $region40
            $region39: #{decoder_block.4} parent=35 // pred_region
              loop: start=0, step=1, limit=1
              $region41: #{decoder_block.4} parent=39 // loop_pre_header
                _
              $region42: #{decoder_block.4} parent=39 // loop_header
                %s224 = sphi 0, %s228
                %p225 = scmp.ge.s32.totalorder %s224, 1
                %s229 = sphi %s218, %s218
                %s230 = sphi %s213, %s213
              $region43: #{decoder_block.4} parent=39 // loop_header_branch
                %227 = sbr.rel (%p225) target = $region47
              $region44: #{decoder_block.4} parent=39 // loop_body
                %v231 = vld [vmem:[%s229] sm:$0xff]
                %232 = vst [vmem:[%s230] sm:$0xff] %v231
                %v233 = vld [vmem:[%s229 + $0x8] sm:$0xff]
                %234 = vst [vmem:[%s230 + $0x8] sm:$0xff] %v233
                %v235 = vld [vmem:[%s229 + $0x10] sm:$0xff]
                %236 = vst [vmem:[%s230 + $0x10] sm:$0xff] %v235
                %v237 = vld [vmem:[%s229 + $0x18] sm:$0xff]
                %238 = vst [vmem:[%s230 + $0x18] sm:$0xff] %v237
                %v239 = vld [vmem:[%s229 + $0x40] sm:$0xff]
                %240 = vst [vmem:[%s230 + $0x20] sm:$0xff] %v239
                %v241 = vld [vmem:[%s229 + $0x48] sm:$0xff]
                %242 = vst [vmem:[%s230 + $0x28] sm:$0xff] %v241
                %v243 = vld [vmem:[%s229 + $0x50] sm:$0xff]
                %244 = vst [vmem:[%s230 + $0x30] sm:$0xff] %v243
                %v245 = vld [vmem:[%s229 + $0x58] sm:$0xff]
                %246 = vst [vmem:[%s230 + $0x38] sm:$0xff] %v245
              $region45: #{decoder_block.4} parent=39 // loop_footer
                %s228 = sadd.s32 1, %s224
              $region46: #{decoder_block.4} parent=39 // loop_footer_branch
                %223 = sbr.rel target = $region42
              $region47: #{decoder_block.4} parent=39 // loop_exit
                _
            $region40: #{decoder_block.4} parent=35 // pred_fallthru
              _
            // Predicated region
            $region48: #{decoder_block.4} parent=35 // pred_check
              _
            $region49: #{decoder_block.4} parent=35 // pred_check_branch
              %248 = sbr.rel target = $region51
            $region50: #{decoder_block.4} parent=35 // pred_region
              _
            $region51: #{decoder_block.4} parent=35 // pred_fallthru
              _
          $region36: #{decoder_block.4} parent=31 // pred_fallthru
            _
          %249 = vnop
        $region32: #{decoder_block.4} parent=27 // pred_fallthru
          _
      $region28: #{decoder_block.4} parent=5 // pred_fallthru
        _
      %p250 = scmp.le.s32.totalorder 1, %s13
      %p251 = scmp.lt.s32.totalorder %s13, 5
      %p252 = pnand %p250, %p251
      %p253 = pneg %p252
      // Predicated region
      $region52: #{decoder_block.4} parent=5 // pred_check
        _
      $region53: #{decoder_block.4} parent=5 // pred_check_branch
        %255 = sbr.rel (%p252) target = $region55
      $region54: #{decoder_block.4} parent=5 // pred_region
        %s256 = ssub.s32 %s13, 1
        %s257 = sand.u32 %s40, 1
        %s258 = sand.u32 %s40, 1
        %s259 = smul.addr %s258, 64
        %s260 = scalar_lea.vmem [#allocation2], %s259
        // Predicated region
        $region56: #{decoder_block.4} parent=54 // pred_check
          %p261 = pneg %p53
        $region57: #{decoder_block.4} parent=54 // pred_check_branch
          %263 = sbr.rel (%p261) target = $region59
        $region58: #{decoder_block.4} parent=54 // pred_region
          _
        $region59: #{decoder_block.4} parent=54 // pred_fallthru
          _
        // Predicated region
        $region60: #{decoder_block.4} parent=54 // pred_check
          %p264 = pneg %p74
        $region61: #{decoder_block.4} parent=54 // pred_check_branch
          %266 = sbr.rel (%p264) target = $region63
        $region62: #{decoder_block.4} parent=54 // pred_region
          %268 = dma.done [#allocation4], 64
        $region63: #{decoder_block.4} parent=54 // pred_fallthru
          _
        %s269 = sand.u32 %s40, 1
        %s270 = sand.u32 %s40, 1
        %s271 = smul.addr %s270, 64
        %s272 = scalar_lea.vmem [#allocation2], %s271
        %p273 = pneg %p53
        %p274 = pneg %p50
        %p275 = pneg %p74
        %p276 = pneg %p71
        %p277 = pneg %p95
        %p278 = pneg %p92
        %p279 = pneg %p116
        %p280 = pneg %p113
        %p281 = pneg %p144
        %p282 = pneg %p141
        %s283 = smul.u32 4, %s23
        %p284 = scmp.lt.s32.totalorder %s22, 1
        %s285 = scalar_select %p284, %s22, 1
        %p286 = scmp.lt.s32.totalorder %s283, 7
        %s287 = scalar_select %p286, %s283, 7
        %s288 = smul.addr %s285, 8
        %s289 = sadd.s32 %s287, %s288
        %s290 = smul.addr %s289, 4
        %s291 = scalar_lea.vmem %s4, %s290
        %p292 = pneg %p170
        %p293 = pneg %p167
        %p294 = scmp.lt.s32.totalorder %s22, 1
        %s295 = scalar_select %p294, %s22, 1
        %s296 = smul.addr %s295, 4
        %s297 = scalar_lea.vmem %s5, %s296
        %s298 = smul.u32 4, %s23
        %s299 = smul.u32 4, %s23
        %p300 = scmp.lt.s32.totalorder %s22, 1
        %s301 = scalar_select %p300, %s22, 1
        %p302 = scmp.lt.s32.totalorder %s299, 7
        %s303 = scalar_select %p302, %s299, 7
        %s304 = smul.addr %s301, 8
        %s305 = sadd.s32 %s303, %s304
        %s306 = smul.addr %s305, 4
        %s307 = scalar_lea.vmem %s4, %s306
        %s308 = smul.u32 4, %s23
        %p309 = scmp.lt.s32.totalorder %s22, 1
        %s310 = scalar_select %p309, %s22, 1
        %s311 = smul.addr %s310, 4
        %s312 = scalar_lea.vmem %s5, %s311
        %v313 = vld [vmem:[%s260] sm:$0xff]
        %v314 = vld [vmem:[%s260 + $0x8] sm:$0xff]
        %v315 = vld [vmem:[%s260 + $0x10] sm:$0xff]
        %v316 = vld [vmem:[%s260 + $0x18] sm:$0xff]
        %v317 = vld [vmem:[%s260 + $0x20] sm:$0xff]
        %v318 = vld [vmem:[%s260 + $0x28] sm:$0xff]
        %v319 = vld [vmem:[%s260 + $0x30] sm:$0xff]
        %v320 = vld [vmem:[%s260 + $0x38] sm:$0xff]
        %v321 = vld [vmem:[#allocation3] sm:$0xf]
        %vm322 = vcmask 130048
        %v324 = vsel %vm322, %v321, 0
        %326 = vmatpush.msra.mxu0 0.0
        %327 = vmatpush.msra.mxu0 0.0
        %328 = vmatpush.msra.mxu0 0.0
        %329 = vmatpush.msra.mxu0 0.0
        %330 = vmatpush.msra.mxu0 0.0
        %331 = vmatpush.msra.mxu0 0.0
        %332 = vmatpush.msra.mxu0 0.0
        %333 = vmatpush.msra.mxu0 0.0
        %334 = vmatpush.msra.mxu0 0.0
        %335 = vmatpush.msra.mxu0 0.0
        %336 = vmatpush.msra.mxu0 0.0
        %337 = vmatpush.msra.mxu0 0.0
        %338 = vmatpush.msra.mxu0 0.0
        %339 = vmatpush.msra.mxu0 0.0
        %340 = vmatpush.msra.mxu0 %v317
        %341 = vmatpush.msra.mxu0 %v313
        %342 = vmatmul.f32.gmra.mxu0 %v324
        %v343 = vpop.f32.mrf.mxu0
        %v344 = vadd.f32 0.0, %v343
        %345 = vdwg.mxu0
        %346 = vmatpush.msra.mxu0 0.0
        %347 = vmatpush.msra.mxu0 0.0
        %348 = vmatpush.msra.mxu0 0.0
        %349 = vmatpush.msra.mxu0 0.0
        %350 = vmatpush.msra.mxu0 0.0
        %351 = vmatpush.msra.mxu0 0.0
        %352 = vmatpush.msra.mxu0 0.0
        %353 = vmatpush.msra.mxu0 0.0
        %354 = vmatpush.msra.mxu0 0.0
        %355 = vmatpush.msra.mxu0 0.0
        %356 = vmatpush.msra.mxu0 0.0
        %357 = vmatpush.msra.mxu0 0.0
        %358 = vmatpush.msra.mxu0 0.0
        %359 = vmatpush.msra.mxu0 0.0
        %360 = vmatpush.msra.mxu0 %v318
        %361 = vmatpush.msra.mxu0 %v314
        %362 = vmatmul.f32.gmra.mxu0 %v324
        %v363 = vpop.f32.mrf.mxu0
        %v364 = vadd.f32 0.0, %v363
        %365 = vdwg.mxu0
        %366 = vmatpush.msra.mxu0 0.0
        %367 = vmatpush.msra.mxu0 0.0
        %368 = vmatpush.msra.mxu0 0.0
        %369 = vmatpush.msra.mxu0 0.0
        %370 = vmatpush.msra.mxu0 0.0
        %371 = vmatpush.msra.mxu0 0.0
        %372 = vmatpush.msra.mxu0 0.0
        %373 = vmatpush.msra.mxu0 0.0
        %374 = vmatpush.msra.mxu0 0.0
        %375 = vmatpush.msra.mxu0 0.0
        %376 = vmatpush.msra.mxu0 0.0
        %377 = vmatpush.msra.mxu0 0.0
        %378 = vmatpush.msra.mxu0 0.0
        %379 = vmatpush.msra.mxu0 0.0
        %380 = vmatpush.msra.mxu0 %v319
        %381 = vmatpush.msra.mxu0 %v315
        %382 = vmatmul.f32.gmra.mxu0 %v324
        %v383 = vpop.f32.mrf.mxu0
        %v384 = vadd.f32 0.0, %v383
        %385 = vdwg.mxu0
        %386 = vmatpush.msra.mxu0 0.0
        %387 = vmatpush.msra.mxu0 0.0
        %388 = vmatpush.msra.mxu0 0.0
        %389 = vmatpush.msra.mxu0 0.0
        %390 = vmatpush.msra.mxu0 0.0
        %391 = vmatpush.msra.mxu0 0.0
        %392 = vmatpush.msra.mxu0 0.0
        %393 = vmatpush.msra.mxu0 0.0
        %394 = vmatpush.msra.mxu0 0.0
        %395 = vmatpush.msra.mxu0 0.0
        %396 = vmatpush.msra.mxu0 0.0
        %397 = vmatpush.msra.mxu0 0.0
        %398 = vmatpush.msra.mxu0 0.0
        %399 = vmatpush.msra.mxu0 0.0
        %400 = vmatpush.msra.mxu0 %v320
        %401 = vmatpush.msra.mxu0 %v316
        %402 = vmatmul.f32.gmra.mxu0 %v324
        %v403 = vpop.f32.mrf.mxu0
        %v404 = vadd.f32 0.0, %v403
        %405 = vdwg.mxu0
        %v410 = vrot.slane %v364, 4
        %v411 = vrot.slane %v404, 4
        %vm412 = vcmask 1043456
        %v413 = vsel %vm412, %v344, %v410
        %v414 = vsel %vm412, %v384, %v411
        %417 = vst [vmem:[%s307] sm:$0xff] %v413
        %418 = vst [vmem:[%s307 + $0x8] sm:$0xff] %v414
        %v419 = vsel %vm412, %v344, 0.0
        %v420 = vsel %vm412, %v364, 0.0
        %v421 = vadd.f32 %v419, %v420
        %v422 = vsel %vm412, %v384, 0.0
        %v423 = vadd.f32 %v421, %v422
        %v424 = vsel %vm412, %v404, 0.0
        %v425 = vadd.f32 %v423, %v424
        %426 = vadd.xlane.f32.xlu0 %v425
        %v427 = vpop.xlane.xlu0 %426
        %v428 = vmul.f32 %v344, %v344
        %v429 = vmul.f32 %v364, %v364
        %v430 = vmul.f32 %v384, %v384
        %v431 = vmul.f32 %v404, %v404
        %v432 = vsel %vm412, %v428, 0.0
        %v433 = vsel %vm412, %v429, 0.0
        %v434 = vadd.f32 %v432, %v433
        %v435 = vsel %vm412, %v430, 0.0
        %v436 = vadd.f32 %v434, %v435
        %v437 = vsel %vm412, %v431, 0.0
        %v438 = vadd.f32 %v436, %v437
        %439 = vadd.xlane.f32.xlu0 %v438
        %v440 = vpop.xlane.xlu0 %439
        %vm441 = vcmask 7168
        %v442 = vsel %vm441, %v427, %v440
        %p443 = scmp.eq.s32.totalorder %s23, 0
        // Predicated region
        $region64: #{decoder_block.4} parent=54 // pred_check
          %p444 = pneg %p443
        $region65: #{decoder_block.4} parent=54 // pred_check_branch
          %446 = sbr.rel (%p444) target = $region67
        $region66: #{decoder_block.4} parent=54 // pred_region
          %vm447 = vcmask 11264
          %448 = vst.msk [vmem:[%s312] sm:$0xf] %vm447, 0.0
        $region67: #{decoder_block.4} parent=54 // pred_fallthru
          _
        %v449 = vld [vmem:[%s312] sm:$0xf]
        %v450 = vadd.f32 %v449, %v442
        %vm451 = vcmask 11264
        %452 = vst.msk [vmem:[%s312] sm:$0xf] %vm451, %v450
        %s453 = smul.u32 4, %s23
        %p454 = scmp.lt.s32.totalorder %s22, 1
        %s455 = scalar_select %p454, %s22, 1
        %p456 = scmp.lt.s32.totalorder %s453, 7
        %s457 = scalar_select %p456, %s453, 7
        %s458 = smul.addr %s455, 8
        %s459 = sadd.s32 %s457, %s458
        %s460 = smul.addr %s459, 4
        %s461 = scalar_lea.vmem %s4, %s460
        %p462 = scmp.lt.s32.totalorder %s22, 1
        %s463 = scalar_select %p462, %s22, 1
        %s464 = smul.addr %s463, 4
        %s465 = scalar_lea.vmem %s5, %s464
        // Predicated region
        $region68: #{decoder_block.4} parent=54 // pred_check
          %p466 = pneg %p141
        $region69: #{decoder_block.4} parent=54 // pred_check_branch
          %468 = sbr.rel (%p466) target = $region71
        $region70: #{decoder_block.4} parent=54 // pred_region
          %s469 = smul.u32 4, %s23
        $region71: #{decoder_block.4} parent=54 // pred_fallthru
          _
        // Predicated region
        $region72: #{decoder_block.4} parent=54 // pred_check
          %p470 = pneg %p167
        $region73: #{decoder_block.4} parent=54 // pred_check_branch
          %472 = sbr.rel (%p470) target = $region75
        $region74: #{decoder_block.4} parent=54 // pred_region
          _
        $region75: #{decoder_block.4} parent=54 // pred_fallthru
          _
      $region55: #{decoder_block.4} parent=5 // pred_fallthru
        _
      %p473 = scmp.le.s32.totalorder 2, %s13
      // Predicated region
      $region76: #{decoder_block.4} parent=5 // pred_check
        %p474 = pneg %p473
      $region77: #{decoder_block.4} parent=5 // pred_check_branch
        %476 = sbr.rel (%p474) target = $region79
      $region78: #{decoder_block.4} parent=5 // pred_region
        %s477 = ssub.s32 %s13, 2
        // Predicated region
        $region80: #{decoder_block.4} parent=78 // pred_check
          %p478 = pneg %p147
        $region81: #{decoder_block.4} parent=78 // pred_check_branch
          %480 = sbr.rel (%p478) target = $region83
        $region82: #{decoder_block.4} parent=78 // pred_region
          %s481 = smul.u32 4, %s25
          %p482 = scmp.lt.s32.totalorder %s24, 1
          %s483 = scalar_select %p482, %s24, 1
          %p484 = scmp.lt.s32.totalorder %s481, 7
          %s485 = scalar_select %p484, %s481, 7
          %s486 = smul.addr %s483, 8
          %s487 = sadd.s32 %s485, %s486
          %s488 = smul.addr %s487, 4
          %s489 = scalar_lea.vmem %s4, %s488
        $region83: #{decoder_block.4} parent=78 // pred_fallthru
          _
        // Predicated region
        $region84: #{decoder_block.4} parent=78 // pred_check
          %p490 = pneg %p173
        $region85: #{decoder_block.4} parent=78 // pred_check_branch
          %492 = sbr.rel (%p490) target = $region87
        $region86: #{decoder_block.4} parent=78 // pred_region
          %p493 = scmp.lt.s32.totalorder %s24, 1
          %s494 = scalar_select %p493, %s24, 1
          %s495 = smul.addr %s494, 4
          %s496 = scalar_lea.vmem %s5, %s495
        $region87: #{decoder_block.4} parent=78 // pred_fallthru
          _
      $region79: #{decoder_block.4} parent=5 // pred_fallthru
        _
    $region6: #{decoder_block.4} parent=1 // loop_footer
      %s17 = sadd.s32 1, %s13
    $region7: #{decoder_block.4} parent=1 // loop_footer_branch
      %12 = sbr.rel target = $region3
    $region8: #{decoder_block.4} parent=1 // loop_exit
      _
    %497 = vsyncpa [#allocation4], 1
    %s498 = scalar_lea.sflag [#allocation4], 1
    %499 = vsyncpa %s498, 1

// kernel: decoder_block.5
$region0: #{decoder_block.5}
  #allocation0 [shape = 'u32[]', space=smem, size = 0x4, offset = 0x4, fixed_abs, tag = 'smem constant byte address 0x4 - core index']
  #allocation1 [shape = 'u32[72,128]{1,0:T(1,128)}', space=vmem, size = 0x9000, scoped, tag = 'internal scratch']
  #allocation2 [shape = 'f32[16,1024]{1,0:T(8,128)}', space=vmem, size = 0x10000, scoped, tag = 'scratch operand']
  %s0 = inlined_call_operand.vmem [shape: f32[2,4,1024], index: 0, kind: input, shape index: {}]
  %s1 = inlined_call_operand.vmem [shape: f32[16,16], index: 1, kind: input, shape index: {}]
  %s2 = inlined_call_operand.vmem [shape: f32[4,1], index: 2, kind: input, shape index: {}]
  %s3 = inlined_call_operand.vmem [shape: f32[4,1], index: 3, kind: input, shape index: {}]
  %s4 = inlined_call_operand.vmem [shape: f32[2,16,1024], index: 4, kind: output, shape index: {0}]
  %s5 = inlined_call_operand.vmem [shape: f32[2,16,2], index: 5, kind: output, shape index: {1}]
  %6 = xla_tuple %s4, %s5
  %s7 = sld [smem:[#allocation0]]
  $region57: #{decoder_block.5} parent=0
    _
  %s9 = ssub.s32 1, %s7
  %s10 = scalar_select 0, %s9, %s7
  loop: start=0, step=1, limit=4
  $region2: #{decoder_block.5} parent=0 // loop_pre_header
    _
  $region3: #{decoder_block.5} parent=0 // loop_header
    %s12 = sphi 0, %s16
    %p13 = scmp.ge.s32.totalorder %s12, 4
    %s22 = sphi 0, %s24
    %s25 = sphi 0, %s22
    %s26 = sphi 0, %s25
    %s42 = sphi 0, %s26
    %s46 = sphi 0, %s46
    %s48 = sphi 0, %s46
    %s49 = sphi 0, %s48
    %s63 = sphi 0, %s49
    %s67 = sphi 0, %s67
    %s69 = sphi 0, %s67
    %s70 = sphi 0, %s69
    %s84 = sphi 0, %s70
    %s88 = sphi 0, %s88
    %s90 = sphi 0, %s88
    %s91 = sphi 0, %s90
    %s105 = sphi 0, %s91
    %s111 = sphi 0, %s113
    %s114 = sphi 0, %s111
    %s115 = sphi 0, %s114
    %s131 = sphi 0, %s115
    %s137 = sphi 0, %s139
    %s140 = sphi 0, %s137
    %s141 = sphi 0, %s140
    %s157 = sphi 0, %s141
  $region4: #{decoder_block.5} parent=0 // loop_header_branch
    %15 = sbr.rel (%p13) target = $region8
  $region5: #{decoder_block.5} parent=0 // loop_body
    %s17 = ssub.s32 %s12, 1
    %s18 = ssub.s32 %s12, 2
    %s19 = sadd.s32 %s12, 1
    %s20 = ssub.s32 %s12, %s19
    %p21 = scmp.eq.s32.totalorder %s20, 0
    %s23 = sadd.s32 %s22, 1
    %s24 = scalar_select %p21, %s22, %s23
    %p27 = pneg %p21
    %p28 = scmp.eq.s32.totalorder %s12, 1
    %p29 = por %p27, %p28
    %p30 = scmp.ne.s32.totalorder %s22, %s25
    %p31 = scmp.eq.s32.totalorder %s12, 0
    %p32 = por %p30, %p31
    %p33 = scmp.ne.s32.totalorder %s22, %s25
    %p34 = scmp.eq.s32.totalorder %s17, 1
    %p35 = por %p33, %p34
    %p36 = scmp.ne.s32.totalorder %s25, %s26
    %p37 = scmp.eq.s32.totalorder %s17, 0
    %p38 = por %p36, %p37
    %p39 = scmp.ne.s32.totalorder %s25, %s26
    %p40 = scmp.eq.s32.totalorder %s18, 1
    %p41 = por %p39, %p40
    %p43 = scmp.ne.s32.totalorder %s26, %s42
    %p44 = scmp.eq.s32.totalorder %s18, 0
    %p45 = por %p43, %p44
    %s47 = sadd.s32 %s46, 1
    %p50 = scmp.eq.s32.totalorder %s12, 1
    %p51 = scmp.ne.s32.totalorder %s46, %s48
    %p52 = scmp.eq.s32.totalorder %s12, 0
    %p53 = por %p51, %p52
    %p54 = scmp.ne.s32.totalorder %s46, %s48
    %p55 = scmp.eq.s32.totalorder %s17, 1
    %p56 = por %p54, %p55
    %p57 = scmp.ne.s32.totalorder %s48, %s49
    %p58 = scmp.eq.s32.totalorder %s17, 0
    %p59 = por %p57, %p58
    %p60 = scmp.ne.s32.totalorder %s48, %s49
    %p61 = scmp.eq.s32.totalorder %s18, 1
    %p62 = por %p60, %p61
    %p64 = scmp.ne.s32.totalorder %s49, %s63
    %p65 = scmp.eq.s32.totalorder %s18, 0
    %p66 = por %p64, %p65
    %s68 = sadd.s32 %s67, 1
    %p71 = scmp.eq.s32.totalorder %s12, 1
    %p72 = scmp.ne.s32.totalorder %s67, %s69
    %p73 = scmp.eq.s32.totalorder %s12, 0
    %p74 = por %p72, %p73
    %p75 = scmp.ne.s32.totalorder %s67, %s69
    %p76 = scmp.eq.s32.totalorder %s17, 1
    %p77 = por %p75, %p76
    %p78 = scmp.ne.s32.totalorder %s69, %s70
    %p79 = scmp.eq.s32.totalorder %s17, 0
    %p80 = por %p78, %p79
    %p81 = scmp.ne.s32.totalorder %s69, %s70
    %p82 = scmp.eq.s32.totalorder %s18, 1
    %p83 = por %p81, %p82
    %p85 = scmp.ne.s32.totalorder %s70, %s84
    %p86 = scmp.eq.s32.totalorder %s18, 0
    %p87 = por %p85, %p86
    %s89 = sadd.s32 %s88, 1
    %p92 = scmp.eq.s32.totalorder %s12, 1
    %p93 = scmp.ne.s32.totalorder %s88, %s90
    %p94 = scmp.eq.s32.totalorder %s12, 0
    %p95 = por %p93, %p94
    %p96 = scmp.ne.s32.totalorder %s88, %s90
    %p97 = scmp.eq.s32.totalorder %s17, 1
    %p98 = por %p96, %p97
    %p99 = scmp.ne.s32.totalorder %s90, %s91
    %p100 = scmp.eq.s32.totalorder %s17, 0
    %p101 = por %p99, %p100
    %p102 = scmp.ne.s32.totalorder %s90, %s91
    %p103 = scmp.eq.s32.totalorder %s18, 1
    %p104 = por %p102, %p103
    %p106 = scmp.ne.s32.totalorder %s91, %s105
    %p107 = scmp.eq.s32.totalorder %s18, 0
    %p108 = por %p106, %p107
    %s109 = ssub.s32 %s12, %s19
    %p110 = scmp.eq.s32.totalorder %s109, 0
    %s112 = sadd.s32 %s111, 1
    %s113 = scalar_select %p110, %s111, %s112
    %p116 = pneg %p110
    %p117 = scmp.eq.s32.totalorder %s12, 1
    %p118 = por %p116, %p117
    %p119 = scmp.ne.s32.totalorder %s111, %s114
    %p120 = scmp.eq.s32.totalorder %s12, 0
    %p121 = por %p119, %p120
    %p122 = scmp.ne.s32.totalorder %s111, %s114
    %p123 = scmp.eq.s32.totalorder %s17, 1
    %p124 = por %p122, %p123
    %p125 = scmp.ne.s32.totalorder %s114, %s115
    %p126 = scmp.eq.s32.totalorder %s17, 0
    %p127 = por %p125, %p126
    %p128 = scmp.ne.s32.totalorder %s114, %s115
    %p129 = scmp.eq.s32.totalorder %s18, 1
    %p130 = por %p128, %p129
    %p132 = scmp.ne.s32.totalorder %s115, %s131
    %p133 = scmp.eq.s32.totalorder %s18, 0
    %p134 = por %p132, %p133
    %s135 = ssub.s32 %s12, %s19
    %p136 = scmp.eq.s32.totalorder %s135, 0
    %s138 = sadd.s32 %s137, 1
    %s139 = scalar_select %p136, %s137, %s138
    %p142 = pneg %p136
    %p143 = scmp.eq.s32.totalorder %s12, 1
    %p144 = por %p142, %p143
    %p145 = scmp.ne.s32.totalorder %s137, %s140
    %p146 = scmp.eq.s32.totalorder %s12, 0
    %p147 = por %p145, %p146
    %p148 = scmp.ne.s32.totalorder %s137, %s140
    %p149 = scmp.eq.s32.totalorder %s17, 1
    %p150 = por %p148, %p149
    %p151 = scmp.ne.s32.totalorder %s140, %s141
    %p152 = scmp.eq.s32.totalorder %s17, 0
    %p153 = por %p151, %p152
    %p154 = scmp.ne.s32.totalorder %s140, %s141
    %p155 = scmp.eq.s32.totalorder %s18, 1
    %p156 = por %p154, %p155
    %p158 = scmp.ne.s32.totalorder %s141, %s157
    %p159 = scmp.eq.s32.totalorder %s18, 0
    %p160 = por %p158, %p159
    %p161 = scmp.le.s32.totalorder 1, %s12
    %p162 = scmp.lt.s32.totalorder %s12, 3
    %p163 = pnand %p161, %p162
    %p164 = pneg %p163
    // Predicated region
    $region9: #{decoder_block.5} parent=5 // pred_check
      _
    $region10: #{decoder_block.5} parent=5 // pred_check_branch
      %166 = sbr.rel (%p163) target = $region12
    $region11: #{decoder_block.5} parent=5 // pred_region
      %s167 = ssub.s32 %s12, 1
      // Predicated region
      $region13: #{decoder_block.5} parent=11 // pred_check
        %p168 = pneg %p59
      $region14: #{decoder_block.5} parent=11 // pred_check_branch
        %170 = sbr.rel (%p168) target = $region16
      $region15: #{decoder_block.5} parent=11 // pred_region
        _
      $region16: #{decoder_block.5} parent=11 // pred_fallthru
        _
      // Predicated region
      $region17: #{decoder_block.5} parent=11 // pred_check
        %p171 = pneg %p80
      $region18: #{decoder_block.5} parent=11 // pred_check_branch
        %173 = sbr.rel (%p171) target = $region20
      $region19: #{decoder_block.5} parent=11 // pred_region
        _
      $region20: #{decoder_block.5} parent=11 // pred_fallthru
        _
      // Predicated region
      $region21: #{decoder_block.5} parent=11 // pred_check
        %p174 = pneg %p101
      $region22: #{decoder_block.5} parent=11 // pred_check_branch
        %176 = sbr.rel (%p174) target = $region24
      $region23: #{decoder_block.5} parent=11 // pred_region
        _
      $region24: #{decoder_block.5} parent=11 // pred_fallthru
        _
    $region12: #{decoder_block.5} parent=5 // pred_fallthru
      _
    %p177 = scmp.lt.s32.totalorder %s12, 2
    // Predicated region
    $region25: #{decoder_block.5} parent=5 // pred_check
      %p178 = pneg %p177
    $region26: #{decoder_block.5} parent=5 // pred_check_branch
      %180 = sbr.rel (%p178) target = $region28
    $region27: #{decoder_block.5} parent=5 // pred_region
      // Predicated region
      $region29: #{decoder_block.5} parent=27 // pred_check
        %p181 = pneg %p32
      $region30: #{decoder_block.5} parent=27 // pred_check_branch
        %183 = sbr.rel (%p181) target = $region32
      $region31: #{decoder_block.5} parent=27 // pred_region
        %p184 = scmp.lt.s32.totalorder %s12, 1
        %s185 = scalar_select %p184, %s12, 1
        %s186 = smul.addr %s185, 8
        %s187 = smul.addr %s186, 4
        %s188 = scalar_lea.vmem %s0, %s187
      $region32: #{decoder_block.5} parent=27 // pred_fallthru
        _
    $region28: #{decoder_block.5} parent=5 // pred_fallthru
      _
    %p189 = scmp.le.s32.totalorder 1, %s12
    %p190 = scmp.lt.s32.totalorder %s12, 3
    %p191 = pnand %p189, %p190
    %p192 = pneg %p191
    // Predicated region
    $region33: #{decoder_block.5} parent=5 // pred_check
      _
    $region34: #{decoder_block.5} parent=5 // pred_check_branch
      %194 = sbr.rel (%p191) target = $region36
    $region35: #{decoder_block.5} parent=5 // pred_region
      %s195 = ssub.s32 %s12, 1
      %p196 = scmp.lt.s32.totalorder %s17, 1
      %s197 = scalar_select %p196, %s17, 1
      %s198 = smul.addr %s197, 8
      %s199 = smul.addr %s198, 4
      %s200 = scalar_lea.vmem %s0, %s199
      %p201 = pneg %p38
      %p202 = pneg %p35
      %p203 = pneg %p59
      %p204 = pneg %p56
      %p205 = pneg %p80
      %p206 = pneg %p77
      %p207 = pneg %p101
      %p208 = pneg %p98
      %p209 = pneg %p127
      %p210 = pneg %p124
      %p211 = scmp.lt.s32.totalorder %s17, 1
      %s212 = scalar_select %p211, %s17, 1
      %s213 = smul.addr %s212, 16
      %s214 = smul.addr %s213, 8
      %s215 = scalar_lea.vmem %s4, %s214
      %p216 = pneg %p153
      %p217 = pneg %p150
      %p218 = scmp.lt.s32.totalorder %s17, 1
      %s219 = scalar_select %p218, %s17, 1
      %s220 = smul.addr %s219, 2
      %s221 = smul.addr %s220, 8
      %s222 = scalar_lea.vmem %s5, %s221
      %p223 = scmp.lt.s32.totalorder %s17, 1
      %s224 = scalar_select %p223, %s17, 1
      %s225 = smul.addr %s224, 8
      %s226 = smul.addr %s225, 4
      %s227 = scalar_lea.vmem %s0, %s226
      %p228 = scmp.lt.s32.totalorder %s17, 1
      %s229 = scalar_select %p228, %s17, 1
      %s230 = smul.addr %s229, 16
      %s231 = smul.addr %s230, 8
      %s232 = scalar_lea.vmem %s4, %s231
      %p233 = scmp.lt.s32.totalorder %s17, 1
      %s234 = scalar_select %p233, %s17, 1
      %s235 = smul.addr %s234, 2
      %s236 = smul.addr %s235, 8
      %s237 = scalar_lea.vmem %s5, %s236
      %v238 = vld [vmem:[%s227] sm:$0xff]
      %v239 = vld [vmem:[%s227 + $0x8] sm:$0xff]
      %v240 = vld [vmem:[%s227 + $0x10] sm:$0xff]
      %v241 = vld [vmem:[%s227 + $0x18] sm:$0xff]
      %v242 = vld [vmem:[%s2] sm:$0xf]
      %244 = vset.pattern.permute.xlu0 0
      %245 = vperm.xlu0 %244, %v242
      %v246 = vpop.permute.xlu0 %245
      %v248 = vunpack.c.l.s4 839922192
      %v249 = vunpack.c.0.s8 %v248
      %v250 = vperm.slane %v246, %v249
      %v252 = vmul.f32 %v238, %v250
      %v253 = vmul.f32 %v239, %v250
      %v254 = vmul.f32 %v240, %v250
      %v255 = vmul.f32 %v241, %v250
      %v256 = vld [vmem:[%s3] sm:$0xf]
      %258 = vset.pattern.permute.xlu0 0
      %259 = vperm.xlu0 %258, %v256
      %v260 = vpop.permute.xlu0 %259
      %v262 = vunpack.c.l.s4 839922192
      %v263 = vunpack.c.0.s8 %v262
      %v264 = vperm.slane %v260, %v263
      %v266 = vadd.f32 %v252, %v264
      %v267 = vadd.f32 %v253, %v264
      %v268 = vadd.f32 %v254, %v264
      %v269 = vadd.f32 %v255, %v264
      %v270 = vmax.f32 %v266, 0.0
      %v271 = vmax.f32 %v267, 0.0
      %v272 = vmax.f32 %v268, 0.0
      %v273 = vmax.f32 %v269, 0.0
      %v274 = vlaneseq
      %v275 = vand.u32 %v274, 127
      %v276 = vadd.s32 %v275, 128
      %v277 = vadd.s32 %v275, 256
      %v278 = vadd.s32 %v275, 384
      %v279 = vadd.s32 %v275, 512
      %v280 = vadd.s32 %v275, 640
      %v281 = vadd.s32 %v275, 768
      %v282 = vadd.s32 %v275, 896
      %vm283 = vcmp.lt.s32.totalorder %v275, 0
      %v284 = vsub.s32 0, %v275
      %v285 = vsel %vm283, %v284, %v275
      %v286 = vshrl.u32 %v285, 5
      %v287 = vand.u32 %v285, 31
      %v288 = vsub.s32 0, %v287
      %v289 = vsel %vm283, %v288, %v287
      %vm290 = vcmp.lt.s32.totalorder %v276, 0
      %v291 = vsub.s32 0, %v276
      %v292 = vsel %vm290, %v291, %v276
      %v293 = vshrl.u32 %v292, 5
      %v294 = vand.u32 %v292, 31
      %v295 = vsub.s32 0, %v294
      %v296 = vsel %vm290, %v295, %v294
      %vm297 = vcmp.lt.s32.totalorder %v277, 0
      %v298 = vsub.s32 0, %v277
      %v299 = vsel %vm297, %v298, %v277
      %v300 = vshrl.u32 %v299, 5
      %v301 = vand.u32 %v299, 31
      %v302 = vsub.s32 0, %v301
      %v303 = vsel %vm297, %v302, %v301
      %vm304 = vcmp.lt.s32.totalorder %v278, 0
      %v305 = vsub.s32 0, %v278
      %v306 = vsel %vm304, %v305, %v278
      %v307 = vshrl.u32 %v306, 5
      %v308 = vand.u32 %v306, 31
      %v309 = vsub.s32 0, %v308
      %v310 = vsel %vm304, %v309, %v308
      %vm311 = vcmp.lt.s32.totalorder %v279, 0
      %v312 = vsub.s32 0, %v279
      %v313 = vsel %vm311, %v312, %v279
      %v314 = vshrl.u32 %v313, 5
      %v315 = vand.u32 %v313, 31
      %v316 = vsub.s32 0, %v315
      %v317 = vsel %vm311, %v316, %v315
      %vm318 = vcmp.lt.s32.totalorder %v280, 0
      %v319 = vsub.s32 0, %v280
      %v320 = vsel %vm318, %v319, %v280
      %v321 = vshrl.u32 %v320, 5
      %v322 = vand.u32 %v320, 31
      %v323 = vsub.s32 0, %v322
      %v324 = vsel %vm318, %v323, %v322
      %vm325 = vcmp.lt.s32.totalorder %v281, 0
      %v326 = vsub.s32 0, %v281
      %v327 = vsel %vm325, %v326, %v281
      %v328 = vshrl.u32 %v327, 5
      %v329 = vand.u32 %v327, 31
      %v330 = vsub.s32 0, %v329
      %v331 = vsel %vm325, %v330, %v329
      %vm332 = vcmp.lt.s32.totalorder %v282, 0
      %v333 = vsub.s32 0, %v282
      %v334 = vsel %vm332, %v333, %v282
      %v335 = vshrl.u32 %v334, 5
      %v336 = vand.u32 %v334, 31
      %v337 = vsub.s32 0, %v336
      %v338 = vsel %vm332, %v337, %v336
      %vm339 = vcmp.ne.s32.totalorder %v289, 0
      %vm340 = vcmp.ne.s32.totalorder %v296, 0
      %vm341 = vcmp.ne.s32.totalorder %v303, 0
      %vm342 = vcmp.ne.s32.totalorder %v310, 0
      %vm343 = vcmp.ne.s32.totalorder %v317, 0
      %vm344 = vcmp.ne.s32.totalorder %v324, 0
      %vm345 = vcmp.ne.s32.totalorder %v331, 0
      %vm346 = vcmp.ne.s32.totalorder %v338, 0
      %vm347 = vcmp.lt.s32.totalorder %v289, 0
      %vm348 = vcmp.lt.s32.totalorder %v296, 0
      %vm349 = vcmp.lt.s32.totalorder %v303, 0
      %vm350 = vcmp.lt.s32.totalorder %v310, 0
      %vm351 = vcmp.lt.s32.totalorder %v317, 0
      %vm352 = vcmp.lt.s32.totalorder %v324, 0
      %vm353 = vcmp.lt.s32.totalorder %v331, 0
      %vm354 = vcmp.lt.s32.totalorder %v338, 0
      %vm355 = vmand %vm347, %vm339
      %vm356 = vmand %vm348, %vm340
      %vm357 = vmand %vm349, %vm341
      %vm358 = vmand %vm350, %vm342
      %vm359 = vmand %vm351, %vm343
      %vm360 = vmand %vm352, %vm344
      %vm361 = vmand %vm353, %vm345
      %vm362 = vmand %vm354, %vm346
      %v363 = vadd.s32 %v289, 32
      %v364 = vadd.s32 %v296, 32
      %v365 = vadd.s32 %v303, 32
      %v366 = vadd.s32 %v310, 32
      %v367 = vadd.s32 %v317, 32
      %v368 = vadd.s32 %v324, 32
      %v369 = vadd.s32 %v331, 32
      %v370 = vadd.s32 %v338, 32
      %v371 = vsel %vm355, %v363, %v289
      %v372 = vsel %vm356, %v364, %v296
      %v373 = vsel %vm357, %v365, %v303
      %v374 = vsel %vm358, %v366, %v310
      %v375 = vsel %vm359, %v367, %v317
      %v376 = vsel %vm360, %v368, %v324
      %v377 = vsel %vm361, %v369, %v331
      %v378 = vsel %vm362, %v370, %v338
      %vm379 = vcmp.ne.s32.totalorder %v371, 31
      %vm380 = vcmp.ne.s32.totalorder %v372, 31
      %vm381 = vcmp.ne.s32.totalorder %v373, 31
      %vm382 = vcmp.ne.s32.totalorder %v374, 31
      %vm383 = vcmp.ne.s32.totalorder %v375, 31
      %vm384 = vcmp.ne.s32.totalorder %v376, 31
      %vm385 = vcmp.ne.s32.totalorder %v377, 31
      %vm386 = vcmp.ne.s32.totalorder %v378, 31
      %391 = vst [vmem:[#allocation1] ss:$2 sm:$0xff] %v270
      %s392 = scalar_lea.vmem [#allocation1], 16
      %393 = vst [vmem:[%s392] ss:$2 sm:$0xff] %v271
      %s394 = scalar_lea.vmem [#allocation1], 32
      %395 = vst [vmem:[%s394] ss:$2 sm:$0xff] %v272
      %s396 = scalar_lea.vmem [#allocation1], 48
      %397 = vst [vmem:[%s396] ss:$2 sm:$0xff] %v273
      %v398 = vld.sshfl [vmem:[#allocation1] sm:$0xff pattern:$0x75316420]
      %v399 = vld.sshfl [vmem:[#allocation1 + $0x8] sm:$0xff pattern:$0x75316420]
      %v400 = vld.sshfl [vmem:[#allocation1 + $0x10] sm:$0xff pattern:$0x75316420]
      %v401 = vld.sshfl [vmem:[#allocation1 + $0x18] sm:$0xff pattern:$0x75316420]
      %v402 = vld.sshfl [vmem:[#allocation1 + $0x20] sm:$0xff pattern:$0x75316420]
      %v403 = vld.sshfl [vmem:[#allocation1 + $0x28] sm:$0xff pattern:$0x75316420]
      %v404 = vld.sshfl [vmem:[#allocation1 + $0x30] sm:$0xff pattern:$0x75316420]
      %v405 = vld.sshfl [vmem:[#allocation1 + $0x38] sm:$0xff pattern:$0x75316420]
      %414 = vst [vmem:[#allocation2] sm:$0xf] %v398
      %415 = vst [vmem:[#allocation2 + $0x8] sm:$0xf] %v399
      %416 = vst [vmem:[#allocation2 + $0x10] sm:$0xf] %v400
      %417 = vst [vmem:[#allocation2 + $0x18] sm:$0xf] %v401
      %418 = vst [vmem:[#allocation2 + $0x20] sm:$0xf] %v402
      %419 = vst [vmem:[#allocation2 + $0x28] sm:$0xf] %v403
      %420 = vst [vmem:[#allocation2 + $0x30] sm:$0xf] %v404
      %421 = vst [vmem:[#allocation2 + $0x38] sm:$0xf] %v405
      %422 = vst [vmem:[#allocation1] ss:$2 sm:$0xff] %v270
      %s423 = scalar_lea.vmem [#allocation1], 16
      %424 = vst [vmem:[%s423] ss:$2 sm:$0xff] %v271
      %s425 = scalar_lea.vmem [#allocation1], 32
      %426 = vst [vmem:[%s425] ss:$2 sm:$0xff] %v272
      %s427 = scalar_lea.vmem [#allocation1], 48
      %428 = vst [vmem:[%s427] ss:$2 sm:$0xff] %v273
      %v429 = vld.sshfl [vmem:[#allocation1] sm:$0xff pattern:$0x75316420]
      %v430 = vld.sshfl [vmem:[#allocation1 + $0x8] sm:$0xff pattern:$0x75316420]
      %v431 = vld.sshfl [vmem:[#allocation1 + $0x10] sm:$0xff pattern:$0x75316420]
      %v432 = vld.sshfl [vmem:[#allocation1 + $0x18] sm:$0xff pattern:$0x75316420]
      %v433 = vld.sshfl [vmem:[#allocation1 + $0x20] sm:$0xff pattern:$0x75316420]
      %v434 = vld.sshfl [vmem:[#allocation1 + $0x28] sm:$0xff pattern:$0x75316420]
      %v435 = vld.sshfl [vmem:[#allocation1 + $0x30] sm:$0xff pattern:$0x75316420]
      %v436 = vld.sshfl [vmem:[#allocation1 + $0x38] sm:$0xff pattern:$0x75316420]
      %437 = vrot.lane.b32.xlu0 %v429, 127
      %v438 = vpop.permute.xlu0 %437
      %439 = vrot.lane.b32.xlu0 %v430, 127
      %v440 = vpop.permute.xlu0 %439
      %441 = vrot.lane.b32.xlu0 %v431, 127
      %v442 = vpop.permute.xlu0 %441
      %443 = vrot.lane.b32.xlu0 %v432, 127
      %v444 = vpop.permute.xlu0 %443
      %445 = vrot.lane.b32.xlu0 %v433, 127
      %v446 = vpop.permute.xlu0 %445
      %447 = vrot.lane.b32.xlu0 %v434, 127
      %v448 = vpop.permute.xlu0 %447
      %449 = vrot.lane.b32.xlu0 %v435, 127
      %v450 = vpop.permute.xlu0 %449
      %451 = vrot.lane.b32.xlu0 %v436, 127
      %v452 = vpop.permute.xlu0 %451
      %vm453 = vcmask 1039360
      %v454 = vsel %vm453, %v438, %v440
      %v455 = vsel %vm453, %v440, %v442
      %v456 = vsel %vm453, %v442, %v444
      %v457 = vsel %vm453, %v444, %v446
      %v458 = vsel %vm453, %v446, %v448
      %v459 = vsel %vm453, %v448, %v450
      %v460 = vsel %vm453, %v450, %v452
      %v469 = vsel %vm453, %v452, 0.0
      %v470 = vsel %vm379, 1, 0
      %v471 = vsel %vm380, 1, 0
      %v472 = vsel %vm381, 1, 0
      %v473 = vsel %vm382, 1, 0
      %v474 = vsel %vm383, 1, 0
      %v475 = vsel %vm384, 1, 0
      %v476 = vsel %vm385, 1, 0
      %v477 = vsel %vm386, 1, 0
      %vm478 = vcmp.eq.s32.totalorder %v470, 1
      %vm479 = vcmp.eq.s32.totalorder %v471, 1
      %vm480 = vcmp.eq.s32.totalorder %v472, 1
      %vm481 = vcmp.eq.s32.totalorder %v473, 1
      %vm482 = vcmp.eq.s32.totalorder %v474, 1
      %vm483 = vcmp.eq.s32.totalorder %v475, 1
      %vm484 = vcmp.eq.s32.totalorder %v476, 1
      %vm485 = vcmp.eq.s32.totalorder %v477, 1
      %v486 = vsel %vm478, %v454, 0.0
      %v487 = vsel %vm479, %v455, 0.0
      %v488 = vsel %vm480, %v456, 0.0
      %v489 = vsel %vm481, %v457, 0.0
      %v490 = vsel %vm482, %v458, 0.0
      %v491 = vsel %vm483, %v459, 0.0
      %v492 = vsel %vm484, %v460, 0.0
      %v493 = vsel %vm485, %v469, 0.0
      %v502 = vrot.slane %v486, 4
      %v503 = vrot.slane %v487, 4
      %v504 = vrot.slane %v488, 4
      %v505 = vrot.slane %v489, 4
      %v506 = vrot.slane %v490, 4
      %v507 = vrot.slane %v491, 4
      %v508 = vrot.slane %v492, 4
      %v509 = vrot.slane %v493, 4
      %518 = vst [vmem:[#allocation2] sm:$0xf0] %v502
      %519 = vst [vmem:[#allocation2 + $0x8] sm:$0xf0] %v503
      %520 = vst [vmem:[#allocation2 + $0x10] sm:$0xf0] %v504
      %521 = vst [vmem:[#allocation2 + $0x18] sm:$0xf0] %v505
      %522 = vst [vmem:[#allocation2 + $0x20] sm:$0xf0] %v506
      %523 = vst [vmem:[#allocation2 + $0x28] sm:$0xf0] %v507
      %524 = vst [vmem:[#allocation2 + $0x30] sm:$0xf0] %v508
      %525 = vst [vmem:[#allocation2 + $0x38] sm:$0xf0] %v509
      %526 = vst [vmem:[#allocation1] ss:$2 sm:$0xff] %v270
      %s527 = scalar_lea.vmem [#allocation1], 16
      %528 = vst [vmem:[%s527] ss:$2 sm:$0xff] %v271
      %s529 = scalar_lea.vmem [#allocation1], 32
      %530 = vst [vmem:[%s529] ss:$2 sm:$0xff] %v272
      %s531 = scalar_lea.vmem [#allocation1], 48
      %532 = vst [vmem:[%s531] ss:$2 sm:$0xff] %v273
      %v533 = vld.sshfl [vmem:[#allocation1] sm:$0xff pattern:$0x75316420]
      %v534 = vld.sshfl [vmem:[#allocation1 + $0x8] sm:$0xff pattern:$0x75316420]
      %v535 = vld.sshfl [vmem:[#allocation1 + $0x10] sm:$0xff pattern:$0x75316420]
      %v536 = vld.sshfl [vmem:[#allocation1 + $0x18] sm:$0xff pattern:$0x75316420]
      %v537 = vld.sshfl [vmem:[#allocation1 + $0x20] sm:$0xff pattern:$0x75316420]
      %v538 = vld.sshfl [vmem:[#allocation1 + $0x28] sm:$0xff pattern:$0x75316420]
      %v539 = vld.sshfl [vmem:[#allocation1 + $0x30] sm:$0xff pattern:$0x75316420]
      %v540 = vld.sshfl [vmem:[#allocation1 + $0x38] sm:$0xff pattern:$0x75316420]
      %541 = vrot.lane.b32.xlu0 %v533, 96
      %v542 = vpop.permute.xlu0 %541
      %543 = vrot.lane.b32.xlu0 %v534, 96
      %v544 = vpop.permute.xlu0 %543
      %545 = vrot.lane.b32.xlu0 %v535, 96
      %v546 = vpop.permute.xlu0 %545
      %547 = vrot.lane.b32.xlu0 %v536, 96
      %v548 = vpop.permute.xlu0 %547
      %549 = vrot.lane.b32.xlu0 %v537, 96
      %v550 = vpop.permute.xlu0 %549
      %551 = vrot.lane.b32.xlu0 %v538, 96
      %v552 = vpop.permute.xlu0 %551
      %553 = vrot.lane.b32.xlu0 %v539, 96
      %v554 = vpop.permute.xlu0 %553
      %555 = vrot.lane.b32.xlu0 %v540, 96
      %v556 = vpop.permute.xlu0 %555
      %vm557 = vcmask 785408
      %v558 = vsel %vm557, %v542, %v544
      %v559 = vsel %vm557, %v544, %v546
      %v560 = vsel %vm557, %v546, %v548
      %v561 = vsel %vm557, %v548, %v550
      %v562 = vsel %vm557, %v550, %v552
      %v563 = vsel %vm557, %v552, %v554
      %v564 = vsel %vm557, %v554, %v556
      %v573 = vsel %vm557, %v556, 0.0
      %574 = vst [vmem:[#allocation2 + $0x40] sm:$0xf] %v558
      %575 = vst [vmem:[#allocation2 + $0x48] sm:$0xf] %v559
      %576 = vst [vmem:[#allocation2 + $0x50] sm:$0xf] %v560
      %577 = vst [vmem:[#allocation2 + $0x58] sm:$0xf] %v561
      %578 = vst [vmem:[#allocation2 + $0x60] sm:$0xf] %v562
      %579 = vst [vmem:[#allocation2 + $0x68] sm:$0xf] %v563
      %580 = vst [vmem:[#allocation2 + $0x70] sm:$0xf] %v564
      %581 = vst [vmem:[#allocation2 + $0x78] sm:$0xf] %v573
      %582 = vst [vmem:[#allocation1] ss:$2 sm:$0xff] %v270
      %s583 = scalar_lea.vmem [#allocation1], 16
      %584 = vst [vmem:[%s583] ss:$2 sm:$0xff] %v271
      %s585 = scalar_lea.vmem [#allocation1], 32
      %586 = vst [vmem:[%s585] ss:$2 sm:$0xff] %v272
      %s587 = scalar_lea.vmem [#allocation1], 48
      %588 = vst [vmem:[%s587] ss:$2 sm:$0xff] %v273
      %v589 = vld.sshfl [vmem:[#allocation1] sm:$0xff pattern:$0x75316420]
      %v590 = vld.sshfl [vmem:[#allocation1 + $0x8] sm:$0xff pattern:$0x75316420]
      %v591 = vld.sshfl [vmem:[#allocation1 + $0x10] sm:$0xff pattern:$0x75316420]
      %v592 = vld.sshfl [vmem:[#allocation1 + $0x18] sm:$0xff pattern:$0x75316420]
      %v593 = vld.sshfl [vmem:[#allocation1 + $0x20] sm:$0xff pattern:$0x75316420]
      %v594 = vld.sshfl [vmem:[#allocation1 + $0x28] sm:$0xff pattern:$0x75316420]
      %v595 = vld.sshfl [vmem:[#allocation1 + $0x30] sm:$0xff pattern:$0x75316420]
      %v596 = vld.sshfl [vmem:[#allocation1 + $0x38] sm:$0xff pattern:$0x75316420]
      %597 = vrot.lane.b32.xlu0 %v589, 95
      %v598 = vpop.permute.xlu0 %597
      %599 = vrot.lane.b32.xlu0 %v590, 95
      %v600 = vpop.permute.xlu0 %599
      %601 = vrot.lane.b32.xlu0 %v591, 95
      %v602 = vpop.permute.xlu0 %601
      %603 = vrot.lane.b32.xlu0 %v592, 95
      %v604 = vpop.permute.xlu0 %603
      %605 = vrot.lane.b32.xlu0 %v593, 95
      %v606 = vpop.permute.xlu0 %605
      %607 = vrot.lane.b32.xlu0 %v594, 95
      %v608 = vpop.permute.xlu0 %607
      %609 = vrot.lane.b32.xlu0 %v595, 95
      %v610 = vpop.permute.xlu0 %609
      %611 = vrot.lane.b32.xlu0 %v596, 95
      %v612 = vpop.permute.xlu0 %611
      %vm613 = vcmask 777216
      %v614 = vsel %vm613, %v598, %v600
      %v615 = vsel %vm613, %v600, %v602
      %v616 = vsel %vm613, %v602, %v604
      %v617 = vsel %vm613, %v604, %v606
      %v618 = vsel %vm613, %v606, %v608
      %v619 = vsel %vm613, %v608, %v610
      %v620 = vsel %vm613, %v610, %v612
      %v629 = vsel %vm613, %v612, 0.0
      %v630 = vsel %vm478, %v614, 0.0
      %v631 = vsel %vm479, %v615, 0.0
      %v632 = vsel %vm480, %v616, 0.0
      %v633 = vsel %vm481, %v617, 0.0
      %v634 = vsel %vm482, %v618, 0.0
      %v635 = vsel %vm483, %v619, 0.0
      %v636 = vsel %vm484, %v620, 0.0
      %v637 = vsel %vm485, %v629, 0.0
      %v646 = vrot.slane %v630, 4
      %v647 = vrot.slane %v631, 4
      %v648 = vrot.slane %v632, 4
      %v649 = vrot.slane %v633, 4
      %v650 = vrot.slane %v634, 4
      %v651 = vrot.slane %v635, 4
      %v652 = vrot.slane %v636, 4
      %v653 = vrot.slane %v637, 4
      %662 = vst [vmem:[#allocation2 + $0x40] sm:$0xf0] %v646
      %663 = vst [vmem:[#allocation2 + $0x48] sm:$0xf0] %v647
      %664 = vst [vmem:[#allocation2 + $0x50] sm:$0xf0] %v648
      %665 = vst [vmem:[#allocation2 + $0x58] sm:$0xf0] %v649
      %666 = vst [vmem:[#allocation2 + $0x60] sm:$0xf0] %v650
      %667 = vst [vmem:[#allocation2 + $0x68] sm:$0xf0] %v651
      %668 = vst [vmem:[#allocation2 + $0x70] sm:$0xf0] %v652
      %669 = vst [vmem:[#allocation2 + $0x78] sm:$0xf0] %v653
      %v670 = vld [vmem:[%s1] sm:$0xff]
      %v671 = vld [vmem:[%s1 + $0x8] sm:$0xff]
      %v672 = vld [vmem:[#allocation2] sm:$0xff]
      %v673 = vld [vmem:[#allocation2 + $0x8] sm:$0xff]
      %v674 = vld [vmem:[#allocation2 + $0x10] sm:$0xff]
      %v675 = vld [vmem:[#allocation2 + $0x18] sm:$0xff]
      %v676 = vld [vmem:[#allocation2 + $0x20] sm:$0xff]
      %v677 = vld [vmem:[#allocation2 + $0x28] sm:$0xff]
      %v678 = vld [vmem:[#allocation2 + $0x30] sm:$0xff]
      %v679 = vld [vmem:[#allocation2 + $0x38] sm:$0xff]
      %v680 = vld [vmem:[#allocation2 + $0x40] sm:$0xff]
      %v681 = vld [vmem:[#allocation2 + $0x48] sm:$0xff]
      %v682 = vld [vmem:[#allocation2 + $0x50] sm:$0xff]
      %v683 = vld [vmem:[#allocation2 + $0x58] sm:$0xff]
      %v684 = vld [vmem:[#allocation2 + $0x60] sm:$0xff]
      %v685 = vld [vmem:[#allocation2 + $0x68] sm:$0xff]
      %v686 = vld [vmem:[#allocation2 + $0x70] sm:$0xff]
      %v687 = vld [vmem:[#allocation2 + $0x78] sm:$0xff]
      %vm688 = vcmask 130048
      %v690 = vsel %vm688, %v670, 0
      %v693 = vsel %vm688, %v671, 0
      %695 = vmatpush.msra.mxu0 0.0
      %696 = vmatpush.msra.mxu0 0.0
      %697 = vmatpush.msra.mxu0 0.0
      %698 = vmatpush.msra.mxu0 0.0
      %699 = vmatpush.msra.mxu0 0.0
      %700 = vmatpush.msra.mxu0 0.0
      %701 = vmatpush.msra.mxu0 0.0
      %702 = vmatpush.msra.mxu0 0.0
      %703 = vmatpush.msra.mxu0 0.0
      %704 = vmatpush.msra.mxu0 0.0
      %705 = vmatpush.msra.mxu0 0.0
      %706 = vmatpush.msra.mxu0 0.0
      %707 = vmatpush.msra.mxu0 0.0
      %708 = vmatpush.msra.mxu0 0.0
      %709 = vmatpush.msra.mxu0 %v680
      %710 = vmatpush.msra.mxu0 %v672
      %711 = vmatmul.f32.gmra.mxu0 %v690
      %v712 = vpop.f32.mrf.mxu0
      %v713 = vadd.f32 0.0, %v712
      %714 = vmatmul.f32.gmra.mxu0 %v693
      %v715 = vpop.f32.mrf.mxu0
      %v716 = vadd.f32 0.0, %v715
      %717 = vdwg.mxu0
      %718 = vmatpush.msra.mxu0 0.0
      %719 = vmatpush.msra.mxu0 0.0
      %720 = vmatpush.msra.mxu0 0.0
      %721 = vmatpush.msra.mxu0 0.0
      %722 = vmatpush.msra.mxu0 0.0
      %723 = vmatpush.msra.mxu0 0.0
      %724 = vmatpush.msra.mxu0 0.0
      %725 = vmatpush.msra.mxu0 0.0
      %726 = vmatpush.msra.mxu0 0.0
      %727 = vmatpush.msra.mxu0 0.0
      %728 = vmatpush.msra.mxu0 0.0
      %729 = vmatpush.msra.mxu0 0.0
      %730 = vmatpush.msra.mxu0 0.0
      %731 = vmatpush.msra.mxu0 0.0
      %732 = vmatpush.msra.mxu0 %v681
      %733 = vmatpush.msra.mxu0 %v673
      %734 = vmatmul.f32.gmra.mxu0 %v690
      %v735 = vpop.f32.mrf.mxu0
      %v736 = vadd.f32 0.0, %v735
      %737 = vmatmul.f32.gmra.mxu0 %v693
      %v738 = vpop.f32.mrf.mxu0
      %v739 = vadd.f32 0.0, %v738
      %740 = vdwg.mxu0
      %741 = vmatpush.msra.mxu0 0.0
      %742 = vmatpush.msra.mxu0 0.0
      %743 = vmatpush.msra.mxu0 0.0
      %744 = vmatpush.msra.mxu0 0.0
      %745 = vmatpush.msra.mxu0 0.0
      %746 = vmatpush.msra.mxu0 0.0
      %747 = vmatpush.msra.mxu0 0.0
      %748 = vmatpush.msra.mxu0 0.0
      %749 = vmatpush.msra.mxu0 0.0
      %750 = vmatpush.msra.mxu0 0.0
      %751 = vmatpush.msra.mxu0 0.0
      %752 = vmatpush.msra.mxu0 0.0
      %753 = vmatpush.msra.mxu0 0.0
      %754 = vmatpush.msra.mxu0 0.0
      %755 = vmatpush.msra.mxu0 %v682
      %756 = vmatpush.msra.mxu0 %v674
      %757 = vmatmul.f32.gmra.mxu0 %v690
      %v758 = vpop.f32.mrf.mxu0
      %v759 = vadd.f32 0.0, %v758
      %760 = vmatmul.f32.gmra.mxu0 %v693
      %v761 = vpop.f32.mrf.mxu0
      %v762 = vadd.f32 0.0, %v761
      %763 = vdwg.mxu0
      %764 = vmatpush.msra.mxu0 0.0
      %765 = vmatpush.msra.mxu0 0.0
      %766 = vmatpush.msra.mxu0 0.0
      %767 = vmatpush.msra.mxu0 0.0
      %768 = vmatpush.msra.mxu0 0.0
      %769 = vmatpush.msra.mxu0 0.0
      %770 = vmatpush.msra.mxu0 0.0
      %771 = vmatpush.msra.mxu0 0.0
      %772 = vmatpush.msra.mxu0 0.0
      %773 = vmatpush.msra.mxu0 0.0
      %774 = vmatpush.msra.mxu0 0.0
      %775 = vmatpush.msra.mxu0 0.0
      %776 = vmatpush.msra.mxu0 0.0
      %777 = vmatpush.msra.mxu0 0.0
      %778 = vmatpush.msra.mxu0 %v683
      %779 = vmatpush.msra.mxu0 %v675
      %780 = vmatmul.f32.gmra.mxu0 %v690
      %v781 = vpop.f32.mrf.mxu0
      %v782 = vadd.f32 0.0, %v781
      %783 = vmatmul.f32.gmra.mxu0 %v693
      %v784 = vpop.f32.mrf.mxu0
      %v785 = vadd.f32 0.0, %v784
      %786 = vdwg.mxu0
      %787 = vmatpush.msra.mxu0 0.0
      %788 = vmatpush.msra.mxu0 0.0
      %789 = vmatpush.msra.mxu0 0.0
      %790 = vmatpush.msra.mxu0 0.0
      %791 = vmatpush.msra.mxu0 0.0
      %792 = vmatpush.msra.mxu0 0.0
      %793 = vmatpush.msra.mxu0 0.0
      %794 = vmatpush.msra.mxu0 0.0
      %795 = vmatpush.msra.mxu0 0.0
      %796 = vmatpush.msra.mxu0 0.0
      %797 = vmatpush.msra.mxu0 0.0
      %798 = vmatpush.msra.mxu0 0.0
      %799 = vmatpush.msra.mxu0 0.0
      %800 = vmatpush.msra.mxu0 0.0
      %801 = vmatpush.msra.mxu0 %v684
      %802 = vmatpush.msra.mxu0 %v676
      %803 = vmatmul.f32.gmra.mxu0 %v690
      %v804 = vpop.f32.mrf.mxu0
      %v805 = vadd.f32 0.0, %v804
      %806 = vmatmul.f32.gmra.mxu0 %v693
      %v807 = vpop.f32.mrf.mxu0
      %v808 = vadd.f32 0.0, %v807
      %809 = vdwg.mxu0
      %810 = vmatpush.msra.mxu0 0.0
      %811 = vmatpush.msra.mxu0 0.0
      %812 = vmatpush.msra.mxu0 0.0
      %813 = vmatpush.msra.mxu0 0.0
      %814 = vmatpush.msra.mxu0 0.0
      %815 = vmatpush.msra.mxu0 0.0
      %816 = vmatpush.msra.mxu0 0.0
      %817 = vmatpush.msra.mxu0 0.0
      %818 = vmatpush.msra.mxu0 0.0
      %819 = vmatpush.msra.mxu0 0.0
      %820 = vmatpush.msra.mxu0 0.0
      %821 = vmatpush.msra.mxu0 0.0
      %822 = vmatpush.msra.mxu0 0.0
      %823 = vmatpush.msra.mxu0 0.0
      %824 = vmatpush.msra.mxu0 %v685
      %825 = vmatpush.msra.mxu0 %v677
      %826 = vmatmul.f32.gmra.mxu0 %v690
      %v827 = vpop.f32.mrf.mxu0
      %v828 = vadd.f32 0.0, %v827
      %829 = vmatmul.f32.gmra.mxu0 %v693
      %v830 = vpop.f32.mrf.mxu0
      %v831 = vadd.f32 0.0, %v830
      %832 = vdwg.mxu0
      %833 = vmatpush.msra.mxu0 0.0
      %834 = vmatpush.msra.mxu0 0.0
      %835 = vmatpush.msra.mxu0 0.0
      %836 = vmatpush.msra.mxu0 0.0
      %837 = vmatpush.msra.mxu0 0.0
      %838 = vmatpush.msra.mxu0 0.0
      %839 = vmatpush.msra.mxu0 0.0
      %840 = vmatpush.msra.mxu0 0.0
      %841 = vmatpush.msra.mxu0 0.0
      %842 = vmatpush.msra.mxu0 0.0
      %843 = vmatpush.msra.mxu0 0.0
      %844 = vmatpush.msra.mxu0 0.0
      %845 = vmatpush.msra.mxu0 0.0
      %846 = vmatpush.msra.mxu0 0.0
      %847 = vmatpush.msra.mxu0 %v686
      %848 = vmatpush.msra.mxu0 %v678
      %849 = vmatmul.f32.gmra.mxu0 %v690
      %v850 = vpop.f32.mrf.mxu0
      %v851 = vadd.f32 0.0, %v850
      %852 = vmatmul.f32.gmra.mxu0 %v693
      %v853 = vpop.f32.mrf.mxu0
      %v854 = vadd.f32 0.0, %v853
      %855 = vdwg.mxu0
      %856 = vmatpush.msra.mxu0 0.0
      %857 = vmatpush.msra.mxu0 0.0
      %858 = vmatpush.msra.mxu0 0.0
      %859 = vmatpush.msra.mxu0 0.0
      %860 = vmatpush.msra.mxu0 0.0
      %861 = vmatpush.msra.mxu0 0.0
      %862 = vmatpush.msra.mxu0 0.0
      %863 = vmatpush.msra.mxu0 0.0
      %864 = vmatpush.msra.mxu0 0.0
      %865 = vmatpush.msra.mxu0 0.0
      %866 = vmatpush.msra.mxu0 0.0
      %867 = vmatpush.msra.mxu0 0.0
      %868 = vmatpush.msra.mxu0 0.0
      %869 = vmatpush.msra.mxu0 0.0
      %870 = vmatpush.msra.mxu0 %v687
      %871 = vmatpush.msra.mxu0 %v679
      %872 = vmatmul.f32.gmra.mxu0 %v690
      %v873 = vpop.f32.mrf.mxu0
      %v874 = vadd.f32 0.0, %v873
      %875 = vmatmul.f32.gmra.mxu0 %v693
      %v876 = vpop.f32.mrf.mxu0
      %v877 = vadd.f32 0.0, %v876
      %878 = vdwg.mxu0
      %879 = vst [vmem:[%s232] sm:$0xff] %v713
      %880 = vst [vmem:[%s232 + $0x8] sm:$0xff] %v736
      %881 = vst [vmem:[%s232 + $0x10] sm:$0xff] %v759
      %882 = vst [vmem:[%s232 + $0x18] sm:$0xff] %v782
      %883 = vst [vmem:[%s232 + $0x20] sm:$0xff] %v805
      %884 = vst [vmem:[%s232 + $0x28] sm:$0xff] %v828
      %885 = vst [vmem:[%s232 + $0x30] sm:$0xff] %v851
      %886 = vst [vmem:[%s232 + $0x38] sm:$0xff] %v874
      %887 = vst [vmem:[%s232 + $0x40] sm:$0xff] %v716
      %888 = vst [vmem:[%s232 + $0x48] sm:$0xff] %v739
      %889 = vst [vmem:[%s232 + $0x50] sm:$0xff] %v762
      %890 = vst [vmem:[%s232 + $0x58] sm:$0xff] %v785
      %891 = vst [vmem:[%s232 + $0x60] sm:$0xff] %v808
      %892 = vst [vmem:[%s232 + $0x68] sm:$0xff] %v831
      %893 = vst [vmem:[%s232 + $0x70] sm:$0xff] %v854
      %894 = vst [vmem:[%s232 + $0x78] sm:$0xff] %v877
      %v895 = vadd.f32 %v713, %v736
      %v896 = vadd.f32 %v895, %v759
      %v897 = vadd.f32 %v896, %v782
      %v898 = vadd.f32 %v897, %v805
      %v899 = vadd.f32 %v898, %v828
      %v900 = vadd.f32 %v899, %v851
      %v901 = vadd.f32 %v900, %v874
      %902 = vadd.xlane.f32.xlu0 %v901
      %v903 = vpop.xlane.xlu0 %902
      %v904 = vadd.f32 %v716, %v739
      %v905 = vadd.f32 %v904, %v762
      %v906 = vadd.f32 %v905, %v785
      %v907 = vadd.f32 %v906, %v808
      %v908 = vadd.f32 %v907, %v831
      %v909 = vadd.f32 %v908, %v854
      %v910 = vadd.f32 %v909, %v877
      %911 = vadd.xlane.f32.xlu0 %v910
      %v912 = vpop.xlane.xlu0 %911
      %v913 = vmul.f32 %v713, %v713
      %v914 = vmul.f32 %v736, %v736
      %v915 = vmul.f32 %v759, %v759
      %v916 = vmul.f32 %v782, %v782
      %v917 = vmul.f32 %v805, %v805
      %v918 = vmul.f32 %v828, %v828
      %v919 = vmul.f32 %v851, %v851
      %v920 = vmul.f32 %v874, %v874
      %v921 = vmul.f32 %v716, %v716
      %v922 = vmul.f32 %v739, %v739
      %v923 = vmul.f32 %v762, %v762
      %v924 = vmul.f32 %v785, %v785
      %v925 = vmul.f32 %v808, %v808
      %v926 = vmul.f32 %v831, %v831
      %v927 = vmul.f32 %v854, %v854
      %v928 = vmul.f32 %v877, %v877
      %v929 = vadd.f32 %v913, %v914
      %v930 = vadd.f32 %v929, %v915
      %v931 = vadd.f32 %v930, %v916
      %v932 = vadd.f32 %v931, %v917
      %v933 = vadd.f32 %v932, %v918
      %v934 = vadd.f32 %v933, %v919
      %v935 = vadd.f32 %v934, %v920
      %936 = vadd.xlane.f32.xlu0 %v935
      %v937 = vpop.xlane.xlu0 %936
      %v938 = vadd.f32 %v921, %v922
      %v939 = vadd.f32 %v938, %v923
      %v940 = vadd.f32 %v939, %v924
      %v941 = vadd.f32 %v940, %v925
      %v942 = vadd.f32 %v941, %v926
      %v943 = vadd.f32 %v942, %v927
      %v944 = vadd.f32 %v943, %v928
      %945 = vadd.xlane.f32.xlu0 %v944
      %v946 = vpop.xlane.xlu0 %945
      %vm947 = vcmask 7168
      %v948 = vsel %vm947, %v903, %v937
      %v949 = vsel %vm947, %v912, %v946
      %vm950 = vcmask 15360
      %951 = vst.msk [vmem:[%s237] sm:$0xff] %vm950, %v948
      %952 = vst.msk [vmem:[%s237 + $0x8] sm:$0xff] %vm950, %v949
      %p953 = scmp.lt.s32.totalorder %s17, 1
      %s954 = scalar_select %p953, %s17, 1
      %s955 = smul.addr %s954, 16
      %s956 = smul.addr %s955, 8
      %s957 = scalar_lea.vmem %s4, %s956
      %p958 = scmp.lt.s32.totalorder %s17, 1
      %s959 = scalar_select %p958, %s17, 1
      %s960 = smul.addr %s959, 2
      %s961 = smul.addr %s960, 8
      %s962 = scalar_lea.vmem %s5, %s961
      // Predicated region
      $region37: #{decoder_block.5} parent=35 // pred_check
        %p963 = pneg %p124
      $region38: #{decoder_block.5} parent=35 // pred_check_branch
        %965 = sbr.rel (%p963) target = $region40
      $region39: #{decoder_block.5} parent=35 // pred_region
        _
      $region40: #{decoder_block.5} parent=35 // pred_fallthru
        _
      // Predicated region
      $region41: #{decoder_block.5} parent=35 // pred_check
        %p966 = pneg %p150
      $region42: #{decoder_block.5} parent=35 // pred_check_branch
        %968 = sbr.rel (%p966) target = $region44
      $region43: #{decoder_block.5} parent=35 // pred_region
        _
      $region44: #{decoder_block.5} parent=35 // pred_fallthru
        _
    $region36: #{decoder_block.5} parent=5 // pred_fallthru
      _
    %p969 = scmp.le.s32.totalorder 2, %s12
    // Predicated region
    $region45: #{decoder_block.5} parent=5 // pred_check
      %p970 = pneg %p969
    $region46: #{decoder_block.5} parent=5 // pred_check_branch
      %972 = sbr.rel (%p970) target = $region48
    $region47: #{decoder_block.5} parent=5 // pred_region
      %s973 = ssub.s32 %s12, 2
      // Predicated region
      $region49: #{decoder_block.5} parent=47 // pred_check
        %p974 = pneg %p130
      $region50: #{decoder_block.5} parent=47 // pred_check_branch
        %976 = sbr.rel (%p974) target = $region52
      $region51: #{decoder_block.5} parent=47 // pred_region
        %p977 = scmp.lt.s32.totalorder %s18, 1
        %s978 = scalar_select %p977, %s18, 1
        %s979 = smul.addr %s978, 16
        %s980 = smul.addr %s979, 8
        %s981 = scalar_lea.vmem %s4, %s980
      $region52: #{decoder_block.5} parent=47 // pred_fallthru
        _
      // Predicated region
      $region53: #{decoder_block.5} parent=47 // pred_check
        %p982 = pneg %p156
      $region54: #{decoder_block.5} parent=47 // pred_check_branch
        %984 = sbr.rel (%p982) target = $region56
      $region55: #{decoder_block.5} parent=47 // pred_region
        %p985 = scmp.lt.s32.totalorder %s18, 1
        %s986 = scalar_select %p985, %s18, 1
        %s987 = smul.addr %s986, 2
        %s988 = smul.addr %s987, 8
        %s989 = scalar_lea.vmem %s5, %s988
      $region56: #{decoder_block.5} parent=47 // pred_fallthru
        _
    $region48: #{decoder_block.5} parent=5 // pred_fallthru
      _
  $region6: #{decoder_block.5} parent=0 // loop_footer
    %s16 = sadd.s32 1, %s12
  $region7: #{decoder_block.5} parent=0 // loop_footer_branch
    %11 = sbr.rel target = $region3
  $region8: #{decoder_block.5} parent=0 // loop_exit
    _

// kernel: tile.38
$region0: #{tile.38}
  #allocation0 [shape = 's32[1]{0}', space=sflag, size = 0x4, scoped, tag = 'scoped memory for tile.38']
  %s0 = inlined_call_operand.vmem [shape: f32[8], index: 0, kind: input, shape index: {}]
  %s1 = inlined_call_operand.vmem [shape: f32[4,8], index: 1, kind: output, shape index: {}]
  // Predicated region
  $region2: #{tile.38} parent=0 // pred_check
    _
  $region3: #{tile.38} parent=0 // pred_check_branch
    %3 = sbr.rel (0) target = $region5
  $region4: #{tile.38} parent=0 // pred_region
    _
  $region5: #{tile.38} parent=0 // pred_fallthru
    _
  %v4 = vld [vmem:[%s0] ss:$0 sm:$0xff]
  %5 = vst [vmem:[%s1] sm:$0xf] %v4

// kernel: tile.2
$region0: #{tile.2}
  %s0 = inlined_call_operand.vmem [shape: f32[4,8], index: 0, kind: input, shape index: {}]
  %s1 = inlined_call_operand.vmem [shape: f32[32,1], index: 1, kind: output, shape index: {}]
  $region1: #{tile.2} parent=0
    #allocation0 [shape = 'u8[4096]{0}', space=vmem, size = 0x1000, scoped, tag = 'scoped mem for input reshape']
    %s3 = ssub.s32 16, 1
    %v4 = vld [vmem:[%s0] sm:%s3]
    %5 = vst [vmem:[#allocation0] sm:%s3] %v4
    %v6 = vld [vmem:[#allocation0] sm:$0xf]
    %vm7 = vcmask 7168
    %8 = vst.msk [vmem:[%s1] ss:$8 sm:$0xf] %vm7, %v6
    %v9 = vld [vmem:[#allocation0] sm:$0xf]
    %10 = vrot.lane.b32.xlu0 %v9, 127
    %v11 = vpop.permute.xlu0 %10
    %vm12 = vcmask 7168
    %s13 = scalar_lea.vmem %s1, 1
    %14 = vst.msk [vmem:[%s13] ss:$8 sm:$0xf] %vm12, %v11
    %v15 = vld [vmem:[#allocation0] sm:$0xf]
    %16 = vrot.lane.b32.xlu0 %v15, 126
    %v17 = vpop.permute.xlu0 %16
    %vm18 = vcmask 7168
    %s19 = scalar_lea.vmem %s1, 2
    %20 = vst.msk [vmem:[%s19] ss:$8 sm:$0xf] %vm18, %v17
    %v21 = vld [vmem:[#allocation0] sm:$0xf]
    %22 = vrot.lane.b32.xlu0 %v21, 125
    %v23 = vpop.permute.xlu0 %22
    %vm24 = vcmask 7168
    %s25 = scalar_lea.vmem %s1, 3
    %26 = vst.msk [vmem:[%s25] ss:$8 sm:$0xf] %vm24, %v23
    %v27 = vld [vmem:[#allocation0] sm:$0xf]
    %28 = vrot.lane.b32.xlu0 %v27, 124
    %v29 = vpop.permute.xlu0 %28
    %vm30 = vcmask 7168
    %s31 = scalar_lea.vmem %s1, 4
    %32 = vst.msk [vmem:[%s31] ss:$8 sm:$0xf] %vm30, %v29
    %v33 = vld [vmem:[#allocation0] sm:$0xf]
    %34 = vrot.lane.b32.xlu0 %v33, 123
    %v35 = vpop.permute.xlu0 %34
    %vm36 = vcmask 7168
    %s37 = scalar_lea.vmem %s1, 5
    %38 = vst.msk [vmem:[%s37] ss:$8 sm:$0xf] %vm36, %v35
    %v39 = vld [vmem:[#allocation0] sm:$0xf]
    %40 = vrot.lane.b32.xlu0 %v39, 122
    %v41 = vpop.permute.xlu0 %40
    %vm42 = vcmask 7168
    %s43 = scalar_lea.vmem %s1, 6
    %44 = vst.msk [vmem:[%s43] ss:$8 sm:$0xf] %vm42, %v41
    %v45 = vld [vmem:[#allocation0] sm:$0xf]
    %46 = vrot.lane.b32.xlu0 %v45, 121
    %v47 = vpop.permute.xlu0 %46
    %vm48 = vcmask 7168
    %s49 = scalar_lea.vmem %s1, 7
    %50 = vst.msk [vmem:[%s49] ss:$8 sm:$0xf] %vm48, %v47

// kernel: decoder_block.6
$region0: #{decoder_block.6}
  #allocation0 [shape = 'u32[]', space=smem, size = 0x4, offset = 0x4, fixed_abs, tag = 'smem constant byte address 0x4 - core index']
  #allocation1 [shape = 'u32[72,128]{1,0:T(1,128)}', space=vmem, size = 0x9000, scoped, tag = 'internal scratch']
  %s0 = inlined_call_operand.vmem [shape: f32[2,16,1024], index: 0, kind: input, shape index: {}]
  %s1 = inlined_call_operand.vmem [shape: f32[32,16], index: 1, kind: input, shape index: {}]
  %s2 = inlined_call_operand.vmem [shape: f32[16,1], index: 2, kind: input, shape index: {}]
  %s3 = inlined_call_operand.vmem [shape: f32[16,1], index: 3, kind: input, shape index: {}]
  %s4 = inlined_call_operand.vmem [shape: f32[2,32,1024], index: 4, kind: output, shape index: {0}]
  %s5 = inlined_call_operand.vmem [shape: f32[2,32,2], index: 5, kind: output, shape index: {1}]
  %6 = xla_tuple %s4, %s5
  %s7 = sld [smem:[#allocation0]]
  $region103: #{decoder_block.6} parent=0
    _
  %s9 = ssub.s32 1, %s7
  %s10 = scalar_select 0, %s9, %s7
  $region1: #{decoder_block.6} parent=0
    #allocation2 [shape = 'u8[65536]{0}', space=vmem, size = 0x10000, scoped, tag = 'input window, operand 0']
    #allocation3 [shape = 'u8[131072]{0}', space=vmem, size = 0x20000, scoped, tag = 'output window, operand 0']
    loop: start=0, step=1, limit=6
    $region2: #{decoder_block.6} parent=1 // loop_pre_header
      _
    $region3: #{decoder_block.6} parent=1 // loop_header
      %s12 = sphi 0, %s16
      %p13 = scmp.ge.s32.totalorder %s12, 6
      %s19 = sphi 0, %s31
      %s20 = sphi 0, %s27
      %s21 = sphi 0, %s19
      %s22 = sphi 0, %s20
      %s23 = sphi 0, %s21
      %s24 = sphi 0, %s22
      %s36 = sphi 0, %s38
      %s39 = sphi 0, %s36
      %s40 = sphi 0, %s39
      %s56 = sphi 0, %s40
      %s60 = sphi 0, %s60
      %s62 = sphi 0, %s60
      %s63 = sphi 0, %s62
      %s77 = sphi 0, %s63
      %s81 = sphi 0, %s81
      %s83 = sphi 0, %s81
      %s84 = sphi 0, %s83
      %s98 = sphi 0, %s84
      %s102 = sphi 0, %s102
      %s104 = sphi 0, %s102
      %s105 = sphi 0, %s104
      %s119 = sphi 0, %s105
      %s127 = sphi 0, %s129
      %s130 = sphi 0, %s127
      %s131 = sphi 0, %s130
      %s147 = sphi 0, %s131
      %s153 = sphi 0, %s155
      %s156 = sphi 0, %s153
      %s157 = sphi 0, %s156
      %s173 = sphi 0, %s157
    $region4: #{decoder_block.6} parent=1 // loop_header_branch
      %15 = sbr.rel (%p13) target = $region8
    $region5: #{decoder_block.6} parent=1 // loop_body
      %s17 = ssub.s32 %s12, 1
      %s18 = ssub.s32 %s12, 2
      %s25 = sadd.s32 1, %s20
      %p26 = scmp.ge.s32.totalorder %s25, 2
      %s27 = scalar_select %p26, 0, %s25
      %s28 = sadd.s32 1, %s19
      %s29 = scalar_select %p26, %s28, %s19
      %p30 = scmp.ge.s32.totalorder %s29, 2
      %s31 = scalar_select %p30, 0, %s29
      %s32 = ssub.s32 %s19, %s31
      %s33 = ssub.s32 %s20, %s27
      %s34 = sor.u32 %s32, %s33
      %p35 = scmp.eq.s32.totalorder %s34, 0
      %s37 = sadd.s32 %s36, 1
      %s38 = scalar_select %p35, %s36, %s37
      %p41 = pneg %p35
      %p42 = scmp.eq.s32.totalorder %s12, 3
      %p43 = por %p41, %p42
      %p44 = scmp.ne.s32.totalorder %s36, %s39
      %p45 = scmp.eq.s32.totalorder %s12, 0
      %p46 = por %p44, %p45
      %p47 = scmp.ne.s32.totalorder %s36, %s39
      %p48 = scmp.eq.s32.totalorder %s17, 3
      %p49 = por %p47, %p48
      %p50 = scmp.ne.s32.totalorder %s39, %s40
      %p51 = scmp.eq.s32.totalorder %s17, 0
      %p52 = por %p50, %p51
      %p53 = scmp.ne.s32.totalorder %s39, %s40
      %p54 = scmp.eq.s32.totalorder %s18, 3
      %p55 = por %p53, %p54
      %p57 = scmp.ne.s32.totalorder %s40, %s56
      %p58 = scmp.eq.s32.totalorder %s18, 0
      %p59 = por %p57, %p58
      %s61 = sadd.s32 %s60, 1
      %p64 = scmp.eq.s32.totalorder %s12, 3
      %p65 = scmp.ne.s32.totalorder %s60, %s62
      %p66 = scmp.eq.s32.totalorder %s12, 0
      %p67 = por %p65, %p66
      %p68 = scmp.ne.s32.totalorder %s60, %s62
      %p69 = scmp.eq.s32.totalorder %s17, 3
      %p70 = por %p68, %p69
      %p71 = scmp.ne.s32.totalorder %s62, %s63
      %p72 = scmp.eq.s32.totalorder %s17, 0
      %p73 = por %p71, %p72
      %p74 = scmp.ne.s32.totalorder %s62, %s63
      %p75 = scmp.eq.s32.totalorder %s18, 3
      %p76 = por %p74, %p75
      %p78 = scmp.ne.s32.totalorder %s63, %s77
      %p79 = scmp.eq.s32.totalorder %s18, 0
      %p80 = por %p78, %p79
      %s82 = sadd.s32 %s81, 1
      %p85 = scmp.eq.s32.totalorder %s12, 3
      %p86 = scmp.ne.s32.totalorder %s81, %s83
      %p87 = scmp.eq.s32.totalorder %s12, 0
      %p88 = por %p86, %p87
      %p89 = scmp.ne.s32.totalorder %s81, %s83
      %p90 = scmp.eq.s32.totalorder %s17, 3
      %p91 = por %p89, %p90
      %p92 = scmp.ne.s32.totalorder %s83, %s84
      %p93 = scmp.eq.s32.totalorder %s17, 0
      %p94 = por %p92, %p93
      %p95 = scmp.ne.s32.totalorder %s83, %s84
      %p96 = scmp.eq.s32.totalorder %s18, 3
      %p97 = por %p95, %p96
      %p99 = scmp.ne.s32.totalorder %s84, %s98
      %p100 = scmp.eq.s32.totalorder %s18, 0
      %p101 = por %p99, %p100
      %s103 = sadd.s32 %s102, 1
      %p106 = scmp.eq.s32.totalorder %s12, 3
      %p107 = scmp.ne.s32.totalorder %s102, %s104
      %p108 = scmp.eq.s32.totalorder %s12, 0
      %p109 = por %p107, %p108
      %p110 = scmp.ne.s32.totalorder %s102, %s104
      %p111 = scmp.eq.s32.totalorder %s17, 3
      %p112 = por %p110, %p111
      %p113 = scmp.ne.s32.totalorder %s104, %s105
      %p114 = scmp.eq.s32.totalorder %s17, 0
      %p115 = por %p113, %p114
      %p116 = scmp.ne.s32.totalorder %s104, %s105
      %p117 = scmp.eq.s32.totalorder %s18, 3
      %p118 = por %p116, %p117
      %p120 = scmp.ne.s32.totalorder %s105, %s119
      %p121 = scmp.eq.s32.totalorder %s18, 0
      %p122 = por %p120, %p121
      %s123 = ssub.s32 %s19, %s31
      %s124 = ssub.s32 %s20, %s27
      %s125 = sor.u32 %s123, %s124
      %p126 = scmp.eq.s32.totalorder %s125, 0
      %s128 = sadd.s32 %s127, 1
      %s129 = scalar_select %p126, %s127, %s128
      %p132 = pneg %p126
      %p133 = scmp.eq.s32.totalorder %s12, 3
      %p134 = por %p132, %p133
      %p135 = scmp.ne.s32.totalorder %s127, %s130
      %p136 = scmp.eq.s32.totalorder %s12, 0
      %p137 = por %p135, %p136
      %p138 = scmp.ne.s32.totalorder %s127, %s130
      %p139 = scmp.eq.s32.totalorder %s17, 3
      %p140 = por %p138, %p139
      %p141 = scmp.ne.s32.totalorder %s130, %s131
      %p142 = scmp.eq.s32.totalorder %s17, 0
      %p143 = por %p141, %p142
      %p144 = scmp.ne.s32.totalorder %s130, %s131
      %p145 = scmp.eq.s32.totalorder %s18, 3
      %p146 = por %p144, %p145
      %p148 = scmp.ne.s32.totalorder %s131, %s147
      %p149 = scmp.eq.s32.totalorder %s18, 0
      %p150 = por %p148, %p149
      %s151 = ssub.s32 %s19, %s31
      %p152 = scmp.eq.s32.totalorder %s151, 0
      %s154 = sadd.s32 %s153, 1
      %s155 = scalar_select %p152, %s153, %s154
      %p158 = pneg %p152
      %p159 = scmp.eq.s32.totalorder %s12, 3
      %p160 = por %p158, %p159
      %p161 = scmp.ne.s32.totalorder %s153, %s156
      %p162 = scmp.eq.s32.totalorder %s12, 0
      %p163 = por %p161, %p162
      %p164 = scmp.ne.s32.totalorder %s153, %s156
      %p165 = scmp.eq.s32.totalorder %s17, 3
      %p166 = por %p164, %p165
      %p167 = scmp.ne.s32.totalorder %s156, %s157
      %p168 = scmp.eq.s32.totalorder %s17, 0
      %p169 = por %p167, %p168
      %p170 = scmp.ne.s32.totalorder %s156, %s157
      %p171 = scmp.eq.s32.totalorder %s18, 3
      %p172 = por %p170, %p171
      %p174 = scmp.ne.s32.totalorder %s157, %s173
      %p175 = scmp.eq.s32.totalorder %s18, 0
      %p176 = por %p174, %p175
      %p177 = scmp.le.s32.totalorder 1, %s12
      %p178 = scmp.lt.s32.totalorder %s12, 5
      %p179 = pnand %p177, %p178
      %p180 = pneg %p179
      // Predicated region
      $region9: #{decoder_block.6} parent=5 // pred_check
        _
      $region10: #{decoder_block.6} parent=5 // pred_check_branch
        %182 = sbr.rel (%p179) target = $region12
      $region11: #{decoder_block.6} parent=5 // pred_region
        %s183 = ssub.s32 %s12, 1
        // Predicated region
        $region13: #{decoder_block.6} parent=11 // pred_check
          %p184 = pneg %p73
        $region14: #{decoder_block.6} parent=11 // pred_check_branch
          %186 = sbr.rel (%p184) target = $region16
        $region15: #{decoder_block.6} parent=11 // pred_region
          _
        $region16: #{decoder_block.6} parent=11 // pred_fallthru
          _
        // Predicated region
        $region17: #{decoder_block.6} parent=11 // pred_check
          %p187 = pneg %p94
        $region18: #{decoder_block.6} parent=11 // pred_check_branch
          %189 = sbr.rel (%p187) target = $region20
        $region19: #{decoder_block.6} parent=11 // pred_region
          _
        $region20: #{decoder_block.6} parent=11 // pred_fallthru
          _
        // Predicated region
        $region21: #{decoder_block.6} parent=11 // pred_check
          %p190 = pneg %p115
        $region22: #{decoder_block.6} parent=11 // pred_check_branch
          %192 = sbr.rel (%p190) target = $region24
        $region23: #{decoder_block.6} parent=11 // pred_region
          _
        $region24: #{decoder_block.6} parent=11 // pred_fallthru
          _
      $region12: #{decoder_block.6} parent=5 // pred_fallthru
        _
      %p193 = scmp.lt.s32.totalorder %s12, 4
      // Predicated region
      $region25: #{decoder_block.6} parent=5 // pred_check
        %p194 = pneg %p193
      $region26: #{decoder_block.6} parent=5 // pred_check_branch
        %196 = sbr.rel (%p194) target = $region28
      $region27: #{decoder_block.6} parent=5 // pred_region
        // Predicated region
        $region29: #{decoder_block.6} parent=27 // pred_check
          %p197 = pneg %p46
        $region30: #{decoder_block.6} parent=27 // pred_check_branch
          %199 = sbr.rel (%p197) target = $region32
        $region31: #{decoder_block.6} parent=27 // pred_region
          %s200 = sand.u32 %s36, 1
          %s201 = sand.u32 %s36, 1
          %s202 = smul.addr %s201, 64
          %s203 = scalar_lea.vmem [#allocation2], %s202
          %s204 = smul.u32 4, %s20
          %s205 = smul.addr %s19, 16
          %s206 = sadd.s32 %s204, %s205
          %s207 = smul.addr %s206, 8
          %s208 = scalar_lea.vmem %s0, %s207
          // Predicated region
          $region33: #{decoder_block.6} parent=31 // pred_check
            _
          $region34: #{decoder_block.6} parent=31 // pred_check_branch
            %210 = sbr.rel (0) target = $region36
          $region35: #{decoder_block.6} parent=31 // pred_region
            // Predicated region
            $region37: #{decoder_block.6} parent=35 // pred_check
              _
            $region38: #{decoder_block.6} parent=35 // pred_check_branch
              %212 = sbr.rel (0) target = $region40
            $region39: #{decoder_block.6} parent=35 // pred_region
              loop: start=0, step=1, limit=1
              $region41: #{decoder_block.6} parent=39 // loop_pre_header
                _
              $region42: #{decoder_block.6} parent=39 // loop_header
                %s214 = sphi 0, %s218
                %p215 = scmp.ge.s32.totalorder %s214, 1
                %s219 = sphi %s208, %s208
                %s220 = sphi %s203, %s203
              $region43: #{decoder_block.6} parent=39 // loop_header_branch
                %217 = sbr.rel (%p215) target = $region47
              $region44: #{decoder_block.6} parent=39 // loop_body
                %v221 = vld [vmem:[%s219] sm:$0xff]
                %222 = vst [vmem:[%s220] sm:$0xff] %v221
                %v223 = vld [vmem:[%s219 + $0x8] sm:$0xff]
                %224 = vst [vmem:[%s220 + $0x8] sm:$0xff] %v223
                %v225 = vld [vmem:[%s219 + $0x10] sm:$0xff]
                %226 = vst [vmem:[%s220 + $0x10] sm:$0xff] %v225
                %v227 = vld [vmem:[%s219 + $0x18] sm:$0xff]
                %228 = vst [vmem:[%s220 + $0x18] sm:$0xff] %v227
                %v229 = vld [vmem:[%s219 + $0x40] sm:$0xff]
                %230 = vst [vmem:[%s220 + $0x20] sm:$0xff] %v229
                %v231 = vld [vmem:[%s219 + $0x48] sm:$0xff]
                %232 = vst [vmem:[%s220 + $0x28] sm:$0xff] %v231
                %v233 = vld [vmem:[%s219 + $0x50] sm:$0xff]
                %234 = vst [vmem:[%s220 + $0x30] sm:$0xff] %v233
                %v235 = vld [vmem:[%s219 + $0x58] sm:$0xff]
                %236 = vst [vmem:[%s220 + $0x38] sm:$0xff] %v235
              $region45: #{decoder_block.6} parent=39 // loop_footer
                %s218 = sadd.s32 1, %s214
              $region46: #{decoder_block.6} parent=39 // loop_footer_branch
                %213 = sbr.rel target = $region42
              $region47: #{decoder_block.6} parent=39 // loop_exit
                _
            $region40: #{decoder_block.6} parent=35 // pred_fallthru
              _
            // Predicated region
            $region48: #{decoder_block.6} parent=35 // pred_check
              _
            $region49: #{decoder_block.6} parent=35 // pred_check_branch
              %238 = sbr.rel target = $region51
            $region50: #{decoder_block.6} parent=35 // pred_region
              _
            $region51: #{decoder_block.6} parent=35 // pred_fallthru
              _
          $region36: #{decoder_block.6} parent=31 // pred_fallthru
            _
          %239 = vnop
        $region32: #{decoder_block.6} parent=27 // pred_fallthru
          _
      $region28: #{decoder_block.6} parent=5 // pred_fallthru
        _
      %p240 = scmp.le.s32.totalorder 1, %s12
      %p241 = scmp.lt.s32.totalorder %s12, 5
      %p242 = pnand %p240, %p241
      %p243 = pneg %p242
      // Predicated region
      $region52: #{decoder_block.6} parent=5 // pred_check
        _
      $region53: #{decoder_block.6} parent=5 // pred_check_branch
        %245 = sbr.rel (%p242) target = $region55
      $region54: #{decoder_block.6} parent=5 // pred_region
        %s246 = ssub.s32 %s12, 1
        %s247 = sand.u32 %s39, 1
        %s248 = sand.u32 %s39, 1
        %s249 = smul.addr %s248, 64
        %s250 = scalar_lea.vmem [#allocation2], %s249
        // Predicated region
        $region56: #{decoder_block.6} parent=54 // pred_check
          %p251 = pneg %p52
        $region57: #{decoder_block.6} parent=54 // pred_check_branch
          %253 = sbr.rel (%p251) target = $region59
        $region58: #{decoder_block.6} parent=54 // pred_region
          _
        $region59: #{decoder_block.6} parent=54 // pred_fallthru
          _
        %s254 = sand.u32 %s39, 1
        %s255 = sand.u32 %s39, 1
        %s256 = smul.addr %s255, 64
        %s257 = scalar_lea.vmem [#allocation2], %s256
        %p258 = pneg %p52
        %p259 = pneg %p49
        %p260 = pneg %p73
        %p261 = pneg %p70
        %p262 = pneg %p94
        %p263 = pneg %p91
        %p264 = pneg %p115
        %p265 = pneg %p112
        %p266 = pneg %p143
        %p267 = pneg %p140
        %s268 = sand.u32 %s130, 1
        %s269 = sand.u32 %s130, 1
        %s270 = smul.addr %s269, 128
        %s271 = scalar_lea.vmem [#allocation3], %s270
        %p272 = pneg %p169
        %p273 = pneg %p166
        %p274 = scmp.lt.s32.totalorder %s21, 1
        %s275 = scalar_select %p274, %s21, 1
        %s276 = smul.addr %s275, 4
        %s277 = smul.addr %s276, 8
        %s278 = scalar_lea.vmem %s5, %s277
        %s279 = smul.u32 4, %s22
        %s280 = smul.u32 4, %s22
        %p281 = scmp.lt.s32.totalorder %s21, 1
        %s282 = scalar_select %p281, %s21, 1
        %s283 = smul.addr %s282, 4
        %s284 = smul.addr %s283, 8
        %s285 = scalar_lea.vmem %s5, %s284
        %v286 = vld [vmem:[%s250] sm:$0xff]
        %v287 = vld [vmem:[%s250 + $0x8] sm:$0xff]
        %v288 = vld [vmem:[%s250 + $0x10] sm:$0xff]
        %v289 = vld [vmem:[%s250 + $0x18] sm:$0xff]
        %v290 = vld [vmem:[%s250 + $0x20] sm:$0xff]
        %v291 = vld [vmem:[%s250 + $0x28] sm:$0xff]
        %v292 = vld [vmem:[%s250 + $0x30] sm:$0xff]
        %v293 = vld [vmem:[%s250 + $0x38] sm:$0xff]
        %v294 = vld [vmem:[%s2] sm:$0xff]
        %v295 = vld [vmem:[%s2 + $0x8] sm:$0xff]
        %297 = vset.pattern.permute.xlu0 0
        %298 = vperm.xlu0 %297, %v294
        %v299 = vpop.permute.xlu0 %298
        %302 = vset.pattern.permute.xlu0 0
        %303 = vperm.xlu0 %302, %v295
        %v304 = vpop.permute.xlu0 %303
        %v306 = vmul.f32 %v286, %v299
        %v307 = vmul.f32 %v287, %v299
        %v308 = vmul.f32 %v288, %v299
        %v309 = vmul.f32 %v289, %v299
        %v310 = vmul.f32 %v290, %v304
        %v311 = vmul.f32 %v291, %v304
        %v312 = vmul.f32 %v292, %v304
        %v313 = vmul.f32 %v293, %v304
        %v314 = vld [vmem:[%s3] sm:$0xff]
        %v315 = vld [vmem:[%s3 + $0x8] sm:$0xff]
        %317 = vset.pattern.permute.xlu0 0
        %318 = vperm.xlu0 %317, %v314
        %v319 = vpop.permute.xlu0 %318
        %322 = vset.pattern.permute.xlu0 0
        %323 = vperm.xlu0 %322, %v315
        %v324 = vpop.permute.xlu0 %323
        %v326 = vadd.f32 %v306, %v319
        %v327 = vadd.f32 %v307, %v319
        %v328 = vadd.f32 %v308, %v319
        %v329 = vadd.f32 %v309, %v319
        %v330 = vadd.f32 %v310, %v324
        %v331 = vadd.f32 %v311, %v324
        %v332 = vadd.f32 %v312, %v324
        %v333 = vadd.f32 %v313, %v324
        %v334 = vmax.f32 %v326, 0.0
        %v335 = vmax.f32 %v327, 0.0
        %v336 = vmax.f32 %v328, 0.0
        %v337 = vmax.f32 %v329, 0.0
        %v338 = vmax.f32 %v330, 0.0
        %v339 = vmax.f32 %v331, 0.0
        %v340 = vmax.f32 %v332, 0.0
        %v341 = vmax.f32 %v333, 0.0
        %v342 = vld [vmem:[%s1] sm:$0xff]
        %v343 = vld [vmem:[%s1 + $0x8] sm:$0xff]
        %v344 = vld [vmem:[%s1 + $0x10] sm:$0xff]
        %v345 = vld [vmem:[%s1 + $0x18] sm:$0xff]
        %vm346 = vcmask 130048
        %v348 = vsel %vm346, %v342, 0
        %v351 = vsel %vm346, %v343, 0
        %v354 = vsel %vm346, %v344, 0
        %v357 = vsel %vm346, %v345, 0
        %359 = vmatpush.msra.mxu0 0.0
        %360 = vmatpush.msra.mxu0 0.0
        %361 = vmatpush.msra.mxu0 0.0
        %362 = vmatpush.msra.mxu0 0.0
        %363 = vmatpush.msra.mxu0 0.0
        %364 = vmatpush.msra.mxu0 0.0
        %365 = vmatpush.msra.mxu0 0.0
        %366 = vmatpush.msra.mxu0 0.0
        %367 = vmatpush.msra.mxu0 0.0
        %368 = vmatpush.msra.mxu0 0.0
        %369 = vmatpush.msra.mxu0 0.0
        %370 = vmatpush.msra.mxu0 0.0
        %371 = vmatpush.msra.mxu0 0.0
        %372 = vmatpush.msra.mxu0 0.0
        %373 = vmatpush.msra.mxu0 %v338
        %374 = vmatpush.msra.mxu0 %v334
        %375 = vmatmul.f32.gmra.mxu0 %v348
        %v376 = vpop.f32.mrf.mxu0
        %v377 = vadd.f32 0.0, %v376
        %378 = vmatmul.f32.gmra.mxu0 %v351
        %v379 = vpop.f32.mrf.mxu0
        %v380 = vadd.f32 0.0, %v379
        %381 = vmatmul.f32.gmra.mxu0 %v354
        %v382 = vpop.f32.mrf.mxu0
        %v383 = vadd.f32 0.0, %v382
        %384 = vmatmul.f32.gmra.mxu0 %v357
        %v385 = vpop.f32.mrf.mxu0
        %v386 = vadd.f32 0.0, %v385
        %387 = vdwg.mxu0
        %388 = vmatpush.msra.mxu0 0.0
        %389 = vmatpush.msra.mxu0 0.0
        %390 = vmatpush.msra.mxu0 0.0
        %391 = vmatpush.msra.mxu0 0.0
        %392 = vmatpush.msra.mxu0 0.0
        %393 = vmatpush.msra.mxu0 0.0
        %394 = vmatpush.msra.mxu0 0.0
        %395 = vmatpush.msra.mxu0 0.0
        %396 = vmatpush.msra.mxu0 0.0
        %397 = vmatpush.msra.mxu0 0.0
        %398 = vmatpush.msra.mxu0 0.0
        %399 = vmatpush.msra.mxu0 0.0
        %400 = vmatpush.msra.mxu0 0.0
        %401 = vmatpush.msra.mxu0 0.0
        %402 = vmatpush.msra.mxu0 %v339
        %403 = vmatpush.msra.mxu0 %v335
        %404 = vmatmul.f32.gmra.mxu0 %v348
        %v405 = vpop.f32.mrf.mxu0
        %v406 = vadd.f32 0.0, %v405
        %407 = vmatmul.f32.gmra.mxu0 %v351
        %v408 = vpop.f32.mrf.mxu0
        %v409 = vadd.f32 0.0, %v408
        %410 = vmatmul.f32.gmra.mxu0 %v354
        %v411 = vpop.f32.mrf.mxu0
        %v412 = vadd.f32 0.0, %v411
        %413 = vmatmul.f32.gmra.mxu0 %v357
        %v414 = vpop.f32.mrf.mxu0
        %v415 = vadd.f32 0.0, %v414
        %416 = vdwg.mxu0
        %417 = vmatpush.msra.mxu0 0.0
        %418 = vmatpush.msra.mxu0 0.0
        %419 = vmatpush.msra.mxu0 0.0
        %420 = vmatpush.msra.mxu0 0.0
        %421 = vmatpush.msra.mxu0 0.0
        %422 = vmatpush.msra.mxu0 0.0
        %423 = vmatpush.msra.mxu0 0.0
        %424 = vmatpush.msra.mxu0 0.0
        %425 = vmatpush.msra.mxu0 0.0
        %426 = vmatpush.msra.mxu0 0.0
        %427 = vmatpush.msra.mxu0 0.0
        %428 = vmatpush.msra.mxu0 0.0
        %429 = vmatpush.msra.mxu0 0.0
        %430 = vmatpush.msra.mxu0 0.0
        %431 = vmatpush.msra.mxu0 %v340
        %432 = vmatpush.msra.mxu0 %v336
        %433 = vmatmul.f32.gmra.mxu0 %v348
        %v434 = vpop.f32.mrf.mxu0
        %v435 = vadd.f32 0.0, %v434
        %436 = vmatmul.f32.gmra.mxu0 %v351
        %v437 = vpop.f32.mrf.mxu0
        %v438 = vadd.f32 0.0, %v437
        %439 = vmatmul.f32.gmra.mxu0 %v354
        %v440 = vpop.f32.mrf.mxu0
        %v441 = vadd.f32 0.0, %v440
        %442 = vmatmul.f32.gmra.mxu0 %v357
        %v443 = vpop.f32.mrf.mxu0
        %v444 = vadd.f32 0.0, %v443
        %445 = vdwg.mxu0
        %446 = vmatpush.msra.mxu0 0.0
        %447 = vmatpush.msra.mxu0 0.0
        %448 = vmatpush.msra.mxu0 0.0
        %449 = vmatpush.msra.mxu0 0.0
        %450 = vmatpush.msra.mxu0 0.0
        %451 = vmatpush.msra.mxu0 0.0
        %452 = vmatpush.msra.mxu0 0.0
        %453 = vmatpush.msra.mxu0 0.0
        %454 = vmatpush.msra.mxu0 0.0
        %455 = vmatpush.msra.mxu0 0.0
        %456 = vmatpush.msra.mxu0 0.0
        %457 = vmatpush.msra.mxu0 0.0
        %458 = vmatpush.msra.mxu0 0.0
        %459 = vmatpush.msra.mxu0 0.0
        %460 = vmatpush.msra.mxu0 %v341
        %461 = vmatpush.msra.mxu0 %v337
        %462 = vmatmul.f32.gmra.mxu0 %v348
        %v463 = vpop.f32.mrf.mxu0
        %v464 = vadd.f32 0.0, %v463
        %465 = vmatmul.f32.gmra.mxu0 %v351
        %v466 = vpop.f32.mrf.mxu0
        %v467 = vadd.f32 0.0, %v466
        %468 = vmatmul.f32.gmra.mxu0 %v354
        %v469 = vpop.f32.mrf.mxu0
        %v470 = vadd.f32 0.0, %v469
        %471 = vmatmul.f32.gmra.mxu0 %v357
        %v472 = vpop.f32.mrf.mxu0
        %v473 = vadd.f32 0.0, %v472
        %474 = vdwg.mxu0
        %475 = vst [vmem:[%s271] sm:$0xff] %v377
        %476 = vst [vmem:[%s271 + $0x8] sm:$0xff] %v406
        %477 = vst [vmem:[%s271 + $0x10] sm:$0xff] %v435
        %478 = vst [vmem:[%s271 + $0x18] sm:$0xff] %v464
        %479 = vst [vmem:[%s271 + $0x20] sm:$0xff] %v380
        %480 = vst [vmem:[%s271 + $0x28] sm:$0xff] %v409
        %481 = vst [vmem:[%s271 + $0x30] sm:$0xff] %v438
        %482 = vst [vmem:[%s271 + $0x38] sm:$0xff] %v467
        %483 = vst [vmem:[%s271 + $0x40] sm:$0xff] %v383
        %484 = vst [vmem:[%s271 + $0x48] sm:$0xff] %v412
        %485 = vst [vmem:[%s271 + $0x50] sm:$0xff] %v441
        %486 = vst [vmem:[%s271 + $0x58] sm:$0xff] %v470
        %487 = vst [vmem:[%s271 + $0x60] sm:$0xff] %v386
        %488 = vst [vmem:[%s271 + $0x68] sm:$0xff] %v415
        %489 = vst [vmem:[%s271 + $0x70] sm:$0xff] %v444
        %490 = vst [vmem:[%s271 + $0x78] sm:$0xff] %v473
        %v491 = vadd.f32 %v377, %v406
        %v492 = vadd.f32 %v491, %v435
        %v493 = vadd.f32 %v492, %v464
        %494 = vadd.xlane.f32.xlu0 %v493
        %v495 = vpop.xlane.xlu0 %494
        %v496 = vadd.f32 %v380, %v409
        %v497 = vadd.f32 %v496, %v438
        %v498 = vadd.f32 %v497, %v467
        %499 = vadd.xlane.f32.xlu0 %v498
        %v500 = vpop.xlane.xlu0 %499
        %v501 = vadd.f32 %v383, %v412
        %v502 = vadd.f32 %v501, %v441
        %v503 = vadd.f32 %v502, %v470
        %504 = vadd.xlane.f32.xlu0 %v503
        %v505 = vpop.xlane.xlu0 %504
        %v506 = vadd.f32 %v386, %v415
        %v507 = vadd.f32 %v506, %v444
        %v508 = vadd.f32 %v507, %v473
        %509 = vadd.xlane.f32.xlu0 %v508
        %v510 = vpop.xlane.xlu0 %509
        %v511 = vmul.f32 %v377, %v377
        %v512 = vmul.f32 %v406, %v406
        %v513 = vmul.f32 %v435, %v435
        %v514 = vmul.f32 %v464, %v464
        %v515 = vmul.f32 %v380, %v380
        %v516 = vmul.f32 %v409, %v409
        %v517 = vmul.f32 %v438, %v438
        %v518 = vmul.f32 %v467, %v467
        %v519 = vmul.f32 %v383, %v383
        %v520 = vmul.f32 %v412, %v412
        %v521 = vmul.f32 %v441, %v441
        %v522 = vmul.f32 %v470, %v470
        %v523 = vmul.f32 %v386, %v386
        %v524 = vmul.f32 %v415, %v415
        %v525 = vmul.f32 %v444, %v444
        %v526 = vmul.f32 %v473, %v473
        %v527 = vadd.f32 %v511, %v512
        %v528 = vadd.f32 %v527, %v513
        %v529 = vadd.f32 %v528, %v514
        %530 = vadd.xlane.f32.xlu0 %v529
        %v531 = vpop.xlane.xlu0 %530
        %v532 = vadd.f32 %v515, %v516
        %v533 = vadd.f32 %v532, %v517
        %v534 = vadd.f32 %v533, %v518
        %535 = vadd.xlane.f32.xlu0 %v534
        %v536 = vpop.xlane.xlu0 %535
        %v537 = vadd.f32 %v519, %v520
        %v538 = vadd.f32 %v537, %v521
        %v539 = vadd.f32 %v538, %v522
        %540 = vadd.xlane.f32.xlu0 %v539
        %v541 = vpop.xlane.xlu0 %540
        %v542 = vadd.f32 %v523, %v524
        %v543 = vadd.f32 %v542, %v525
        %v544 = vadd.f32 %v543, %v526
        %545 = vadd.xlane.f32.xlu0 %v544
        %v546 = vpop.xlane.xlu0 %545
        %vm547 = vcmask 7168
        %v548 = vsel %vm547, %v495, %v531
        %v549 = vsel %vm547, %v500, %v536
        %v550 = vsel %vm547, %v505, %v541
        %v551 = vsel %vm547, %v510, %v546
        %p552 = scmp.eq.s32.totalorder %s22, 0
        // Predicated region
        $region60: #{decoder_block.6} parent=54 // pred_check
          %p553 = pneg %p552
        $region61: #{decoder_block.6} parent=54 // pred_check_branch
          %555 = sbr.rel (%p553) target = $region63
        $region62: #{decoder_block.6} parent=54 // pred_region
          %vm556 = vcmask 15360
          %557 = vst.msk [vmem:[%s285] sm:$0xff] %vm556, 0.0
          %558 = vst.msk [vmem:[%s285 + $0x8] sm:$0xff] %vm556, 0.0
          %559 = vst.msk [vmem:[%s285 + $0x10] sm:$0xff] %vm556, 0.0
          %560 = vst.msk [vmem:[%s285 + $0x18] sm:$0xff] %vm556, 0.0
        $region63: #{decoder_block.6} parent=54 // pred_fallthru
          _
        %v561 = vld [vmem:[%s285] sm:$0xff]
        %v562 = vld [vmem:[%s285 + $0x8] sm:$0xff]
        %v563 = vld [vmem:[%s285 + $0x10] sm:$0xff]
        %v564 = vld [vmem:[%s285 + $0x18] sm:$0xff]
        %v565 = vadd.f32 %v561, %v548
        %v566 = vadd.f32 %v562, %v549
        %v567 = vadd.f32 %v563, %v550
        %v568 = vadd.f32 %v564, %v551
        %vm569 = vcmask 15360
        %570 = vst.msk [vmem:[%s285] sm:$0xff] %vm569, %v565
        %571 = vst.msk [vmem:[%s285 + $0x8] sm:$0xff] %vm569, %v566
        %572 = vst.msk [vmem:[%s285 + $0x10] sm:$0xff] %vm569, %v567
        %573 = vst.msk [vmem:[%s285 + $0x18] sm:$0xff] %vm569, %v568
        %s574 = sand.u32 %s130, 1
        %s575 = sand.u32 %s130, 1
        %s576 = smul.addr %s575, 128
        %s577 = scalar_lea.vmem [#allocation3], %s576
        %p578 = scmp.lt.s32.totalorder %s21, 1
        %s579 = scalar_select %p578, %s21, 1
        %s580 = smul.addr %s579, 4
        %s581 = smul.addr %s580, 8
        %s582 = scalar_lea.vmem %s5, %s581
        // Predicated region
        $region64: #{decoder_block.6} parent=54 // pred_check
          %p583 = pneg %p140
        $region65: #{decoder_block.6} parent=54 // pred_check_branch
          %585 = sbr.rel (%p583) target = $region67
        $region66: #{decoder_block.6} parent=54 // pred_region
          %s586 = smul.u32 4, %s22
          %s587 = smul.addr %s21, 32
          %s588 = sadd.s32 %s586, %s587
          %s589 = smul.addr %s588, 8
          %s590 = scalar_lea.vmem %s4, %s589
          // Predicated region
          $region68: #{decoder_block.6} parent=66 // pred_check
            _
          $region69: #{decoder_block.6} parent=66 // pred_check_branch
            %592 = sbr.rel (0) target = $region71
          $region70: #{decoder_block.6} parent=66 // pred_region
            // Predicated region
            $region72: #{decoder_block.6} parent=70 // pred_check
              _
            $region73: #{decoder_block.6} parent=70 // pred_check_branch
              %594 = sbr.rel (0) target = $region75
            $region74: #{decoder_block.6} parent=70 // pred_region
              loop: start=0, step=1, limit=1
              $region76: #{decoder_block.6} parent=74 // loop_pre_header
                _
              $region77: #{decoder_block.6} parent=74 // loop_header
                %s596 = sphi 0, %s600
                %p597 = scmp.ge.s32.totalorder %s596, 1
                %s601 = sphi %s577, %s577
                %s602 = sphi %s590, %s590
              $region78: #{decoder_block.6} parent=74 // loop_header_branch
                %599 = sbr.rel (%p597) target = $region82
              $region79: #{decoder_block.6} parent=74 // loop_body
                %v603 = vld [vmem:[%s601] sm:$0xff]
                %604 = vst [vmem:[%s602] sm:$0xff] %v603
                %v605 = vld [vmem:[%s601 + $0x8] sm:$0xff]
                %606 = vst [vmem:[%s602 + $0x8] sm:$0xff] %v605
                %v607 = vld [vmem:[%s601 + $0x10] sm:$0xff]
                %608 = vst [vmem:[%s602 + $0x10] sm:$0xff] %v607
                %v609 = vld [vmem:[%s601 + $0x18] sm:$0xff]
                %610 = vst [vmem:[%s602 + $0x18] sm:$0xff] %v609
                %v611 = vld [vmem:[%s601 + $0x20] sm:$0xff]
                %612 = vst [vmem:[%s602 + $0x40] sm:$0xff] %v611
                %v613 = vld [vmem:[%s601 + $0x28] sm:$0xff]
                %614 = vst [vmem:[%s602 + $0x48] sm:$0xff] %v613
                %v615 = vld [vmem:[%s601 + $0x30] sm:$0xff]
                %616 = vst [vmem:[%s602 + $0x50] sm:$0xff] %v615
                %v617 = vld [vmem:[%s601 + $0x38] sm:$0xff]
                %618 = vst [vmem:[%s602 + $0x58] sm:$0xff] %v617
                %v619 = vld [vmem:[%s601 + $0x40] sm:$0xff]
                %620 = vst [vmem:[%s602 + $0x80] sm:$0xff] %v619
                %v621 = vld [vmem:[%s601 + $0x48] sm:$0xff]
                %622 = vst [vmem:[%s602 + $0x88] sm:$0xff] %v621
                %v623 = vld [vmem:[%s601 + $0x50] sm:$0xff]
                %624 = vst [vmem:[%s602 + $0x90] sm:$0xff] %v623
                %v625 = vld [vmem:[%s601 + $0x58] sm:$0xff]
                %626 = vst [vmem:[%s602 + $0x98] sm:$0xff] %v625
                %v627 = vld [vmem:[%s601 + $0x60] sm:$0xff]
                %628 = vst [vmem:[%s602 + $0xc0] sm:$0xff] %v627
                %v629 = vld [vmem:[%s601 + $0x68] sm:$0xff]
                %630 = vst [vmem:[%s602 + $0xc8] sm:$0xff] %v629
                %v631 = vld [vmem:[%s601 + $0x70] sm:$0xff]
                %632 = vst [vmem:[%s602 + $0xd0] sm:$0xff] %v631
                %v633 = vld [vmem:[%s601 + $0x78] sm:$0xff]
                %634 = vst [vmem:[%s602 + $0xd8] sm:$0xff] %v633
              $region80: #{decoder_block.6} parent=74 // loop_footer
                %s600 = sadd.s32 1, %s596
              $region81: #{decoder_block.6} parent=74 // loop_footer_branch
                %595 = sbr.rel target = $region77
              $region82: #{decoder_block.6} parent=74 // loop_exit
                _
            $region75: #{decoder_block.6} parent=70 // pred_fallthru
              _
            // Predicated region
            $region83: #{decoder_block.6} parent=70 // pred_check
              _
            $region84: #{decoder_block.6} parent=70 // pred_check_branch
              %636 = sbr.rel target = $region86
            $region85: #{decoder_block.6} parent=70 // pred_region
              _
            $region86: #{decoder_block.6} parent=70 // pred_fallthru
              _
          $region71: #{decoder_block.6} parent=66 // pred_fallthru
            _
          %637 = vnop
        $region67: #{decoder_block.6} parent=54 // pred_fallthru
          _
        // Predicated region
        $region87: #{decoder_block.6} parent=54 // pred_check
          %p638 = pneg %p166
        $region88: #{decoder_block.6} parent=54 // pred_check_branch
          %640 = sbr.rel (%p638) target = $region90
        $region89: #{decoder_block.6} parent=54 // pred_region
          _
        $region90: #{decoder_block.6} parent=54 // pred_fallthru
          _
      $region55: #{decoder_block.6} parent=5 // pred_fallthru
        _
      %p641 = scmp.le.s32.totalorder 2, %s12
      // Predicated region
      $region91: #{decoder_block.6} parent=5 // pred_check
        %p642 = pneg %p641
      $region92: #{decoder_block.6} parent=5 // pred_check_branch
        %644 = sbr.rel (%p642) target = $region94
      $region93: #{decoder_block.6} parent=5 // pred_region
        %s645 = ssub.s32 %s12, 2
        // Predicated region
        $region95: #{decoder_block.6} parent=93 // pred_check
          %p646 = pneg %p146
        $region96: #{decoder_block.6} parent=93 // pred_check_branch
          %648 = sbr.rel (%p646) target = $region98
        $region97: #{decoder_block.6} parent=93 // pred_region
          %s649 = sand.u32 %s131, 1
          %s650 = sand.u32 %s131, 1
          %s651 = smul.addr %s650, 128
          %s652 = scalar_lea.vmem [#allocation3], %s651
        $region98: #{decoder_block.6} parent=93 // pred_fallthru
          _
        // Predicated region
        $region99: #{decoder_block.6} parent=93 // pred_check
          %p653 = pneg %p172
        $region100: #{decoder_block.6} parent=93 // pred_check_branch
          %655 = sbr.rel (%p653) target = $region102
        $region101: #{decoder_block.6} parent=93 // pred_region
          %p656 = scmp.lt.s32.totalorder %s23, 1
          %s657 = scalar_select %p656, %s23, 1
          %s658 = smul.addr %s657, 4
          %s659 = smul.addr %s658, 8
          %s660 = scalar_lea.vmem %s5, %s659
        $region102: #{decoder_block.6} parent=93 // pred_fallthru
          _
      $region94: #{decoder_block.6} parent=5 // pred_fallthru
        _
    $region6: #{decoder_block.6} parent=1 // loop_footer
      %s16 = sadd.s32 1, %s12
    $region7: #{decoder_block.6} parent=1 // loop_footer_branch
      %11 = sbr.rel target = $region3
    $region8: #{decoder_block.6} parent=1 // loop_exit
      _

// kernel: decoder_block.7
$region0: #{decoder_block.7}
  #allocation0 [shape = 'u32[]', space=smem, size = 0x4, offset = 0x4, fixed_abs, tag = 'smem constant byte address 0x4 - core index']
  #allocation1 [shape = 'u32[72,128]{1,0:T(1,128)}', space=vmem, size = 0x9000, scoped, tag = 'internal scratch']
  %s0 = inlined_call_operand.vmem [shape: f32[2,32,1024], index: 0, kind: input, shape index: {}]
  %s1 = inlined_call_operand.vmem [shape: f32[32,1], index: 1, kind: input, shape index: {}]
  %s2 = inlined_call_operand.vmem [shape: f32[32,1], index: 2, kind: input, shape index: {}]
  %s3 = inlined_call_operand.vmem [shape: f32[2,32,1024], index: 3, kind: output, shape index: {}]
  %s4 = sld [smem:[#allocation0]]
  $region87: #{decoder_block.7} parent=0
    _
  %s6 = ssub.s32 1, %s4
  %s7 = scalar_select 0, %s6, %s4
  $region1: #{decoder_block.7} parent=0
    #allocation2 [shape = 'u8[131072]{0}', space=vmem, size = 0x20000, scoped, tag = 'input window, operand 0']
    #allocation3 [shape = 'u8[131072]{0}', space=vmem, size = 0x20000, scoped, tag = 'output window, operand 0']
    loop: start=0, step=1, limit=6
    $region2: #{decoder_block.7} parent=1 // loop_pre_header
      _
    $region3: #{decoder_block.7} parent=1 // loop_header
      %s9 = sphi 0, %s13
      %p10 = scmp.ge.s32.totalorder %s9, 6
      %s16 = sphi 0, %s28
      %s17 = sphi 0, %s24
      %s18 = sphi 0, %s16
      %s19 = sphi 0, %s17
      %s20 = sphi 0, %s18
      %s21 = sphi 0, %s19
      %s33 = sphi 0, %s35
      %s36 = sphi 0, %s33
      %s37 = sphi 0, %s36
      %s53 = sphi 0, %s37
      %s57 = sphi 0, %s57
      %s59 = sphi 0, %s57
      %s60 = sphi 0, %s59
      %s74 = sphi 0, %s60
      %s78 = sphi 0, %s78
      %s80 = sphi 0, %s78
      %s81 = sphi 0, %s80
      %s95 = sphi 0, %s81
      %s103 = sphi 0, %s105
      %s106 = sphi 0, %s103
      %s107 = sphi 0, %s106
      %s123 = sphi 0, %s107
    $region4: #{decoder_block.7} parent=1 // loop_header_branch
      %12 = sbr.rel (%p10) target = $region8
    $region5: #{decoder_block.7} parent=1 // loop_body
      %s14 = ssub.s32 %s9, 1
      %s15 = ssub.s32 %s9, 2
      %s22 = sadd.s32 1, %s17
      %p23 = scmp.ge.s32.totalorder %s22, 2
      %s24 = scalar_select %p23, 0, %s22
      %s25 = sadd.s32 1, %s16
      %s26 = scalar_select %p23, %s25, %s16
      %p27 = scmp.ge.s32.totalorder %s26, 2
      %s28 = scalar_select %p27, 0, %s26
      %s29 = ssub.s32 %s16, %s28
      %s30 = ssub.s32 %s17, %s24
      %s31 = sor.u32 %s29, %s30
      %p32 = scmp.eq.s32.totalorder %s31, 0
      %s34 = sadd.s32 %s33, 1
      %s35 = scalar_select %p32, %s33, %s34
      %p38 = pneg %p32
      %p39 = scmp.eq.s32.totalorder %s9, 3
      %p40 = por %p38, %p39
      %p41 = scmp.ne.s32.totalorder %s33, %s36
      %p42 = scmp.eq.s32.totalorder %s9, 0
      %p43 = por %p41, %p42
      %p44 = scmp.ne.s32.totalorder %s33, %s36
      %p45 = scmp.eq.s32.totalorder %s14, 3
      %p46 = por %p44, %p45
      %p47 = scmp.ne.s32.totalorder %s36, %s37
      %p48 = scmp.eq.s32.totalorder %s14, 0
      %p49 = por %p47, %p48
      %p50 = scmp.ne.s32.totalorder %s36, %s37
      %p51 = scmp.eq.s32.totalorder %s15, 3
      %p52 = por %p50, %p51
      %p54 = scmp.ne.s32.totalorder %s37, %s53
      %p55 = scmp.eq.s32.totalorder %s15, 0
      %p56 = por %p54, %p55
      %s58 = sadd.s32 %s57, 1
      %p61 = scmp.eq.s32.totalorder %s9, 3
      %p62 = scmp.ne.s32.totalorder %s57, %s59
      %p63 = scmp.eq.s32.totalorder %s9, 0
      %p64 = por %p62, %p63
      %p65 = scmp.ne.s32.totalorder %s57, %s59
      %p66 = scmp.eq.s32.totalorder %s14, 3
      %p67 = por %p65, %p66
      %p68 = scmp.ne.s32.totalorder %s59, %s60
      %p69 = scmp.eq.s32.totalorder %s14, 0
      %p70 = por %p68, %p69
      %p71 = scmp.ne.s32.totalorder %s59, %s60
      %p72 = scmp.eq.s32.totalorder %s15, 3
      %p73 = por %p71, %p72
      %p75 = scmp.ne.s32.totalorder %s60, %s74
      %p76 = scmp.eq.s32.totalorder %s15, 0
      %p77 = por %p75, %p76
      %s79 = sadd.s32 %s78, 1
      %p82 = scmp.eq.s32.totalorder %s9, 3
      %p83 = scmp.ne.s32.totalorder %s78, %s80
      %p84 = scmp.eq.s32.totalorder %s9, 0
      %p85 = por %p83, %p84
      %p86 = scmp.ne.s32.totalorder %s78, %s80
      %p87 = scmp.eq.s32.totalorder %s14, 3
      %p88 = por %p86, %p87
      %p89 = scmp.ne.s32.totalorder %s80, %s81
      %p90 = scmp.eq.s32.totalorder %s14, 0
      %p91 = por %p89, %p90
      %p92 = scmp.ne.s32.totalorder %s80, %s81
      %p93 = scmp.eq.s32.totalorder %s15, 3
      %p94 = por %p92, %p93
      %p96 = scmp.ne.s32.totalorder %s81, %s95
      %p97 = scmp.eq.s32.totalorder %s15, 0
      %p98 = por %p96, %p97
      %s99 = ssub.s32 %s16, %s28
      %s100 = ssub.s32 %s17, %s24
      %s101 = sor.u32 %s99, %s100
      %p102 = scmp.eq.s32.totalorder %s101, 0
      %s104 = sadd.s32 %s103, 1
      %s105 = scalar_select %p102, %s103, %s104
      %p108 = pneg %p102
      %p109 = scmp.eq.s32.totalorder %s9, 3
      %p110 = por %p108, %p109
      %p111 = scmp.ne.s32.totalorder %s103, %s106
      %p112 = scmp.eq.s32.totalorder %s9, 0
      %p113 = por %p111, %p112
      %p114 = scmp.ne.s32.totalorder %s103, %s106
      %p115 = scmp.eq.s32.totalorder %s14, 3
      %p116 = por %p114, %p115
      %p117 = scmp.ne.s32.totalorder %s106, %s107
      %p118 = scmp.eq.s32.totalorder %s14, 0
      %p119 = por %p117, %p118
      %p120 = scmp.ne.s32.totalorder %s106, %s107
      %p121 = scmp.eq.s32.totalorder %s15, 3
      %p122 = por %p120, %p121
      %p124 = scmp.ne.s32.totalorder %s107, %s123
      %p125 = scmp.eq.s32.totalorder %s15, 0
      %p126 = por %p124, %p125
      %p127 = scmp.le.s32.totalorder 1, %s9
      %p128 = scmp.lt.s32.totalorder %s9, 5
      %p129 = pnand %p127, %p128
      %p130 = pneg %p129
      // Predicated region
      $region9: #{decoder_block.7} parent=5 // pred_check
        _
      $region10: #{decoder_block.7} parent=5 // pred_check_branch
        %132 = sbr.rel (%p129) target = $region12
      $region11: #{decoder_block.7} parent=5 // pred_region
        %s133 = ssub.s32 %s9, 1
        // Predicated region
        $region13: #{decoder_block.7} parent=11 // pred_check
          %p134 = pneg %p70
        $region14: #{decoder_block.7} parent=11 // pred_check_branch
          %136 = sbr.rel (%p134) target = $region16
        $region15: #{decoder_block.7} parent=11 // pred_region
          _
        $region16: #{decoder_block.7} parent=11 // pred_fallthru
          _
        // Predicated region
        $region17: #{decoder_block.7} parent=11 // pred_check
          %p137 = pneg %p91
        $region18: #{decoder_block.7} parent=11 // pred_check_branch
          %139 = sbr.rel (%p137) target = $region20
        $region19: #{decoder_block.7} parent=11 // pred_region
          _
        $region20: #{decoder_block.7} parent=11 // pred_fallthru
          _
      $region12: #{decoder_block.7} parent=5 // pred_fallthru
        _
      %p140 = scmp.lt.s32.totalorder %s9, 4
      // Predicated region
      $region21: #{decoder_block.7} parent=5 // pred_check
        %p141 = pneg %p140
      $region22: #{decoder_block.7} parent=5 // pred_check_branch
        %143 = sbr.rel (%p141) target = $region24
      $region23: #{decoder_block.7} parent=5 // pred_region
        // Predicated region
        $region25: #{decoder_block.7} parent=23 // pred_check
          %p144 = pneg %p43
        $region26: #{decoder_block.7} parent=23 // pred_check_branch
          %146 = sbr.rel (%p144) target = $region28
        $region27: #{decoder_block.7} parent=23 // pred_region
          %s147 = sand.u32 %s33, 1
          %s148 = sand.u32 %s33, 1
          %s149 = smul.addr %s148, 128
          %s150 = scalar_lea.vmem [#allocation2], %s149
          %s151 = smul.u32 4, %s17
          %s152 = smul.addr %s16, 32
          %s153 = sadd.s32 %s151, %s152
          %s154 = smul.addr %s153, 8
          %s155 = scalar_lea.vmem %s0, %s154
          // Predicated region
          $region29: #{decoder_block.7} parent=27 // pred_check
            _
          $region30: #{decoder_block.7} parent=27 // pred_check_branch
            %157 = sbr.rel (0) target = $region32
          $region31: #{decoder_block.7} parent=27 // pred_region
            // Predicated region
            $region33: #{decoder_block.7} parent=31 // pred_check
              _
            $region34: #{decoder_block.7} parent=31 // pred_check_branch
              %159 = sbr.rel (0) target = $region36
            $region35: #{decoder_block.7} parent=31 // pred_region
              loop: start=0, step=1, limit=1
              $region37: #{decoder_block.7} parent=35 // loop_pre_header
                _
              $region38: #{decoder_block.7} parent=35 // loop_header
                %s161 = sphi 0, %s165
                %p162 = scmp.ge.s32.totalorder %s161, 1
                %s166 = sphi %s155, %s155
                %s167 = sphi %s150, %s150
              $region39: #{decoder_block.7} parent=35 // loop_header_branch
                %164 = sbr.rel (%p162) target = $region43
              $region40: #{decoder_block.7} parent=35 // loop_body
                %v168 = vld [vmem:[%s166] sm:$0xff]
                %169 = vst [vmem:[%s167] sm:$0xff] %v168
                %v170 = vld [vmem:[%s166 + $0x8] sm:$0xff]
                %171 = vst [vmem:[%s167 + $0x8] sm:$0xff] %v170
                %v172 = vld [vmem:[%s166 + $0x10] sm:$0xff]
                %173 = vst [vmem:[%s167 + $0x10] sm:$0xff] %v172
                %v174 = vld [vmem:[%s166 + $0x18] sm:$0xff]
                %175 = vst [vmem:[%s167 + $0x18] sm:$0xff] %v174
                %v176 = vld [vmem:[%s166 + $0x40] sm:$0xff]
                %177 = vst [vmem:[%s167 + $0x20] sm:$0xff] %v176
                %v178 = vld [vmem:[%s166 + $0x48] sm:$0xff]
                %179 = vst [vmem:[%s167 + $0x28] sm:$0xff] %v178
                %v180 = vld [vmem:[%s166 + $0x50] sm:$0xff]
                %181 = vst [vmem:[%s167 + $0x30] sm:$0xff] %v180
                %v182 = vld [vmem:[%s166 + $0x58] sm:$0xff]
                %183 = vst [vmem:[%s167 + $0x38] sm:$0xff] %v182
                %v184 = vld [vmem:[%s166 + $0x80] sm:$0xff]
                %185 = vst [vmem:[%s167 + $0x40] sm:$0xff] %v184
                %v186 = vld [vmem:[%s166 + $0x88] sm:$0xff]
                %187 = vst [vmem:[%s167 + $0x48] sm:$0xff] %v186
                %v188 = vld [vmem:[%s166 + $0x90] sm:$0xff]
                %189 = vst [vmem:[%s167 + $0x50] sm:$0xff] %v188
                %v190 = vld [vmem:[%s166 + $0x98] sm:$0xff]
                %191 = vst [vmem:[%s167 + $0x58] sm:$0xff] %v190
                %v192 = vld [vmem:[%s166 + $0xc0] sm:$0xff]
                %193 = vst [vmem:[%s167 + $0x60] sm:$0xff] %v192
                %v194 = vld [vmem:[%s166 + $0xc8] sm:$0xff]
                %195 = vst [vmem:[%s167 + $0x68] sm:$0xff] %v194
                %v196 = vld [vmem:[%s166 + $0xd0] sm:$0xff]
                %197 = vst [vmem:[%s167 + $0x70] sm:$0xff] %v196
                %v198 = vld [vmem:[%s166 + $0xd8] sm:$0xff]
                %199 = vst [vmem:[%s167 + $0x78] sm:$0xff] %v198
              $region41: #{decoder_block.7} parent=35 // loop_footer
                %s165 = sadd.s32 1, %s161
              $region42: #{decoder_block.7} parent=35 // loop_footer_branch
                %160 = sbr.rel target = $region38
              $region43: #{decoder_block.7} parent=35 // loop_exit
                _
            $region36: #{decoder_block.7} parent=31 // pred_fallthru
              _
            // Predicated region
            $region44: #{decoder_block.7} parent=31 // pred_check
              _
            $region45: #{decoder_block.7} parent=31 // pred_check_branch
              %201 = sbr.rel target = $region47
            $region46: #{decoder_block.7} parent=31 // pred_region
              _
            $region47: #{decoder_block.7} parent=31 // pred_fallthru
              _
          $region32: #{decoder_block.7} parent=27 // pred_fallthru
            _
          %202 = vnop
        $region28: #{decoder_block.7} parent=23 // pred_fallthru
          _
      $region24: #{decoder_block.7} parent=5 // pred_fallthru
        _
      %p203 = scmp.le.s32.totalorder 1, %s9
      %p204 = scmp.lt.s32.totalorder %s9, 5
      %p205 = pnand %p203, %p204
      %p206 = pneg %p205
      // Predicated region
      $region48: #{decoder_block.7} parent=5 // pred_check
        _
      $region49: #{decoder_block.7} parent=5 // pred_check_branch
        %208 = sbr.rel (%p205) target = $region51
      $region50: #{decoder_block.7} parent=5 // pred_region
        %s209 = ssub.s32 %s9, 1
        %s210 = sand.u32 %s36, 1
        %s211 = sand.u32 %s36, 1
        %s212 = smul.addr %s211, 128
        %s213 = scalar_lea.vmem [#allocation2], %s212
        // Predicated region
        $region52: #{decoder_block.7} parent=50 // pred_check
          %p214 = pneg %p49
        $region53: #{decoder_block.7} parent=50 // pred_check_branch
          %216 = sbr.rel (%p214) target = $region55
        $region54: #{decoder_block.7} parent=50 // pred_region
          _
        $region55: #{decoder_block.7} parent=50 // pred_fallthru
          _
        %s217 = sand.u32 %s36, 1
        %s218 = sand.u32 %s36, 1
        %s219 = smul.addr %s218, 128
        %s220 = scalar_lea.vmem [#allocation2], %s219
        %p221 = pneg %p49
        %p222 = pneg %p46
        %p223 = pneg %p70
        %p224 = pneg %p67
        %p225 = pneg %p91
        %p226 = pneg %p88
        %p227 = pneg %p119
        %p228 = pneg %p116
        %s229 = sand.u32 %s106, 1
        %s230 = sand.u32 %s106, 1
        %s231 = smul.addr %s230, 128
        %s232 = scalar_lea.vmem [#allocation3], %s231
        %s233 = smul.u32 4, %s19
        %s234 = smul.u32 4, %s19
        %v235 = vld [vmem:[%s213] sm:$0xff]
        %v236 = vld [vmem:[%s213 + $0x8] sm:$0xff]
        %v237 = vld [vmem:[%s213 + $0x10] sm:$0xff]
        %v238 = vld [vmem:[%s213 + $0x18] sm:$0xff]
        %v239 = vld [vmem:[%s213 + $0x20] sm:$0xff]
        %v240 = vld [vmem:[%s213 + $0x28] sm:$0xff]
        %v241 = vld [vmem:[%s213 + $0x30] sm:$0xff]
        %v242 = vld [vmem:[%s213 + $0x38] sm:$0xff]
        %v243 = vld [vmem:[%s213 + $0x40] sm:$0xff]
        %v244 = vld [vmem:[%s213 + $0x48] sm:$0xff]
        %v245 = vld [vmem:[%s213 + $0x50] sm:$0xff]
        %v246 = vld [vmem:[%s213 + $0x58] sm:$0xff]
        %v247 = vld [vmem:[%s213 + $0x60] sm:$0xff]
        %v248 = vld [vmem:[%s213 + $0x68] sm:$0xff]
        %v249 = vld [vmem:[%s213 + $0x70] sm:$0xff]
        %v250 = vld [vmem:[%s213 + $0x78] sm:$0xff]
        %v251 = vld [vmem:[%s1] sm:$0xff]
        %v252 = vld [vmem:[%s1 + $0x8] sm:$0xff]
        %v253 = vld [vmem:[%s1 + $0x10] sm:$0xff]
        %v254 = vld [vmem:[%s1 + $0x18] sm:$0xff]
        %256 = vset.pattern.permute.xlu0 0
        %257 = vperm.xlu0 %256, %v251
        %v258 = vpop.permute.xlu0 %257
        %261 = vset.pattern.permute.xlu0 0
        %262 = vperm.xlu0 %261, %v252
        %v263 = vpop.permute.xlu0 %262
        %266 = vset.pattern.permute.xlu0 0
        %267 = vperm.xlu0 %266, %v253
        %v268 = vpop.permute.xlu0 %267
        %271 = vset.pattern.permute.xlu0 0
        %272 = vperm.xlu0 %271, %v254
        %v273 = vpop.permute.xlu0 %272
        %v275 = vmul.f32 %v235, %v258
        %v276 = vmul.f32 %v236, %v258
        %v277 = vmul.f32 %v237, %v258
        %v278 = vmul.f32 %v238, %v258
        %v279 = vmul.f32 %v239, %v263
        %v280 = vmul.f32 %v240, %v263
        %v281 = vmul.f32 %v241, %v263
        %v282 = vmul.f32 %v242, %v263
        %v283 = vmul.f32 %v243, %v268
        %v284 = vmul.f32 %v244, %v268
        %v285 = vmul.f32 %v245, %v268
        %v286 = vmul.f32 %v246, %v268
        %v287 = vmul.f32 %v247, %v273
        %v288 = vmul.f32 %v248, %v273
        %v289 = vmul.f32 %v249, %v273
        %v290 = vmul.f32 %v250, %v273
        %v291 = vld [vmem:[%s2] sm:$0xff]
        %v292 = vld [vmem:[%s2 + $0x8] sm:$0xff]
        %v293 = vld [vmem:[%s2 + $0x10] sm:$0xff]
        %v294 = vld [vmem:[%s2 + $0x18] sm:$0xff]
        %296 = vset.pattern.permute.xlu0 0
        %297 = vperm.xlu0 %296, %v291
        %v298 = vpop.permute.xlu0 %297
        %301 = vset.pattern.permute.xlu0 0
        %302 = vperm.xlu0 %301, %v292
        %v303 = vpop.permute.xlu0 %302
        %306 = vset.pattern.permute.xlu0 0
        %307 = vperm.xlu0 %306, %v293
        %v308 = vpop.permute.xlu0 %307
        %311 = vset.pattern.permute.xlu0 0
        %312 = vperm.xlu0 %311, %v294
        %v313 = vpop.permute.xlu0 %312
        %v315 = vadd.f32 %v275, %v298
        %v316 = vadd.f32 %v276, %v298
        %v317 = vadd.f32 %v277, %v298
        %v318 = vadd.f32 %v278, %v298
        %v319 = vadd.f32 %v279, %v303
        %v320 = vadd.f32 %v280, %v303
        %v321 = vadd.f32 %v281, %v303
        %v322 = vadd.f32 %v282, %v303
        %v323 = vadd.f32 %v283, %v308
        %v324 = vadd.f32 %v284, %v308
        %v325 = vadd.f32 %v285, %v308
        %v326 = vadd.f32 %v286, %v308
        %v327 = vadd.f32 %v287, %v313
        %v328 = vadd.f32 %v288, %v313
        %v329 = vadd.f32 %v289, %v313
        %v330 = vadd.f32 %v290, %v313
        %v331 = vmax.f32 %v315, 0.0
        %v332 = vmax.f32 %v316, 0.0
        %v333 = vmax.f32 %v317, 0.0
        %v334 = vmax.f32 %v318, 0.0
        %v335 = vmax.f32 %v319, 0.0
        %v336 = vmax.f32 %v320, 0.0
        %v337 = vmax.f32 %v321, 0.0
        %v338 = vmax.f32 %v322, 0.0
        %v339 = vmax.f32 %v323, 0.0
        %v340 = vmax.f32 %v324, 0.0
        %v341 = vmax.f32 %v325, 0.0
        %v342 = vmax.f32 %v326, 0.0
        %v343 = vmax.f32 %v327, 0.0
        %v344 = vmax.f32 %v328, 0.0
        %v345 = vmax.f32 %v329, 0.0
        %v346 = vmax.f32 %v330, 0.0
        %347 = vst [vmem:[%s232] sm:$0xff] %v331
        %348 = vst [vmem:[%s232 + $0x8] sm:$0xff] %v332
        %349 = vst [vmem:[%s232 + $0x10] sm:$0xff] %v333
        %350 = vst [vmem:[%s232 + $0x18] sm:$0xff] %v334
        %351 = vst [vmem:[%s232 + $0x20] sm:$0xff] %v335
        %352 = vst [vmem:[%s232 + $0x28] sm:$0xff] %v336
        %353 = vst [vmem:[%s232 + $0x30] sm:$0xff] %v337
        %354 = vst [vmem:[%s232 + $0x38] sm:$0xff] %v338
        %355 = vst [vmem:[%s232 + $0x40] sm:$0xff] %v339
        %356 = vst [vmem:[%s232 + $0x48] sm:$0xff] %v340
        %357 = vst [vmem:[%s232 + $0x50] sm:$0xff] %v341
        %358 = vst [vmem:[%s232 + $0x58] sm:$0xff] %v342
        %359 = vst [vmem:[%s232 + $0x60] sm:$0xff] %v343
        %360 = vst [vmem:[%s232 + $0x68] sm:$0xff] %v344
        %361 = vst [vmem:[%s232 + $0x70] sm:$0xff] %v345
        %362 = vst [vmem:[%s232 + $0x78] sm:$0xff] %v346
        %s363 = sand.u32 %s106, 1
        %s364 = sand.u32 %s106, 1
        %s365 = smul.addr %s364, 128
        %s366 = scalar_lea.vmem [#allocation3], %s365
        // Predicated region
        $region56: #{decoder_block.7} parent=50 // pred_check
          %p367 = pneg %p116
        $region57: #{decoder_block.7} parent=50 // pred_check_branch
          %369 = sbr.rel (%p367) target = $region59
        $region58: #{decoder_block.7} parent=50 // pred_region
          %s370 = smul.u32 4, %s19
          %s371 = smul.addr %s18, 32
          %s372 = sadd.s32 %s370, %s371
          %s373 = smul.addr %s372, 8
          %s374 = scalar_lea.vmem %s3, %s373
          // Predicated region
          $region60: #{decoder_block.7} parent=58 // pred_check
            _
          $region61: #{decoder_block.7} parent=58 // pred_check_branch
            %376 = sbr.rel (0) target = $region63
          $region62: #{decoder_block.7} parent=58 // pred_region
            // Predicated region
            $region64: #{decoder_block.7} parent=62 // pred_check
              _
            $region65: #{decoder_block.7} parent=62 // pred_check_branch
              %378 = sbr.rel (0) target = $region67
            $region66: #{decoder_block.7} parent=62 // pred_region
              loop: start=0, step=1, limit=1
              $region68: #{decoder_block.7} parent=66 // loop_pre_header
                _
              $region69: #{decoder_block.7} parent=66 // loop_header
                %s380 = sphi 0, %s384
                %p381 = scmp.ge.s32.totalorder %s380, 1
                %s385 = sphi %s366, %s366
                %s386 = sphi %s374, %s374
              $region70: #{decoder_block.7} parent=66 // loop_header_branch
                %383 = sbr.rel (%p381) target = $region74
              $region71: #{decoder_block.7} parent=66 // loop_body
                %v387 = vld [vmem:[%s385] sm:$0xff]
                %388 = vst [vmem:[%s386] sm:$0xff] %v387
                %v389 = vld [vmem:[%s385 + $0x8] sm:$0xff]
                %390 = vst [vmem:[%s386 + $0x8] sm:$0xff] %v389
                %v391 = vld [vmem:[%s385 + $0x10] sm:$0xff]
                %392 = vst [vmem:[%s386 + $0x10] sm:$0xff] %v391
                %v393 = vld [vmem:[%s385 + $0x18] sm:$0xff]
                %394 = vst [vmem:[%s386 + $0x18] sm:$0xff] %v393
                %v395 = vld [vmem:[%s385 + $0x20] sm:$0xff]
                %396 = vst [vmem:[%s386 + $0x40] sm:$0xff] %v395
                %v397 = vld [vmem:[%s385 + $0x28] sm:$0xff]
                %398 = vst [vmem:[%s386 + $0x48] sm:$0xff] %v397
                %v399 = vld [vmem:[%s385 + $0x30] sm:$0xff]
                %400 = vst [vmem:[%s386 + $0x50] sm:$0xff] %v399
                %v401 = vld [vmem:[%s385 + $0x38] sm:$0xff]
                %402 = vst [vmem:[%s386 + $0x58] sm:$0xff] %v401
                %v403 = vld [vmem:[%s385 + $0x40] sm:$0xff]
                %404 = vst [vmem:[%s386 + $0x80] sm:$0xff] %v403
                %v405 = vld [vmem:[%s385 + $0x48] sm:$0xff]
                %406 = vst [vmem:[%s386 + $0x88] sm:$0xff] %v405
                %v407 = vld [vmem:[%s385 + $0x50] sm:$0xff]
                %408 = vst [vmem:[%s386 + $0x90] sm:$0xff] %v407
                %v409 = vld [vmem:[%s385 + $0x58] sm:$0xff]
                %410 = vst [vmem:[%s386 + $0x98] sm:$0xff] %v409
                %v411 = vld [vmem:[%s385 + $0x60] sm:$0xff]
                %412 = vst [vmem:[%s386 + $0xc0] sm:$0xff] %v411
                %v413 = vld [vmem:[%s385 + $0x68] sm:$0xff]
                %414 = vst [vmem:[%s386 + $0xc8] sm:$0xff] %v413
                %v415 = vld [vmem:[%s385 + $0x70] sm:$0xff]
                %416 = vst [vmem:[%s386 + $0xd0] sm:$0xff] %v415
                %v417 = vld [vmem:[%s385 + $0x78] sm:$0xff]
                %418 = vst [vmem:[%s386 + $0xd8] sm:$0xff] %v417
              $region72: #{decoder_block.7} parent=66 // loop_footer
                %s384 = sadd.s32 1, %s380
              $region73: #{decoder_block.7} parent=66 // loop_footer_branch
                %379 = sbr.rel target = $region69
              $region74: #{decoder_block.7} parent=66 // loop_exit
                _
            $region67: #{decoder_block.7} parent=62 // pred_fallthru
              _
            // Predicated region
            $region75: #{decoder_block.7} parent=62 // pred_check
              _
            $region76: #{decoder_block.7} parent=62 // pred_check_branch
              %420 = sbr.rel target = $region78
            $region77: #{decoder_block.7} parent=62 // pred_region
              _
            $region78: #{decoder_block.7} parent=62 // pred_fallthru
              _
          $region63: #{decoder_block.7} parent=58 // pred_fallthru
            _
          %421 = vnop
        $region59: #{decoder_block.7} parent=50 // pred_fallthru
          _
      $region51: #{decoder_block.7} parent=5 // pred_fallthru
        _
      %p422 = scmp.le.s32.totalorder 2, %s9
      // Predicated region
      $region79: #{decoder_block.7} parent=5 // pred_check
        %p423 = pneg %p422
      $region80: #{decoder_block.7} parent=5 // pred_check_branch
        %425 = sbr.rel (%p423) target = $region82
      $region81: #{decoder_block.7} parent=5 // pred_region
        %s426 = ssub.s32 %s9, 2
        // Predicated region
        $region83: #{decoder_block.7} parent=81 // pred_check
          %p427 = pneg %p122
        $region84: #{decoder_block.7} parent=81 // pred_check_branch
          %429 = sbr.rel (%p427) target = $region86
        $region85: #{decoder_block.7} parent=81 // pred_region
          %s430 = sand.u32 %s107, 1
          %s431 = sand.u32 %s107, 1
          %s432 = smul.addr %s431, 128
          %s433 = scalar_lea.vmem [#allocation3], %s432
        $region86: #{decoder_block.7} parent=81 // pred_fallthru
          _
      $region82: #{decoder_block.7} parent=5 // pred_fallthru
        _
    $region6: #{decoder_block.7} parent=1 // loop_footer
      %s13 = sadd.s32 1, %s9
    $region7: #{decoder_block.7} parent=1 // loop_footer_branch
      %8 = sbr.rel target = $region3
    $region8: #{decoder_block.7} parent=1 // loop_exit
      _

</llo_original>
